<compile_context>
chip_gen: v7x
topology: tpu7x:2x2x1
jax: 0.10.0
libtpu: 0.0.40
codegen_flags: <defaults>
</compile_context>

<pallas_src>
import jax
import jax.numpy as jnp
from jax import lax
from jax.experimental import pallas as pl
from jax.experimental.pallas import tpu as pltpu
import numpy as np


# ---------------- configuration (mirrors LSTM_Config) ----------------
INPUT_SIZE = 4
HIDDEN_SIZE = 4
NUM_LAYERS = 1          # kernel implements the num_layers=1 case the module uses
NUM_CLASSES = 4
NEURON_COUNT = 64


def _tree_sum(terms):
    """Balanced-tree sum to keep the VPU dependence chain short."""
    while len(terms) > 1:
        nxt = [a + b for a, b in zip(terms[0::2], terms[1::2])]
        if len(terms) % 2:
            nxt.append(terms[-1])
        terms = nxt
    return terms[0]


def _cell_step(zin_gates, h, c, w_rows, H):
    """One PyTorch-semantics LSTM step (gate order i, f, g, o).

    zin_gates: 4 arrays (B, H) -- precomputed input projection + bias, per gate.
    w_rows:    w_rows[g][k] is a (1, H) row of the transposed recurrent weight.
    The recurrent projection is done on the VPU (broadcast mul-adds), so no MXU
    op sits on the serial h/c dependence chain.
    """
    h_cols = [h[:, k:k + 1] for k in range(H)]          # (B, 1) lane slices
    zg = []
    for g in range(4):
        terms = [zin_gates[g]] + [h_cols[k] * w_rows[g][k] for k in range(H)]
        zg.append(_tree_sum(terms))
    i = jax.nn.sigmoid(zg[0])
    f = jax.nn.sigmoid(zg[1])
    g_ = jnp.tanh(zg[2])
    o = jax.nn.sigmoid(zg[3])
    c_new = f * c + i * g_
    h_new = o * jnp.tanh(c_new)
    return h_new, c_new


def _make_kernel(T, B, H):
    def kernel(x_ref,                       # (T*B, I)   time-major, flattened
               wih1_ref, whh1_ref, b1_ref,  # (I,4H), (H,4H), (1,4H)
               wih2_ref, whh2_ref, b2_ref,  # (H,4H), (H,4H), (1,4H)
               wfc1_ref, bfc1_ref,          # (H,64), (1,64)
               wfc_ref, bfc_ref,            # (64,C), (1,C)
               out_ref):                    # (B, C)
        # ---- LSTM 1 input projection: ONE batched MXU matmul (off critical path)
        z1 = (jnp.dot(x_ref[...], wih1_ref[...], preferred_element_type=jnp.float32)
              + b1_ref[...])                               # (T*B, 4H)
        z1_g = [z1[:, g * H:(g + 1) * H] for g in range(4)]  # gate split ONCE

        # Hoisted recurrent weight rows for LSTM 1 (VPU matvec operands).
        whh1 = whh1_ref[...]
        w1_rows = [[whh1[k:k + 1, g * H:(g + 1) * H] for k in range(H)]
                   for g in range(4)]

        # ---- LSTM 1: fully unrolled, zero initial state, h kept as SSA values
        h = jnp.zeros((B, H), jnp.float32)
        c = jnp.zeros((B, H), jnp.float32)
        h1_seq = []
        for t in range(T):
            zin = [z1_g[g][t * B:(t + 1) * B, :] for g in range(4)]
            h, c = _cell_step(zin, h, c, w1_rows, H)
            h1_seq.append(h)

        # Hoisted LSTM-2 weights / bias (built once, after loop 1 to keep
        # register pressure low).
        whh2 = whh2_ref[...]
        w2_rows = [[whh2[k:k + 1, g * H:(g + 1) * H] for k in range(H)]
                   for g in range(4)]
        wih2 = wih2_ref[...]
        wi2_rows = [[wih2[k:k + 1, g * H:(g + 1) * H] for k in range(H)]
                    for g in range(4)]
        b2 = b2_ref[...]
        b2_g = [jnp.broadcast_to(b2[:, g * H:(g + 1) * H], (B, H))
                for g in range(4)]                         # bias broadcast hoisted

        # ---- LSTM 2: fully unrolled, initial state = LSTM 1 final (h, c).
        # Its input projection relu(h1_t) @ W_ih2 + b2 depends only on loop-1
        # outputs, so (everything being SSA) it is off the h2/c2 critical path.
        h2, c2 = h, c
        for t in range(T):
            x2 = jnp.maximum(h1_seq[t], 0.0)               # relu(output) fed to lstm_2
            x2_cols = [x2[:, k:k + 1] for k in range(H)]
            zin2 = [_tree_sum([b2_g[g]] +
                              [x2_cols[k] * wi2_rows[g][k] for k in range(H)])
                    for g in range(4)]
            h2, c2 = _cell_step(zin2, h2, c2, w2_rows, H)

        # ---- head: relu -> fc_1 -> relu -> fc (one-shot MXU matmuls) ----
        hr = jnp.maximum(h2, 0.0)                          # hn.view(-1, H); relu
        y1 = (jnp.dot(hr, wfc1_ref[...], preferred_element_type=jnp.float32)
              + bfc1_ref[...])
        y1 = jnp.maximum(y1, 0.0)
        out_ref[...] = (jnp.dot(y1, wfc_ref[...], preferred_element_type=jnp.float32)
                        + bfc_ref[...])

    return kernel


def lstm_model_forward(x, params):
    """x: (B, T, input_size) float32, batch_first like the PyTorch module."""
    B, T, I = x.shape
    H = HIDDEN_SIZE
    C = NUM_CLASSES

    # Time-major and flattened so the whole LSTM-1 input projection is a single
    # MXU matmul inside the kernel. Row t*B + b corresponds to (t, b).
    x_flat = jnp.transpose(x, (1, 0, 2)).reshape(T * B, I).astype(jnp.float32)

    # Pre-transpose weights, fuse the two LSTM bias vectors, make biases 2-D.
    wih1_t = params["w_ih1"].T                                  # (I, 4H)
    whh1_t = params["w_hh1"].T                                  # (H, 4H)
    b1 = (params["b_ih1"] + params["b_hh1"]).reshape(1, 4 * H)
    wih2_t = params["w_ih2"].T                                  # (H, 4H)
    whh2_t = params["w_hh2"].T                                  # (H, 4H)
    b2 = (params["b_ih2"] + params["b_hh2"]).reshape(1, 4 * H)
    wfc1_t = params["w_fc1"].T                                  # (H, 64)
    bfc1 = params["b_fc1"].reshape(1, NEURON_COUNT)
    wfc_t = params["w_fc"].T                                    # (64, C)
    bfc = params["b_fc"].reshape(1, C)

    vmem_spec = pl.BlockSpec(memory_space=pltpu.MemorySpace.VMEM)

    # No grid: total footprint is ~2 KiB, far below VMEM limits everywhere.
    # TODO(synk): if batch grows (>=8 per TC), add a batch grid axis with
    # dimension_semantics=("parallel",) to use both v7x TensorCores.
    out = pl.pallas_call(
        _make_kernel(T, B, H),
        out_shape=jax.ShapeDtypeStruct((B, C), jnp.float32),
        in_specs=[vmem_spec] * 11,
        out_specs=vmem_spec,
    )(x_flat, wih1_t, whh1_t, b1, wih2_t, whh2_t, b2, wfc1_t, bfc1, wfc_t, bfc)
    return out


# ---------------- pure-JAX reference (for correctness check) ----------------
def _ref_lstm(x_seq, w_ih, w_hh, b_ih, b_hh, h0, c0):
    H = h0.shape[-1]

    def step(carry, x_t):
        h, c = carry
        z = x_t @ w_ih.T + b_ih + h @ w_hh.T + b_hh
        i = jax.nn.sigmoid(z[:, 0 * H:1 * H])
        f = jax.nn.sigmoid(z[:, 1 * H:2 * H])
        g = jnp.tanh(z[:, 2 * H:3 * H])
        o = jax.nn.sigmoid(z[:, 3 * H:4 * H])
        c = f * c + i * g
        h = o * jnp.tanh(c)
        return (h, c), h

    (hT, cT), outs = lax.scan(step, (h0, c0), jnp.transpose(x_seq, (1, 0, 2)))
    return jnp.transpose(outs, (1, 0, 2)), hT, cT


def lstm_model_reference(x, p):
    B = x.shape[0]
    H = HIDDEN_SIZE
    h0 = jnp.zeros((B, H), jnp.float32)
    c0 = jnp.zeros((B, H), jnp.float32)
    out1, h1, c1 = _ref_lstm(x, p["w_ih1"], p["w_hh1"], p["b_ih1"], p["b_hh1"], h0, c0)
    _, h2, _ = _ref_lstm(jax.nn.relu(out1), p["w_ih2"], p["w_hh2"], p["b_ih2"], p["b_hh2"], h1, c1)
    out = jax.nn.relu(h2)
    out = jax.nn.relu(out @ p["w_fc1"].T + p["b_fc1"])
    return out @ p["w_fc"].T + p["b_fc"]


def init_params(key):
    """Deterministic PyTorch-style uniform(-1/sqrt(n), 1/sqrt(n)) init."""
    H, I, N, C = HIDDEN_SIZE, INPUT_SIZE, NEURON_COUNT, NUM_CLASSES
    ks = jax.random.split(key, 12)
    kl = 1.0 / np.sqrt(H)

    def u(k, shape, bound):
        return jax.random.uniform(k, shape, jnp.float32, -bound, bound)

    return {
        "w_ih1": u(ks[0], (4 * H, I), kl), "w_hh1": u(ks[1], (4 * H, H), kl),
        "b_ih1": u(ks[2], (4 * H,), kl), "b_hh1": u(ks[3], (4 * H,), kl),
        "w_ih2": u(ks[4], (4 * H, H), kl), "w_hh2": u(ks[5], (4 * H, H), kl),
        "b_ih2": u(ks[6], (4 * H,), kl), "b_hh2": u(ks[7], (4 * H,), kl),
        "w_fc1": u(ks[8], (N, H), 1.0 / np.sqrt(H)), "b_fc1": u(ks[9], (N,), 1.0 / np.sqrt(H)),
        "w_fc": u(ks[10], (C, N), 1.0 / np.sqrt(N)), "b_fc": u(ks[11], (C,), 1.0 / np.sqrt(N)),
    }


if __name__ == "__main__":
    key = jax.random.PRNGKey(0)
    k_x, k_p = jax.random.split(key)

    B, T = 2, 8                                    # small shapes: batch=2, seq=8
    x = jax.random.normal(k_x, (B, T, INPUT_SIZE), jnp.float32)
    params = init_params(k_p)

    out = lstm_model_forward(x, params)
    out = jax.block_until_ready(out)

    ref = jax.block_until_ready(lstm_model_reference(x, params))
    np.testing.assert_allclose(np.asarray(out), np.asarray(ref), rtol=1e-4, atol=1e-4)

    print("KERNEL_OK")
</pallas_src>

<mosaic_0001>
module attributes {stable_mosaic.version = 11 : i64} {
  func.func @kernel(%arg0: memref<16x4xf32, #tpu.memory_space<vmem>>, %arg1: memref<4x16xf32, #tpu.memory_space<vmem>>, %arg2: memref<4x16xf32, #tpu.memory_space<vmem>>, %arg3: memref<1x16xf32, #tpu.memory_space<vmem>>, %arg4: memref<4x16xf32, #tpu.memory_space<vmem>>, %arg5: memref<4x16xf32, #tpu.memory_space<vmem>>, %arg6: memref<1x16xf32, #tpu.memory_space<vmem>>, %arg7: memref<4x64xf32, #tpu.memory_space<vmem>>, %arg8: memref<1x64xf32, #tpu.memory_space<vmem>>, %arg9: memref<64x4xf32, #tpu.memory_space<vmem>>, %arg10: memref<1x4xf32, #tpu.memory_space<vmem>>, %arg11: memref<2x4xf32, #tpu.memory_space<vmem>>) attributes {dimension_semantics = [], scalar_prefetch = 0 : i64, scratch_operands = 0 : i64, tpu.core_type = #tpu.core_type<tc>} {
    %c0 = arith.constant 0 : index
    %c0_0 = arith.constant 0 : index
    %0 = vector.load %arg0[%c0, %c0_0] : memref<16x4xf32, #tpu.memory_space<vmem>>, vector<16x4xf32>
    %c0_1 = arith.constant 0 : index
    %c0_2 = arith.constant 0 : index
    %1 = vector.load %arg1[%c0_1, %c0_2] : memref<4x16xf32, #tpu.memory_space<vmem>>, vector<4x16xf32>
    %cst = arith.constant dense<0.000000e+00> : vector<16x16xf32>
    %2 = tpu.matmul %0, %1, %cst {dimension_numbers = #tpu.dot_dimension_numbers<[1], [0], [0], [1], [0, 0, 1, 1], [], []>} : vector<16x4xf32>, vector<4x16xf32>, vector<16x16xf32> -> vector<16x16xf32>
    %c0_3 = arith.constant 0 : index
    %c0_4 = arith.constant 0 : index
    %3 = vector.load %arg3[%c0_3, %c0_4] : memref<1x16xf32, #tpu.memory_space<vmem>>, vector<1x16xf32>
    %4 = vector.broadcast %3 : vector<1x16xf32> to vector<16x16xf32>
    %5 = arith.addf %2, %4 : vector<16x16xf32>
    %6 = vector.extract_strided_slice %5 {offsets = [0, 0], sizes = [16, 4], strides = [1, 1]} : vector<16x16xf32> to vector<16x4xf32>
    %7 = vector.extract_strided_slice %5 {offsets = [0, 4], sizes = [16, 4], strides = [1, 1]} : vector<16x16xf32> to vector<16x4xf32>
    %8 = vector.extract_strided_slice %5 {offsets = [0, 8], sizes = [16, 4], strides = [1, 1]} : vector<16x16xf32> to vector<16x4xf32>
    %9 = vector.extract_strided_slice %5 {offsets = [0, 12], sizes = [16, 4], strides = [1, 1]} : vector<16x16xf32> to vector<16x4xf32>
    %c0_5 = arith.constant 0 : index
    %c0_6 = arith.constant 0 : index
    %10 = vector.load %arg2[%c0_5, %c0_6] : memref<4x16xf32, #tpu.memory_space<vmem>>, vector<4x16xf32>
    %11 = vector.extract_strided_slice %10 {offsets = [0, 0], sizes = [1, 4], strides = [1, 1]} : vector<4x16xf32> to vector<1x4xf32>
    %12 = vector.extract_strided_slice %10 {offsets = [1, 0], sizes = [1, 4], strides = [1, 1]} : vector<4x16xf32> to vector<1x4xf32>
    %13 = vector.extract_strided_slice %10 {offsets = [2, 0], sizes = [1, 4], strides = [1, 1]} : vector<4x16xf32> to vector<1x4xf32>
    %14 = vector.extract_strided_slice %10 {offsets = [3, 0], sizes = [1, 4], strides = [1, 1]} : vector<4x16xf32> to vector<1x4xf32>
    %15 = vector.extract_strided_slice %10 {offsets = [0, 4], sizes = [1, 4], strides = [1, 1]} : vector<4x16xf32> to vector<1x4xf32>
    %16 = vector.extract_strided_slice %10 {offsets = [1, 4], sizes = [1, 4], strides = [1, 1]} : vector<4x16xf32> to vector<1x4xf32>
    %17 = vector.extract_strided_slice %10 {offsets = [2, 4], sizes = [1, 4], strides = [1, 1]} : vector<4x16xf32> to vector<1x4xf32>
    %18 = vector.extract_strided_slice %10 {offsets = [3, 4], sizes = [1, 4], strides = [1, 1]} : vector<4x16xf32> to vector<1x4xf32>
    %19 = vector.extract_strided_slice %10 {offsets = [0, 8], sizes = [1, 4], strides = [1, 1]} : vector<4x16xf32> to vector<1x4xf32>
    %20 = vector.extract_strided_slice %10 {offsets = [1, 8], sizes = [1, 4], strides = [1, 1]} : vector<4x16xf32> to vector<1x4xf32>
    %21 = vector.extract_strided_slice %10 {offsets = [2, 8], sizes = [1, 4], strides = [1, 1]} : vector<4x16xf32> to vector<1x4xf32>
    %22 = vector.extract_strided_slice %10 {offsets = [3, 8], sizes = [1, 4], strides = [1, 1]} : vector<4x16xf32> to vector<1x4xf32>
    %23 = vector.extract_strided_slice %10 {offsets = [0, 12], sizes = [1, 4], strides = [1, 1]} : vector<4x16xf32> to vector<1x4xf32>
    %24 = vector.extract_strided_slice %10 {offsets = [1, 12], sizes = [1, 4], strides = [1, 1]} : vector<4x16xf32> to vector<1x4xf32>
    %25 = vector.extract_strided_slice %10 {offsets = [2, 12], sizes = [1, 4], strides = [1, 1]} : vector<4x16xf32> to vector<1x4xf32>
    %26 = vector.extract_strided_slice %10 {offsets = [3, 12], sizes = [1, 4], strides = [1, 1]} : vector<4x16xf32> to vector<1x4xf32>
    %cst_7 = arith.constant 0.000000e+00 : f32
    %27 = vector.broadcast %cst_7 : f32 to vector<2x4xf32>
    %cst_8 = arith.constant 0.000000e+00 : f32
    %28 = vector.broadcast %cst_8 : f32 to vector<2x4xf32>
    %29 = vector.extract_strided_slice %6 {offsets = [0, 0], sizes = [2, 4], strides = [1, 1]} : vector<16x4xf32> to vector<2x4xf32>
    %30 = vector.extract_strided_slice %7 {offsets = [0, 0], sizes = [2, 4], strides = [1, 1]} : vector<16x4xf32> to vector<2x4xf32>
    %31 = vector.extract_strided_slice %8 {offsets = [0, 0], sizes = [2, 4], strides = [1, 1]} : vector<16x4xf32> to vector<2x4xf32>
    %32 = vector.extract_strided_slice %9 {offsets = [0, 0], sizes = [2, 4], strides = [1, 1]} : vector<16x4xf32> to vector<2x4xf32>
    %33 = vector.extract_strided_slice %27 {offsets = [0, 0], sizes = [2, 1], strides = [1, 1]} : vector<2x4xf32> to vector<2x1xf32>
    %34 = vector.extract_strided_slice %27 {offsets = [0, 1], sizes = [2, 1], strides = [1, 1]} : vector<2x4xf32> to vector<2x1xf32>
    %35 = vector.extract_strided_slice %27 {offsets = [0, 2], sizes = [2, 1], strides = [1, 1]} : vector<2x4xf32> to vector<2x1xf32>
    %36 = vector.extract_strided_slice %27 {offsets = [0, 3], sizes = [2, 1], strides = [1, 1]} : vector<2x4xf32> to vector<2x1xf32>
    %37 = vector.broadcast %33 : vector<2x1xf32> to vector<2x4xf32>
    %38 = vector.broadcast %11 : vector<1x4xf32> to vector<2x4xf32>
    %39 = arith.mulf %37, %38 : vector<2x4xf32>
    %40 = vector.broadcast %34 : vector<2x1xf32> to vector<2x4xf32>
    %41 = vector.broadcast %12 : vector<1x4xf32> to vector<2x4xf32>
    %42 = arith.mulf %40, %41 : vector<2x4xf32>
    %43 = vector.broadcast %35 : vector<2x1xf32> to vector<2x4xf32>
    %44 = vector.broadcast %13 : vector<1x4xf32> to vector<2x4xf32>
    %45 = arith.mulf %43, %44 : vector<2x4xf32>
    %46 = vector.broadcast %36 : vector<2x1xf32> to vector<2x4xf32>
    %47 = vector.broadcast %14 : vector<1x4xf32> to vector<2x4xf32>
    %48 = arith.mulf %46, %47 : vector<2x4xf32>
    %49 = arith.addf %29, %39 : vector<2x4xf32>
    %50 = arith.addf %42, %45 : vector<2x4xf32>
    %51 = arith.addf %49, %50 : vector<2x4xf32>
    %52 = arith.addf %51, %48 : vector<2x4xf32>
    %53 = vector.broadcast %33 : vector<2x1xf32> to vector<2x4xf32>
    %54 = vector.broadcast %15 : vector<1x4xf32> to vector<2x4xf32>
    %55 = arith.mulf %53, %54 : vector<2x4xf32>
    %56 = vector.broadcast %34 : vector<2x1xf32> to vector<2x4xf32>
    %57 = vector.broadcast %16 : vector<1x4xf32> to vector<2x4xf32>
    %58 = arith.mulf %56, %57 : vector<2x4xf32>
    %59 = vector.broadcast %35 : vector<2x1xf32> to vector<2x4xf32>
    %60 = vector.broadcast %17 : vector<1x4xf32> to vector<2x4xf32>
    %61 = arith.mulf %59, %60 : vector<2x4xf32>
    %62 = vector.broadcast %36 : vector<2x1xf32> to vector<2x4xf32>
    %63 = vector.broadcast %18 : vector<1x4xf32> to vector<2x4xf32>
    %64 = arith.mulf %62, %63 : vector<2x4xf32>
    %65 = arith.addf %30, %55 : vector<2x4xf32>
    %66 = arith.addf %58, %61 : vector<2x4xf32>
    %67 = arith.addf %65, %66 : vector<2x4xf32>
    %68 = arith.addf %67, %64 : vector<2x4xf32>
    %69 = vector.broadcast %33 : vector<2x1xf32> to vector<2x4xf32>
    %70 = vector.broadcast %19 : vector<1x4xf32> to vector<2x4xf32>
    %71 = arith.mulf %69, %70 : vector<2x4xf32>
    %72 = vector.broadcast %34 : vector<2x1xf32> to vector<2x4xf32>
    %73 = vector.broadcast %20 : vector<1x4xf32> to vector<2x4xf32>
    %74 = arith.mulf %72, %73 : vector<2x4xf32>
    %75 = vector.broadcast %35 : vector<2x1xf32> to vector<2x4xf32>
    %76 = vector.broadcast %21 : vector<1x4xf32> to vector<2x4xf32>
    %77 = arith.mulf %75, %76 : vector<2x4xf32>
    %78 = vector.broadcast %36 : vector<2x1xf32> to vector<2x4xf32>
    %79 = vector.broadcast %22 : vector<1x4xf32> to vector<2x4xf32>
    %80 = arith.mulf %78, %79 : vector<2x4xf32>
    %81 = arith.addf %31, %71 : vector<2x4xf32>
    %82 = arith.addf %74, %77 : vector<2x4xf32>
    %83 = arith.addf %81, %82 : vector<2x4xf32>
    %84 = arith.addf %83, %80 : vector<2x4xf32>
    %85 = vector.broadcast %33 : vector<2x1xf32> to vector<2x4xf32>
    %86 = vector.broadcast %23 : vector<1x4xf32> to vector<2x4xf32>
    %87 = arith.mulf %85, %86 : vector<2x4xf32>
    %88 = vector.broadcast %34 : vector<2x1xf32> to vector<2x4xf32>
    %89 = vector.broadcast %24 : vector<1x4xf32> to vector<2x4xf32>
    %90 = arith.mulf %88, %89 : vector<2x4xf32>
    %91 = vector.broadcast %35 : vector<2x1xf32> to vector<2x4xf32>
    %92 = vector.broadcast %25 : vector<1x4xf32> to vector<2x4xf32>
    %93 = arith.mulf %91, %92 : vector<2x4xf32>
    %94 = vector.broadcast %36 : vector<2x1xf32> to vector<2x4xf32>
    %95 = vector.broadcast %26 : vector<1x4xf32> to vector<2x4xf32>
    %96 = arith.mulf %94, %95 : vector<2x4xf32>
    %97 = arith.addf %32, %87 : vector<2x4xf32>
    %98 = arith.addf %90, %93 : vector<2x4xf32>
    %99 = arith.addf %97, %98 : vector<2x4xf32>
    %100 = arith.addf %99, %96 : vector<2x4xf32>
    %101 = arith.negf %52 : vector<2x4xf32>
    %102 = math.exp %101 : vector<2x4xf32>
    %cst_9 = arith.constant 1.000000e+00 : f32
    %103 = vector.broadcast %cst_9 : f32 to vector<2x4xf32>
    %104 = arith.addf %103, %102 : vector<2x4xf32>
    %105 = arith.divf %103, %104 : vector<2x4xf32>
    %106 = arith.negf %68 : vector<2x4xf32>
    %107 = math.exp %106 : vector<2x4xf32>
    %cst_10 = arith.constant 1.000000e+00 : f32
    %108 = vector.broadcast %cst_10 : f32 to vector<2x4xf32>
    %109 = arith.addf %108, %107 : vector<2x4xf32>
    %110 = arith.divf %108, %109 : vector<2x4xf32>
    %111 = math.tanh %84 : vector<2x4xf32>
    %112 = arith.negf %100 : vector<2x4xf32>
    %113 = math.exp %112 : vector<2x4xf32>
    %cst_11 = arith.constant 1.000000e+00 : f32
    %114 = vector.broadcast %cst_11 : f32 to vector<2x4xf32>
    %115 = arith.addf %114, %113 : vector<2x4xf32>
    %116 = arith.divf %114, %115 : vector<2x4xf32>
    %117 = arith.mulf %110, %28 : vector<2x4xf32>
    %118 = arith.mulf %105, %111 : vector<2x4xf32>
    %119 = arith.addf %117, %118 : vector<2x4xf32>
    %120 = math.tanh %119 : vector<2x4xf32>
    %121 = arith.mulf %116, %120 : vector<2x4xf32>
    %122 = vector.extract_strided_slice %6 {offsets = [2, 0], sizes = [2, 4], strides = [1, 1]} : vector<16x4xf32> to vector<2x4xf32>
    %123 = vector.extract_strided_slice %7 {offsets = [2, 0], sizes = [2, 4], strides = [1, 1]} : vector<16x4xf32> to vector<2x4xf32>
    %124 = vector.extract_strided_slice %8 {offsets = [2, 0], sizes = [2, 4], strides = [1, 1]} : vector<16x4xf32> to vector<2x4xf32>
    %125 = vector.extract_strided_slice %9 {offsets = [2, 0], sizes = [2, 4], strides = [1, 1]} : vector<16x4xf32> to vector<2x4xf32>
    %126 = vector.extract_strided_slice %121 {offsets = [0, 0], sizes = [2, 1], strides = [1, 1]} : vector<2x4xf32> to vector<2x1xf32>
    %127 = vector.extract_strided_slice %121 {offsets = [0, 1], sizes = [2, 1], strides = [1, 1]} : vector<2x4xf32> to vector<2x1xf32>
    %128 = vector.extract_strided_slice %121 {offsets = [0, 2], sizes = [2, 1], strides = [1, 1]} : vector<2x4xf32> to vector<2x1xf32>
    %129 = vector.extract_strided_slice %121 {offsets = [0, 3], sizes = [2, 1], strides = [1, 1]} : vector<2x4xf32> to vector<2x1xf32>
    %130 = vector.broadcast %126 : vector<2x1xf32> to vector<2x4xf32>
    %131 = vector.broadcast %11 : vector<1x4xf32> to vector<2x4xf32>
    %132 = arith.mulf %130, %131 : vector<2x4xf32>
    %133 = vector.broadcast %127 : vector<2x1xf32> to vector<2x4xf32>
    %134 = vector.broadcast %12 : vector<1x4xf32> to vector<2x4xf32>
    %135 = arith.mulf %133, %134 : vector<2x4xf32>
    %136 = vector.broadcast %128 : vector<2x1xf32> to vector<2x4xf32>
    %137 = vector.broadcast %13 : vector<1x4xf32> to vector<2x4xf32>
    %138 = arith.mulf %136, %137 : vector<2x4xf32>
    %139 = vector.broadcast %129 : vector<2x1xf32> to vector<2x4xf32>
    %140 = vector.broadcast %14 : vector<1x4xf32> to vector<2x4xf32>
    %141 = arith.mulf %139, %140 : vector<2x4xf32>
    %142 = arith.addf %122, %132 : vector<2x4xf32>
    %143 = arith.addf %135, %138 : vector<2x4xf32>
    %144 = arith.addf %142, %143 : vector<2x4xf32>
    %145 = arith.addf %144, %141 : vector<2x4xf32>
    %146 = vector.broadcast %126 : vector<2x1xf32> to vector<2x4xf32>
    %147 = vector.broadcast %15 : vector<1x4xf32> to vector<2x4xf32>
    %148 = arith.mulf %146, %147 : vector<2x4xf32>
    %149 = vector.broadcast %127 : vector<2x1xf32> to vector<2x4xf32>
    %150 = vector.broadcast %16 : vector<1x4xf32> to vector<2x4xf32>
    %151 = arith.mulf %149, %150 : vector<2x4xf32>
    %152 = vector.broadcast %128 : vector<2x1xf32> to vector<2x4xf32>
    %153 = vector.broadcast %17 : vector<1x4xf32> to vector<2x4xf32>
    %154 = arith.mulf %152, %153 : vector<2x4xf32>
    %155 = vector.broadcast %129 : vector<2x1xf32> to vector<2x4xf32>
    %156 = vector.broadcast %18 : vector<1x4xf32> to vector<2x4xf32>
    %157 = arith.mulf %155, %156 : vector<2x4xf32>
    %158 = arith.addf %123, %148 : vector<2x4xf32>
    %159 = arith.addf %151, %154 : vector<2x4xf32>
    %160 = arith.addf %158, %159 : vector<2x4xf32>
    %161 = arith.addf %160, %157 : vector<2x4xf32>
    %162 = vector.broadcast %126 : vector<2x1xf32> to vector<2x4xf32>
    %163 = vector.broadcast %19 : vector<1x4xf32> to vector<2x4xf32>
    %164 = arith.mulf %162, %163 : vector<2x4xf32>
    %165 = vector.broadcast %127 : vector<2x1xf32> to vector<2x4xf32>
    %166 = vector.broadcast %20 : vector<1x4xf32> to vector<2x4xf32>
    %167 = arith.mulf %165, %166 : vector<2x4xf32>
    %168 = vector.broadcast %128 : vector<2x1xf32> to vector<2x4xf32>
    %169 = vector.broadcast %21 : vector<1x4xf32> to vector<2x4xf32>
    %170 = arith.mulf %168, %169 : vector<2x4xf32>
    %171 = vector.broadcast %129 : vector<2x1xf32> to vector<2x4xf32>
    %172 = vector.broadcast %22 : vector<1x4xf32> to vector<2x4xf32>
    %173 = arith.mulf %171, %172 : vector<2x4xf32>
    %174 = arith.addf %124, %164 : vector<2x4xf32>
    %175 = arith.addf %167, %170 : vector<2x4xf32>
    %176 = arith.addf %174, %175 : vector<2x4xf32>
    %177 = arith.addf %176, %173 : vector<2x4xf32>
    %178 = vector.broadcast %126 : vector<2x1xf32> to vector<2x4xf32>
    %179 = vector.broadcast %23 : vector<1x4xf32> to vector<2x4xf32>
    %180 = arith.mulf %178, %179 : vector<2x4xf32>
    %181 = vector.broadcast %127 : vector<2x1xf32> to vector<2x4xf32>
    %182 = vector.broadcast %24 : vector<1x4xf32> to vector<2x4xf32>
    %183 = arith.mulf %181, %182 : vector<2x4xf32>
    %184 = vector.broadcast %128 : vector<2x1xf32> to vector<2x4xf32>
    %185 = vector.broadcast %25 : vector<1x4xf32> to vector<2x4xf32>
    %186 = arith.mulf %184, %185 : vector<2x4xf32>
    %187 = vector.broadcast %129 : vector<2x1xf32> to vector<2x4xf32>
    %188 = vector.broadcast %26 : vector<1x4xf32> to vector<2x4xf32>
    %189 = arith.mulf %187, %188 : vector<2x4xf32>
    %190 = arith.addf %125, %180 : vector<2x4xf32>
    %191 = arith.addf %183, %186 : vector<2x4xf32>
    %192 = arith.addf %190, %191 : vector<2x4xf32>
    %193 = arith.addf %192, %189 : vector<2x4xf32>
    %194 = arith.negf %145 : vector<2x4xf32>
    %195 = math.exp %194 : vector<2x4xf32>
    %cst_12 = arith.constant 1.000000e+00 : f32
    %196 = vector.broadcast %cst_12 : f32 to vector<2x4xf32>
    %197 = arith.addf %196, %195 : vector<2x4xf32>
    %198 = arith.divf %196, %197 : vector<2x4xf32>
    %199 = arith.negf %161 : vector<2x4xf32>
    %200 = math.exp %199 : vector<2x4xf32>
    %cst_13 = arith.constant 1.000000e+00 : f32
    %201 = vector.broadcast %cst_13 : f32 to vector<2x4xf32>
    %202 = arith.addf %201, %200 : vector<2x4xf32>
    %203 = arith.divf %201, %202 : vector<2x4xf32>
    %204 = math.tanh %177 : vector<2x4xf32>
    %205 = arith.negf %193 : vector<2x4xf32>
    %206 = math.exp %205 : vector<2x4xf32>
    %cst_14 = arith.constant 1.000000e+00 : f32
    %207 = vector.broadcast %cst_14 : f32 to vector<2x4xf32>
    %208 = arith.addf %207, %206 : vector<2x4xf32>
    %209 = arith.divf %207, %208 : vector<2x4xf32>
    %210 = arith.mulf %203, %119 : vector<2x4xf32>
    %211 = arith.mulf %198, %204 : vector<2x4xf32>
    %212 = arith.addf %210, %211 : vector<2x4xf32>
    %213 = math.tanh %212 : vector<2x4xf32>
    %214 = arith.mulf %209, %213 : vector<2x4xf32>
    %215 = vector.extract_strided_slice %6 {offsets = [4, 0], sizes = [2, 4], strides = [1, 1]} : vector<16x4xf32> to vector<2x4xf32>
    %216 = vector.extract_strided_slice %7 {offsets = [4, 0], sizes = [2, 4], strides = [1, 1]} : vector<16x4xf32> to vector<2x4xf32>
    %217 = vector.extract_strided_slice %8 {offsets = [4, 0], sizes = [2, 4], strides = [1, 1]} : vector<16x4xf32> to vector<2x4xf32>
    %218 = vector.extract_strided_slice %9 {offsets = [4, 0], sizes = [2, 4], strides = [1, 1]} : vector<16x4xf32> to vector<2x4xf32>
    %219 = vector.extract_strided_slice %214 {offsets = [0, 0], sizes = [2, 1], strides = [1, 1]} : vector<2x4xf32> to vector<2x1xf32>
    %220 = vector.extract_strided_slice %214 {offsets = [0, 1], sizes = [2, 1], strides = [1, 1]} : vector<2x4xf32> to vector<2x1xf32>
    %221 = vector.extract_strided_slice %214 {offsets = [0, 2], sizes = [2, 1], strides = [1, 1]} : vector<2x4xf32> to vector<2x1xf32>
    %222 = vector.extract_strided_slice %214 {offsets = [0, 3], sizes = [2, 1], strides = [1, 1]} : vector<2x4xf32> to vector<2x1xf32>
    %223 = vector.broadcast %219 : vector<2x1xf32> to vector<2x4xf32>
    %224 = vector.broadcast %11 : vector<1x4xf32> to vector<2x4xf32>
    %225 = arith.mulf %223, %224 : vector<2x4xf32>
    %226 = vector.broadcast %220 : vector<2x1xf32> to vector<2x4xf32>
    %227 = vector.broadcast %12 : vector<1x4xf32> to vector<2x4xf32>
    %228 = arith.mulf %226, %227 : vector<2x4xf32>
    %229 = vector.broadcast %221 : vector<2x1xf32> to vector<2x4xf32>
    %230 = vector.broadcast %13 : vector<1x4xf32> to vector<2x4xf32>
    %231 = arith.mulf %229, %230 : vector<2x4xf32>
    %232 = vector.broadcast %222 : vector<2x1xf32> to vector<2x4xf32>
    %233 = vector.broadcast %14 : vector<1x4xf32> to vector<2x4xf32>
    %234 = arith.mulf %232, %233 : vector<2x4xf32>
    %235 = arith.addf %215, %225 : vector<2x4xf32>
    %236 = arith.addf %228, %231 : vector<2x4xf32>
    %237 = arith.addf %235, %236 : vector<2x4xf32>
    %238 = arith.addf %237, %234 : vector<2x4xf32>
    %239 = vector.broadcast %219 : vector<2x1xf32> to vector<2x4xf32>
    %240 = vector.broadcast %15 : vector<1x4xf32> to vector<2x4xf32>
    %241 = arith.mulf %239, %240 : vector<2x4xf32>
    %242 = vector.broadcast %220 : vector<2x1xf32> to vector<2x4xf32>
    %243 = vector.broadcast %16 : vector<1x4xf32> to vector<2x4xf32>
    %244 = arith.mulf %242, %243 : vector<2x4xf32>
    %245 = vector.broadcast %221 : vector<2x1xf32> to vector<2x4xf32>
    %246 = vector.broadcast %17 : vector<1x4xf32> to vector<2x4xf32>
    %247 = arith.mulf %245, %246 : vector<2x4xf32>
    %248 = vector.broadcast %222 : vector<2x1xf32> to vector<2x4xf32>
    %249 = vector.broadcast %18 : vector<1x4xf32> to vector<2x4xf32>
    %250 = arith.mulf %248, %249 : vector<2x4xf32>
    %251 = arith.addf %216, %241 : vector<2x4xf32>
    %252 = arith.addf %244, %247 : vector<2x4xf32>
    %253 = arith.addf %251, %252 : vector<2x4xf32>
    %254 = arith.addf %253, %250 : vector<2x4xf32>
    %255 = vector.broadcast %219 : vector<2x1xf32> to vector<2x4xf32>
    %256 = vector.broadcast %19 : vector<1x4xf32> to vector<2x4xf32>
    %257 = arith.mulf %255, %256 : vector<2x4xf32>
    %258 = vector.broadcast %220 : vector<2x1xf32> to vector<2x4xf32>
    %259 = vector.broadcast %20 : vector<1x4xf32> to vector<2x4xf32>
    %260 = arith.mulf %258, %259 : vector<2x4xf32>
    %261 = vector.broadcast %221 : vector<2x1xf32> to vector<2x4xf32>
    %262 = vector.broadcast %21 : vector<1x4xf32> to vector<2x4xf32>
    %263 = arith.mulf %261, %262 : vector<2x4xf32>
    %264 = vector.broadcast %222 : vector<2x1xf32> to vector<2x4xf32>
    %265 = vector.broadcast %22 : vector<1x4xf32> to vector<2x4xf32>
    %266 = arith.mulf %264, %265 : vector<2x4xf32>
    %267 = arith.addf %217, %257 : vector<2x4xf32>
    %268 = arith.addf %260, %263 : vector<2x4xf32>
    %269 = arith.addf %267, %268 : vector<2x4xf32>
    %270 = arith.addf %269, %266 : vector<2x4xf32>
    %271 = vector.broadcast %219 : vector<2x1xf32> to vector<2x4xf32>
    %272 = vector.broadcast %23 : vector<1x4xf32> to vector<2x4xf32>
    %273 = arith.mulf %271, %272 : vector<2x4xf32>
    %274 = vector.broadcast %220 : vector<2x1xf32> to vector<2x4xf32>
    %275 = vector.broadcast %24 : vector<1x4xf32> to vector<2x4xf32>
    %276 = arith.mulf %274, %275 : vector<2x4xf32>
    %277 = vector.broadcast %221 : vector<2x1xf32> to vector<2x4xf32>
    %278 = vector.broadcast %25 : vector<1x4xf32> to vector<2x4xf32>
    %279 = arith.mulf %277, %278 : vector<2x4xf32>
    %280 = vector.broadcast %222 : vector<2x1xf32> to vector<2x4xf32>
    %281 = vector.broadcast %26 : vector<1x4xf32> to vector<2x4xf32>
    %282 = arith.mulf %280, %281 : vector<2x4xf32>
    %283 = arith.addf %218, %273 : vector<2x4xf32>
    %284 = arith.addf %276, %279 : vector<2x4xf32>
    %285 = arith.addf %283, %284 : vector<2x4xf32>
    %286 = arith.addf %285, %282 : vector<2x4xf32>
    %287 = arith.negf %238 : vector<2x4xf32>
    %288 = math.exp %287 : vector<2x4xf32>
    %cst_15 = arith.constant 1.000000e+00 : f32
    %289 = vector.broadcast %cst_15 : f32 to vector<2x4xf32>
    %290 = arith.addf %289, %288 : vector<2x4xf32>
    %291 = arith.divf %289, %290 : vector<2x4xf32>
    %292 = arith.negf %254 : vector<2x4xf32>
    %293 = math.exp %292 : vector<2x4xf32>
    %cst_16 = arith.constant 1.000000e+00 : f32
    %294 = vector.broadcast %cst_16 : f32 to vector<2x4xf32>
    %295 = arith.addf %294, %293 : vector<2x4xf32>
    %296 = arith.divf %294, %295 : vector<2x4xf32>
    %297 = math.tanh %270 : vector<2x4xf32>
    %298 = arith.negf %286 : vector<2x4xf32>
    %299 = math.exp %298 : vector<2x4xf32>
    %cst_17 = arith.constant 1.000000e+00 : f32
    %300 = vector.broadcast %cst_17 : f32 to vector<2x4xf32>
    %301 = arith.addf %300, %299 : vector<2x4xf32>
    %302 = arith.divf %300, %301 : vector<2x4xf32>
    %303 = arith.mulf %296, %212 : vector<2x4xf32>
    %304 = arith.mulf %291, %297 : vector<2x4xf32>
    %305 = arith.addf %303, %304 : vector<2x4xf32>
    %306 = math.tanh %305 : vector<2x4xf32>
    %307 = arith.mulf %302, %306 : vector<2x4xf32>
    %308 = vector.extract_strided_slice %6 {offsets = [6, 0], sizes = [2, 4], strides = [1, 1]} : vector<16x4xf32> to vector<2x4xf32>
    %309 = vector.extract_strided_slice %7 {offsets = [6, 0], sizes = [2, 4], strides = [1, 1]} : vector<16x4xf32> to vector<2x4xf32>
    %310 = vector.extract_strided_slice %8 {offsets = [6, 0], sizes = [2, 4], strides = [1, 1]} : vector<16x4xf32> to vector<2x4xf32>
    %311 = vector.extract_strided_slice %9 {offsets = [6, 0], sizes = [2, 4], strides = [1, 1]} : vector<16x4xf32> to vector<2x4xf32>
    %312 = vector.extract_strided_slice %307 {offsets = [0, 0], sizes = [2, 1], strides = [1, 1]} : vector<2x4xf32> to vector<2x1xf32>
    %313 = vector.extract_strided_slice %307 {offsets = [0, 1], sizes = [2, 1], strides = [1, 1]} : vector<2x4xf32> to vector<2x1xf32>
    %314 = vector.extract_strided_slice %307 {offsets = [0, 2], sizes = [2, 1], strides = [1, 1]} : vector<2x4xf32> to vector<2x1xf32>
    %315 = vector.extract_strided_slice %307 {offsets = [0, 3], sizes = [2, 1], strides = [1, 1]} : vector<2x4xf32> to vector<2x1xf32>
    %316 = vector.broadcast %312 : vector<2x1xf32> to vector<2x4xf32>
    %317 = vector.broadcast %11 : vector<1x4xf32> to vector<2x4xf32>
    %318 = arith.mulf %316, %317 : vector<2x4xf32>
    %319 = vector.broadcast %313 : vector<2x1xf32> to vector<2x4xf32>
    %320 = vector.broadcast %12 : vector<1x4xf32> to vector<2x4xf32>
    %321 = arith.mulf %319, %320 : vector<2x4xf32>
    %322 = vector.broadcast %314 : vector<2x1xf32> to vector<2x4xf32>
    %323 = vector.broadcast %13 : vector<1x4xf32> to vector<2x4xf32>
    %324 = arith.mulf %322, %323 : vector<2x4xf32>
    %325 = vector.broadcast %315 : vector<2x1xf32> to vector<2x4xf32>
    %326 = vector.broadcast %14 : vector<1x4xf32> to vector<2x4xf32>
    %327 = arith.mulf %325, %326 : vector<2x4xf32>
    %328 = arith.addf %308, %318 : vector<2x4xf32>
    %329 = arith.addf %321, %324 : vector<2x4xf32>
    %330 = arith.addf %328, %329 : vector<2x4xf32>
    %331 = arith.addf %330, %327 : vector<2x4xf32>
    %332 = vector.broadcast %312 : vector<2x1xf32> to vector<2x4xf32>
    %333 = vector.broadcast %15 : vector<1x4xf32> to vector<2x4xf32>
    %334 = arith.mulf %332, %333 : vector<2x4xf32>
    %335 = vector.broadcast %313 : vector<2x1xf32> to vector<2x4xf32>
    %336 = vector.broadcast %16 : vector<1x4xf32> to vector<2x4xf32>
    %337 = arith.mulf %335, %336 : vector<2x4xf32>
    %338 = vector.broadcast %314 : vector<2x1xf32> to vector<2x4xf32>
    %339 = vector.broadcast %17 : vector<1x4xf32> to vector<2x4xf32>
    %340 = arith.mulf %338, %339 : vector<2x4xf32>
    %341 = vector.broadcast %315 : vector<2x1xf32> to vector<2x4xf32>
    %342 = vector.broadcast %18 : vector<1x4xf32> to vector<2x4xf32>
    %343 = arith.mulf %341, %342 : vector<2x4xf32>
    %344 = arith.addf %309, %334 : vector<2x4xf32>
    %345 = arith.addf %337, %340 : vector<2x4xf32>
    %346 = arith.addf %344, %345 : vector<2x4xf32>
    %347 = arith.addf %346, %343 : vector<2x4xf32>
    %348 = vector.broadcast %312 : vector<2x1xf32> to vector<2x4xf32>
    %349 = vector.broadcast %19 : vector<1x4xf32> to vector<2x4xf32>
    %350 = arith.mulf %348, %349 : vector<2x4xf32>
    %351 = vector.broadcast %313 : vector<2x1xf32> to vector<2x4xf32>
    %352 = vector.broadcast %20 : vector<1x4xf32> to vector<2x4xf32>
    %353 = arith.mulf %351, %352 : vector<2x4xf32>
    %354 = vector.broadcast %314 : vector<2x1xf32> to vector<2x4xf32>
    %355 = vector.broadcast %21 : vector<1x4xf32> to vector<2x4xf32>
    %356 = arith.mulf %354, %355 : vector<2x4xf32>
    %357 = vector.broadcast %315 : vector<2x1xf32> to vector<2x4xf32>
    %358 = vector.broadcast %22 : vector<1x4xf32> to vector<2x4xf32>
    %359 = arith.mulf %357, %358 : vector<2x4xf32>
    %360 = arith.addf %310, %350 : vector<2x4xf32>
    %361 = arith.addf %353, %356 : vector<2x4xf32>
    %362 = arith.addf %360, %361 : vector<2x4xf32>
    %363 = arith.addf %362, %359 : vector<2x4xf32>
    %364 = vector.broadcast %312 : vector<2x1xf32> to vector<2x4xf32>
    %365 = vector.broadcast %23 : vector<1x4xf32> to vector<2x4xf32>
    %366 = arith.mulf %364, %365 : vector<2x4xf32>
    %367 = vector.broadcast %313 : vector<2x1xf32> to vector<2x4xf32>
    %368 = vector.broadcast %24 : vector<1x4xf32> to vector<2x4xf32>
    %369 = arith.mulf %367, %368 : vector<2x4xf32>
    %370 = vector.broadcast %314 : vector<2x1xf32> to vector<2x4xf32>
    %371 = vector.broadcast %25 : vector<1x4xf32> to vector<2x4xf32>
    %372 = arith.mulf %370, %371 : vector<2x4xf32>
    %373 = vector.broadcast %315 : vector<2x1xf32> to vector<2x4xf32>
    %374 = vector.broadcast %26 : vector<1x4xf32> to vector<2x4xf32>
    %375 = arith.mulf %373, %374 : vector<2x4xf32>
    %376 = arith.addf %311, %366 : vector<2x4xf32>
    %377 = arith.addf %369, %372 : vector<2x4xf32>
    %378 = arith.addf %376, %377 : vector<2x4xf32>
    %379 = arith.addf %378, %375 : vector<2x4xf32>
    %380 = arith.negf %331 : vector<2x4xf32>
    %381 = math.exp %380 : vector<2x4xf32>
    %cst_18 = arith.constant 1.000000e+00 : f32
    %382 = vector.broadcast %cst_18 : f32 to vector<2x4xf32>
    %383 = arith.addf %382, %381 : vector<2x4xf32>
    %384 = arith.divf %382, %383 : vector<2x4xf32>
    %385 = arith.negf %347 : vector<2x4xf32>
    %386 = math.exp %385 : vector<2x4xf32>
    %cst_19 = arith.constant 1.000000e+00 : f32
    %387 = vector.broadcast %cst_19 : f32 to vector<2x4xf32>
    %388 = arith.addf %387, %386 : vector<2x4xf32>
    %389 = arith.divf %387, %388 : vector<2x4xf32>
    %390 = math.tanh %363 : vector<2x4xf32>
    %391 = arith.negf %379 : vector<2x4xf32>
    %392 = math.exp %391 : vector<2x4xf32>
    %cst_20 = arith.constant 1.000000e+00 : f32
    %393 = vector.broadcast %cst_20 : f32 to vector<2x4xf32>
    %394 = arith.addf %393, %392 : vector<2x4xf32>
    %395 = arith.divf %393, %394 : vector<2x4xf32>
    %396 = arith.mulf %389, %305 : vector<2x4xf32>
    %397 = arith.mulf %384, %390 : vector<2x4xf32>
    %398 = arith.addf %396, %397 : vector<2x4xf32>
    %399 = math.tanh %398 : vector<2x4xf32>
    %400 = arith.mulf %395, %399 : vector<2x4xf32>
    %401 = vector.extract_strided_slice %6 {offsets = [8, 0], sizes = [2, 4], strides = [1, 1]} : vector<16x4xf32> to vector<2x4xf32>
    %402 = vector.extract_strided_slice %7 {offsets = [8, 0], sizes = [2, 4], strides = [1, 1]} : vector<16x4xf32> to vector<2x4xf32>
    %403 = vector.extract_strided_slice %8 {offsets = [8, 0], sizes = [2, 4], strides = [1, 1]} : vector<16x4xf32> to vector<2x4xf32>
    %404 = vector.extract_strided_slice %9 {offsets = [8, 0], sizes = [2, 4], strides = [1, 1]} : vector<16x4xf32> to vector<2x4xf32>
    %405 = vector.extract_strided_slice %400 {offsets = [0, 0], sizes = [2, 1], strides = [1, 1]} : vector<2x4xf32> to vector<2x1xf32>
    %406 = vector.extract_strided_slice %400 {offsets = [0, 1], sizes = [2, 1], strides = [1, 1]} : vector<2x4xf32> to vector<2x1xf32>
    %407 = vector.extract_strided_slice %400 {offsets = [0, 2], sizes = [2, 1], strides = [1, 1]} : vector<2x4xf32> to vector<2x1xf32>
    %408 = vector.extract_strided_slice %400 {offsets = [0, 3], sizes = [2, 1], strides = [1, 1]} : vector<2x4xf32> to vector<2x1xf32>
    %409 = vector.broadcast %405 : vector<2x1xf32> to vector<2x4xf32>
    %410 = vector.broadcast %11 : vector<1x4xf32> to vector<2x4xf32>
    %411 = arith.mulf %409, %410 : vector<2x4xf32>
    %412 = vector.broadcast %406 : vector<2x1xf32> to vector<2x4xf32>
    %413 = vector.broadcast %12 : vector<1x4xf32> to vector<2x4xf32>
    %414 = arith.mulf %412, %413 : vector<2x4xf32>
    %415 = vector.broadcast %407 : vector<2x1xf32> to vector<2x4xf32>
    %416 = vector.broadcast %13 : vector<1x4xf32> to vector<2x4xf32>
    %417 = arith.mulf %415, %416 : vector<2x4xf32>
    %418 = vector.broadcast %408 : vector<2x1xf32> to vector<2x4xf32>
    %419 = vector.broadcast %14 : vector<1x4xf32> to vector<2x4xf32>
    %420 = arith.mulf %418, %419 : vector<2x4xf32>
    %421 = arith.addf %401, %411 : vector<2x4xf32>
    %422 = arith.addf %414, %417 : vector<2x4xf32>
    %423 = arith.addf %421, %422 : vector<2x4xf32>
    %424 = arith.addf %423, %420 : vector<2x4xf32>
    %425 = vector.broadcast %405 : vector<2x1xf32> to vector<2x4xf32>
    %426 = vector.broadcast %15 : vector<1x4xf32> to vector<2x4xf32>
    %427 = arith.mulf %425, %426 : vector<2x4xf32>
    %428 = vector.broadcast %406 : vector<2x1xf32> to vector<2x4xf32>
    %429 = vector.broadcast %16 : vector<1x4xf32> to vector<2x4xf32>
    %430 = arith.mulf %428, %429 : vector<2x4xf32>
    %431 = vector.broadcast %407 : vector<2x1xf32> to vector<2x4xf32>
    %432 = vector.broadcast %17 : vector<1x4xf32> to vector<2x4xf32>
    %433 = arith.mulf %431, %432 : vector<2x4xf32>
    %434 = vector.broadcast %408 : vector<2x1xf32> to vector<2x4xf32>
    %435 = vector.broadcast %18 : vector<1x4xf32> to vector<2x4xf32>
    %436 = arith.mulf %434, %435 : vector<2x4xf32>
    %437 = arith.addf %402, %427 : vector<2x4xf32>
    %438 = arith.addf %430, %433 : vector<2x4xf32>
    %439 = arith.addf %437, %438 : vector<2x4xf32>
    %440 = arith.addf %439, %436 : vector<2x4xf32>
    %441 = vector.broadcast %405 : vector<2x1xf32> to vector<2x4xf32>
    %442 = vector.broadcast %19 : vector<1x4xf32> to vector<2x4xf32>
    %443 = arith.mulf %441, %442 : vector<2x4xf32>
    %444 = vector.broadcast %406 : vector<2x1xf32> to vector<2x4xf32>
    %445 = vector.broadcast %20 : vector<1x4xf32> to vector<2x4xf32>
    %446 = arith.mulf %444, %445 : vector<2x4xf32>
    %447 = vector.broadcast %407 : vector<2x1xf32> to vector<2x4xf32>
    %448 = vector.broadcast %21 : vector<1x4xf32> to vector<2x4xf32>
    %449 = arith.mulf %447, %448 : vector<2x4xf32>
    %450 = vector.broadcast %408 : vector<2x1xf32> to vector<2x4xf32>
    %451 = vector.broadcast %22 : vector<1x4xf32> to vector<2x4xf32>
    %452 = arith.mulf %450, %451 : vector<2x4xf32>
    %453 = arith.addf %403, %443 : vector<2x4xf32>
    %454 = arith.addf %446, %449 : vector<2x4xf32>
    %455 = arith.addf %453, %454 : vector<2x4xf32>
    %456 = arith.addf %455, %452 : vector<2x4xf32>
    %457 = vector.broadcast %405 : vector<2x1xf32> to vector<2x4xf32>
    %458 = vector.broadcast %23 : vector<1x4xf32> to vector<2x4xf32>
    %459 = arith.mulf %457, %458 : vector<2x4xf32>
    %460 = vector.broadcast %406 : vector<2x1xf32> to vector<2x4xf32>
    %461 = vector.broadcast %24 : vector<1x4xf32> to vector<2x4xf32>
    %462 = arith.mulf %460, %461 : vector<2x4xf32>
    %463 = vector.broadcast %407 : vector<2x1xf32> to vector<2x4xf32>
    %464 = vector.broadcast %25 : vector<1x4xf32> to vector<2x4xf32>
    %465 = arith.mulf %463, %464 : vector<2x4xf32>
    %466 = vector.broadcast %408 : vector<2x1xf32> to vector<2x4xf32>
    %467 = vector.broadcast %26 : vector<1x4xf32> to vector<2x4xf32>
    %468 = arith.mulf %466, %467 : vector<2x4xf32>
    %469 = arith.addf %404, %459 : vector<2x4xf32>
    %470 = arith.addf %462, %465 : vector<2x4xf32>
    %471 = arith.addf %469, %470 : vector<2x4xf32>
    %472 = arith.addf %471, %468 : vector<2x4xf32>
    %473 = arith.negf %424 : vector<2x4xf32>
    %474 = math.exp %473 : vector<2x4xf32>
    %cst_21 = arith.constant 1.000000e+00 : f32
    %475 = vector.broadcast %cst_21 : f32 to vector<2x4xf32>
    %476 = arith.addf %475, %474 : vector<2x4xf32>
    %477 = arith.divf %475, %476 : vector<2x4xf32>
    %478 = arith.negf %440 : vector<2x4xf32>
    %479 = math.exp %478 : vector<2x4xf32>
    %cst_22 = arith.constant 1.000000e+00 : f32
    %480 = vector.broadcast %cst_22 : f32 to vector<2x4xf32>
    %481 = arith.addf %480, %479 : vector<2x4xf32>
    %482 = arith.divf %480, %481 : vector<2x4xf32>
    %483 = math.tanh %456 : vector<2x4xf32>
    %484 = arith.negf %472 : vector<2x4xf32>
    %485 = math.exp %484 : vector<2x4xf32>
    %cst_23 = arith.constant 1.000000e+00 : f32
    %486 = vector.broadcast %cst_23 : f32 to vector<2x4xf32>
    %487 = arith.addf %486, %485 : vector<2x4xf32>
    %488 = arith.divf %486, %487 : vector<2x4xf32>
    %489 = arith.mulf %482, %398 : vector<2x4xf32>
    %490 = arith.mulf %477, %483 : vector<2x4xf32>
    %491 = arith.addf %489, %490 : vector<2x4xf32>
    %492 = math.tanh %491 : vector<2x4xf32>
    %493 = arith.mulf %488, %492 : vector<2x4xf32>
    %494 = vector.extract_strided_slice %6 {offsets = [10, 0], sizes = [2, 4], strides = [1, 1]} : vector<16x4xf32> to vector<2x4xf32>
    %495 = vector.extract_strided_slice %7 {offsets = [10, 0], sizes = [2, 4], strides = [1, 1]} : vector<16x4xf32> to vector<2x4xf32>
    %496 = vector.extract_strided_slice %8 {offsets = [10, 0], sizes = [2, 4], strides = [1, 1]} : vector<16x4xf32> to vector<2x4xf32>
    %497 = vector.extract_strided_slice %9 {offsets = [10, 0], sizes = [2, 4], strides = [1, 1]} : vector<16x4xf32> to vector<2x4xf32>
    %498 = vector.extract_strided_slice %493 {offsets = [0, 0], sizes = [2, 1], strides = [1, 1]} : vector<2x4xf32> to vector<2x1xf32>
    %499 = vector.extract_strided_slice %493 {offsets = [0, 1], sizes = [2, 1], strides = [1, 1]} : vector<2x4xf32> to vector<2x1xf32>
    %500 = vector.extract_strided_slice %493 {offsets = [0, 2], sizes = [2, 1], strides = [1, 1]} : vector<2x4xf32> to vector<2x1xf32>
    %501 = vector.extract_strided_slice %493 {offsets = [0, 3], sizes = [2, 1], strides = [1, 1]} : vector<2x4xf32> to vector<2x1xf32>
    %502 = vector.broadcast %498 : vector<2x1xf32> to vector<2x4xf32>
    %503 = vector.broadcast %11 : vector<1x4xf32> to vector<2x4xf32>
    %504 = arith.mulf %502, %503 : vector<2x4xf32>
    %505 = vector.broadcast %499 : vector<2x1xf32> to vector<2x4xf32>
    %506 = vector.broadcast %12 : vector<1x4xf32> to vector<2x4xf32>
    %507 = arith.mulf %505, %506 : vector<2x4xf32>
    %508 = vector.broadcast %500 : vector<2x1xf32> to vector<2x4xf32>
    %509 = vector.broadcast %13 : vector<1x4xf32> to vector<2x4xf32>
    %510 = arith.mulf %508, %509 : vector<2x4xf32>
    %511 = vector.broadcast %501 : vector<2x1xf32> to vector<2x4xf32>
    %512 = vector.broadcast %14 : vector<1x4xf32> to vector<2x4xf32>
    %513 = arith.mulf %511, %512 : vector<2x4xf32>
    %514 = arith.addf %494, %504 : vector<2x4xf32>
    %515 = arith.addf %507, %510 : vector<2x4xf32>
    %516 = arith.addf %514, %515 : vector<2x4xf32>
    %517 = arith.addf %516, %513 : vector<2x4xf32>
    %518 = vector.broadcast %498 : vector<2x1xf32> to vector<2x4xf32>
    %519 = vector.broadcast %15 : vector<1x4xf32> to vector<2x4xf32>
    %520 = arith.mulf %518, %519 : vector<2x4xf32>
    %521 = vector.broadcast %499 : vector<2x1xf32> to vector<2x4xf32>
    %522 = vector.broadcast %16 : vector<1x4xf32> to vector<2x4xf32>
    %523 = arith.mulf %521, %522 : vector<2x4xf32>
    %524 = vector.broadcast %500 : vector<2x1xf32> to vector<2x4xf32>
    %525 = vector.broadcast %17 : vector<1x4xf32> to vector<2x4xf32>
    %526 = arith.mulf %524, %525 : vector<2x4xf32>
    %527 = vector.broadcast %501 : vector<2x1xf32> to vector<2x4xf32>
    %528 = vector.broadcast %18 : vector<1x4xf32> to vector<2x4xf32>
    %529 = arith.mulf %527, %528 : vector<2x4xf32>
    %530 = arith.addf %495, %520 : vector<2x4xf32>
    %531 = arith.addf %523, %526 : vector<2x4xf32>
    %532 = arith.addf %530, %531 : vector<2x4xf32>
    %533 = arith.addf %532, %529 : vector<2x4xf32>
    %534 = vector.broadcast %498 : vector<2x1xf32> to vector<2x4xf32>
    %535 = vector.broadcast %19 : vector<1x4xf32> to vector<2x4xf32>
    %536 = arith.mulf %534, %535 : vector<2x4xf32>
    %537 = vector.broadcast %499 : vector<2x1xf32> to vector<2x4xf32>
    %538 = vector.broadcast %20 : vector<1x4xf32> to vector<2x4xf32>
    %539 = arith.mulf %537, %538 : vector<2x4xf32>
    %540 = vector.broadcast %500 : vector<2x1xf32> to vector<2x4xf32>
    %541 = vector.broadcast %21 : vector<1x4xf32> to vector<2x4xf32>
    %542 = arith.mulf %540, %541 : vector<2x4xf32>
    %543 = vector.broadcast %501 : vector<2x1xf32> to vector<2x4xf32>
    %544 = vector.broadcast %22 : vector<1x4xf32> to vector<2x4xf32>
    %545 = arith.mulf %543, %544 : vector<2x4xf32>
    %546 = arith.addf %496, %536 : vector<2x4xf32>
    %547 = arith.addf %539, %542 : vector<2x4xf32>
    %548 = arith.addf %546, %547 : vector<2x4xf32>
    %549 = arith.addf %548, %545 : vector<2x4xf32>
    %550 = vector.broadcast %498 : vector<2x1xf32> to vector<2x4xf32>
    %551 = vector.broadcast %23 : vector<1x4xf32> to vector<2x4xf32>
    %552 = arith.mulf %550, %551 : vector<2x4xf32>
    %553 = vector.broadcast %499 : vector<2x1xf32> to vector<2x4xf32>
    %554 = vector.broadcast %24 : vector<1x4xf32> to vector<2x4xf32>
    %555 = arith.mulf %553, %554 : vector<2x4xf32>
    %556 = vector.broadcast %500 : vector<2x1xf32> to vector<2x4xf32>
    %557 = vector.broadcast %25 : vector<1x4xf32> to vector<2x4xf32>
    %558 = arith.mulf %556, %557 : vector<2x4xf32>
    %559 = vector.broadcast %501 : vector<2x1xf32> to vector<2x4xf32>
    %560 = vector.broadcast %26 : vector<1x4xf32> to vector<2x4xf32>
    %561 = arith.mulf %559, %560 : vector<2x4xf32>
    %562 = arith.addf %497, %552 : vector<2x4xf32>
    %563 = arith.addf %555, %558 : vector<2x4xf32>
    %564 = arith.addf %562, %563 : vector<2x4xf32>
    %565 = arith.addf %564, %561 : vector<2x4xf32>
    %566 = arith.negf %517 : vector<2x4xf32>
    %567 = math.exp %566 : vector<2x4xf32>
    %cst_24 = arith.constant 1.000000e+00 : f32
    %568 = vector.broadcast %cst_24 : f32 to vector<2x4xf32>
    %569 = arith.addf %568, %567 : vector<2x4xf32>
    %570 = arith.divf %568, %569 : vector<2x4xf32>
    %571 = arith.negf %533 : vector<2x4xf32>
    %572 = math.exp %571 : vector<2x4xf32>
    %cst_25 = arith.constant 1.000000e+00 : f32
    %573 = vector.broadcast %cst_25 : f32 to vector<2x4xf32>
    %574 = arith.addf %573, %572 : vector<2x4xf32>
    %575 = arith.divf %573, %574 : vector<2x4xf32>
    %576 = math.tanh %549 : vector<2x4xf32>
    %577 = arith.negf %565 : vector<2x4xf32>
    %578 = math.exp %577 : vector<2x4xf32>
    %cst_26 = arith.constant 1.000000e+00 : f32
    %579 = vector.broadcast %cst_26 : f32 to vector<2x4xf32>
    %580 = arith.addf %579, %578 : vector<2x4xf32>
    %581 = arith.divf %579, %580 : vector<2x4xf32>
    %582 = arith.mulf %575, %491 : vector<2x4xf32>
    %583 = arith.mulf %570, %576 : vector<2x4xf32>
    %584 = arith.addf %582, %583 : vector<2x4xf32>
    %585 = math.tanh %584 : vector<2x4xf32>
    %586 = arith.mulf %581, %585 : vector<2x4xf32>
    %587 = vector.extract_strided_slice %6 {offsets = [12, 0], sizes = [2, 4], strides = [1, 1]} : vector<16x4xf32> to vector<2x4xf32>
    %588 = vector.extract_strided_slice %7 {offsets = [12, 0], sizes = [2, 4], strides = [1, 1]} : vector<16x4xf32> to vector<2x4xf32>
    %589 = vector.extract_strided_slice %8 {offsets = [12, 0], sizes = [2, 4], strides = [1, 1]} : vector<16x4xf32> to vector<2x4xf32>
    %590 = vector.extract_strided_slice %9 {offsets = [12, 0], sizes = [2, 4], strides = [1, 1]} : vector<16x4xf32> to vector<2x4xf32>
    %591 = vector.extract_strided_slice %586 {offsets = [0, 0], sizes = [2, 1], strides = [1, 1]} : vector<2x4xf32> to vector<2x1xf32>
    %592 = vector.extract_strided_slice %586 {offsets = [0, 1], sizes = [2, 1], strides = [1, 1]} : vector<2x4xf32> to vector<2x1xf32>
    %593 = vector.extract_strided_slice %586 {offsets = [0, 2], sizes = [2, 1], strides = [1, 1]} : vector<2x4xf32> to vector<2x1xf32>
    %594 = vector.extract_strided_slice %586 {offsets = [0, 3], sizes = [2, 1], strides = [1, 1]} : vector<2x4xf32> to vector<2x1xf32>
    %595 = vector.broadcast %591 : vector<2x1xf32> to vector<2x4xf32>
    %596 = vector.broadcast %11 : vector<1x4xf32> to vector<2x4xf32>
    %597 = arith.mulf %595, %596 : vector<2x4xf32>
    %598 = vector.broadcast %592 : vector<2x1xf32> to vector<2x4xf32>
    %599 = vector.broadcast %12 : vector<1x4xf32> to vector<2x4xf32>
    %600 = arith.mulf %598, %599 : vector<2x4xf32>
    %601 = vector.broadcast %593 : vector<2x1xf32> to vector<2x4xf32>
    %602 = vector.broadcast %13 : vector<1x4xf32> to vector<2x4xf32>
    %603 = arith.mulf %601, %602 : vector<2x4xf32>
    %604 = vector.broadcast %594 : vector<2x1xf32> to vector<2x4xf32>
    %605 = vector.broadcast %14 : vector<1x4xf32> to vector<2x4xf32>
    %606 = arith.mulf %604, %605 : vector<2x4xf32>
    %607 = arith.addf %587, %597 : vector<2x4xf32>
    %608 = arith.addf %600, %603 : vector<2x4xf32>
    %609 = arith.addf %607, %608 : vector<2x4xf32>
    %610 = arith.addf %609, %606 : vector<2x4xf32>
    %611 = vector.broadcast %591 : vector<2x1xf32> to vector<2x4xf32>
    %612 = vector.broadcast %15 : vector<1x4xf32> to vector<2x4xf32>
    %613 = arith.mulf %611, %612 : vector<2x4xf32>
    %614 = vector.broadcast %592 : vector<2x1xf32> to vector<2x4xf32>
    %615 = vector.broadcast %16 : vector<1x4xf32> to vector<2x4xf32>
    %616 = arith.mulf %614, %615 : vector<2x4xf32>
    %617 = vector.broadcast %593 : vector<2x1xf32> to vector<2x4xf32>
    %618 = vector.broadcast %17 : vector<1x4xf32> to vector<2x4xf32>
    %619 = arith.mulf %617, %618 : vector<2x4xf32>
    %620 = vector.broadcast %594 : vector<2x1xf32> to vector<2x4xf32>
    %621 = vector.broadcast %18 : vector<1x4xf32> to vector<2x4xf32>
    %622 = arith.mulf %620, %621 : vector<2x4xf32>
    %623 = arith.addf %588, %613 : vector<2x4xf32>
    %624 = arith.addf %616, %619 : vector<2x4xf32>
    %625 = arith.addf %623, %624 : vector<2x4xf32>
    %626 = arith.addf %625, %622 : vector<2x4xf32>
    %627 = vector.broadcast %591 : vector<2x1xf32> to vector<2x4xf32>
    %628 = vector.broadcast %19 : vector<1x4xf32> to vector<2x4xf32>
    %629 = arith.mulf %627, %628 : vector<2x4xf32>
    %630 = vector.broadcast %592 : vector<2x1xf32> to vector<2x4xf32>
    %631 = vector.broadcast %20 : vector<1x4xf32> to vector<2x4xf32>
    %632 = arith.mulf %630, %631 : vector<2x4xf32>
    %633 = vector.broadcast %593 : vector<2x1xf32> to vector<2x4xf32>
    %634 = vector.broadcast %21 : vector<1x4xf32> to vector<2x4xf32>
    %635 = arith.mulf %633, %634 : vector<2x4xf32>
    %636 = vector.broadcast %594 : vector<2x1xf32> to vector<2x4xf32>
    %637 = vector.broadcast %22 : vector<1x4xf32> to vector<2x4xf32>
    %638 = arith.mulf %636, %637 : vector<2x4xf32>
    %639 = arith.addf %589, %629 : vector<2x4xf32>
    %640 = arith.addf %632, %635 : vector<2x4xf32>
    %641 = arith.addf %639, %640 : vector<2x4xf32>
    %642 = arith.addf %641, %638 : vector<2x4xf32>
    %643 = vector.broadcast %591 : vector<2x1xf32> to vector<2x4xf32>
    %644 = vector.broadcast %23 : vector<1x4xf32> to vector<2x4xf32>
    %645 = arith.mulf %643, %644 : vector<2x4xf32>
    %646 = vector.broadcast %592 : vector<2x1xf32> to vector<2x4xf32>
    %647 = vector.broadcast %24 : vector<1x4xf32> to vector<2x4xf32>
    %648 = arith.mulf %646, %647 : vector<2x4xf32>
    %649 = vector.broadcast %593 : vector<2x1xf32> to vector<2x4xf32>
    %650 = vector.broadcast %25 : vector<1x4xf32> to vector<2x4xf32>
    %651 = arith.mulf %649, %650 : vector<2x4xf32>
    %652 = vector.broadcast %594 : vector<2x1xf32> to vector<2x4xf32>
    %653 = vector.broadcast %26 : vector<1x4xf32> to vector<2x4xf32>
    %654 = arith.mulf %652, %653 : vector<2x4xf32>
    %655 = arith.addf %590, %645 : vector<2x4xf32>
    %656 = arith.addf %648, %651 : vector<2x4xf32>
    %657 = arith.addf %655, %656 : vector<2x4xf32>
    %658 = arith.addf %657, %654 : vector<2x4xf32>
    %659 = arith.negf %610 : vector<2x4xf32>
    %660 = math.exp %659 : vector<2x4xf32>
    %cst_27 = arith.constant 1.000000e+00 : f32
    %661 = vector.broadcast %cst_27 : f32 to vector<2x4xf32>
    %662 = arith.addf %661, %660 : vector<2x4xf32>
    %663 = arith.divf %661, %662 : vector<2x4xf32>
    %664 = arith.negf %626 : vector<2x4xf32>
    %665 = math.exp %664 : vector<2x4xf32>
    %cst_28 = arith.constant 1.000000e+00 : f32
    %666 = vector.broadcast %cst_28 : f32 to vector<2x4xf32>
    %667 = arith.addf %666, %665 : vector<2x4xf32>
    %668 = arith.divf %666, %667 : vector<2x4xf32>
    %669 = math.tanh %642 : vector<2x4xf32>
    %670 = arith.negf %658 : vector<2x4xf32>
    %671 = math.exp %670 : vector<2x4xf32>
    %cst_29 = arith.constant 1.000000e+00 : f32
    %672 = vector.broadcast %cst_29 : f32 to vector<2x4xf32>
    %673 = arith.addf %672, %671 : vector<2x4xf32>
    %674 = arith.divf %672, %673 : vector<2x4xf32>
    %675 = arith.mulf %668, %584 : vector<2x4xf32>
    %676 = arith.mulf %663, %669 : vector<2x4xf32>
    %677 = arith.addf %675, %676 : vector<2x4xf32>
    %678 = math.tanh %677 : vector<2x4xf32>
    %679 = arith.mulf %674, %678 : vector<2x4xf32>
    %680 = vector.extract_strided_slice %6 {offsets = [14, 0], sizes = [2, 4], strides = [1, 1]} : vector<16x4xf32> to vector<2x4xf32>
    %681 = vector.extract_strided_slice %7 {offsets = [14, 0], sizes = [2, 4], strides = [1, 1]} : vector<16x4xf32> to vector<2x4xf32>
    %682 = vector.extract_strided_slice %8 {offsets = [14, 0], sizes = [2, 4], strides = [1, 1]} : vector<16x4xf32> to vector<2x4xf32>
    %683 = vector.extract_strided_slice %9 {offsets = [14, 0], sizes = [2, 4], strides = [1, 1]} : vector<16x4xf32> to vector<2x4xf32>
    %684 = vector.extract_strided_slice %679 {offsets = [0, 0], sizes = [2, 1], strides = [1, 1]} : vector<2x4xf32> to vector<2x1xf32>
    %685 = vector.extract_strided_slice %679 {offsets = [0, 1], sizes = [2, 1], strides = [1, 1]} : vector<2x4xf32> to vector<2x1xf32>
    %686 = vector.extract_strided_slice %679 {offsets = [0, 2], sizes = [2, 1], strides = [1, 1]} : vector<2x4xf32> to vector<2x1xf32>
    %687 = vector.extract_strided_slice %679 {offsets = [0, 3], sizes = [2, 1], strides = [1, 1]} : vector<2x4xf32> to vector<2x1xf32>
    %688 = vector.broadcast %684 : vector<2x1xf32> to vector<2x4xf32>
    %689 = vector.broadcast %11 : vector<1x4xf32> to vector<2x4xf32>
    %690 = arith.mulf %688, %689 : vector<2x4xf32>
    %691 = vector.broadcast %685 : vector<2x1xf32> to vector<2x4xf32>
    %692 = vector.broadcast %12 : vector<1x4xf32> to vector<2x4xf32>
    %693 = arith.mulf %691, %692 : vector<2x4xf32>
    %694 = vector.broadcast %686 : vector<2x1xf32> to vector<2x4xf32>
    %695 = vector.broadcast %13 : vector<1x4xf32> to vector<2x4xf32>
    %696 = arith.mulf %694, %695 : vector<2x4xf32>
    %697 = vector.broadcast %687 : vector<2x1xf32> to vector<2x4xf32>
    %698 = vector.broadcast %14 : vector<1x4xf32> to vector<2x4xf32>
    %699 = arith.mulf %697, %698 : vector<2x4xf32>
    %700 = arith.addf %680, %690 : vector<2x4xf32>
    %701 = arith.addf %693, %696 : vector<2x4xf32>
    %702 = arith.addf %700, %701 : vector<2x4xf32>
    %703 = arith.addf %702, %699 : vector<2x4xf32>
    %704 = vector.broadcast %684 : vector<2x1xf32> to vector<2x4xf32>
    %705 = vector.broadcast %15 : vector<1x4xf32> to vector<2x4xf32>
    %706 = arith.mulf %704, %705 : vector<2x4xf32>
    %707 = vector.broadcast %685 : vector<2x1xf32> to vector<2x4xf32>
    %708 = vector.broadcast %16 : vector<1x4xf32> to vector<2x4xf32>
    %709 = arith.mulf %707, %708 : vector<2x4xf32>
    %710 = vector.broadcast %686 : vector<2x1xf32> to vector<2x4xf32>
    %711 = vector.broadcast %17 : vector<1x4xf32> to vector<2x4xf32>
    %712 = arith.mulf %710, %711 : vector<2x4xf32>
    %713 = vector.broadcast %687 : vector<2x1xf32> to vector<2x4xf32>
    %714 = vector.broadcast %18 : vector<1x4xf32> to vector<2x4xf32>
    %715 = arith.mulf %713, %714 : vector<2x4xf32>
    %716 = arith.addf %681, %706 : vector<2x4xf32>
    %717 = arith.addf %709, %712 : vector<2x4xf32>
    %718 = arith.addf %716, %717 : vector<2x4xf32>
    %719 = arith.addf %718, %715 : vector<2x4xf32>
    %720 = vector.broadcast %684 : vector<2x1xf32> to vector<2x4xf32>
    %721 = vector.broadcast %19 : vector<1x4xf32> to vector<2x4xf32>
    %722 = arith.mulf %720, %721 : vector<2x4xf32>
    %723 = vector.broadcast %685 : vector<2x1xf32> to vector<2x4xf32>
    %724 = vector.broadcast %20 : vector<1x4xf32> to vector<2x4xf32>
    %725 = arith.mulf %723, %724 : vector<2x4xf32>
    %726 = vector.broadcast %686 : vector<2x1xf32> to vector<2x4xf32>
    %727 = vector.broadcast %21 : vector<1x4xf32> to vector<2x4xf32>
    %728 = arith.mulf %726, %727 : vector<2x4xf32>
    %729 = vector.broadcast %687 : vector<2x1xf32> to vector<2x4xf32>
    %730 = vector.broadcast %22 : vector<1x4xf32> to vector<2x4xf32>
    %731 = arith.mulf %729, %730 : vector<2x4xf32>
    %732 = arith.addf %682, %722 : vector<2x4xf32>
    %733 = arith.addf %725, %728 : vector<2x4xf32>
    %734 = arith.addf %732, %733 : vector<2x4xf32>
    %735 = arith.addf %734, %731 : vector<2x4xf32>
    %736 = vector.broadcast %684 : vector<2x1xf32> to vector<2x4xf32>
    %737 = vector.broadcast %23 : vector<1x4xf32> to vector<2x4xf32>
    %738 = arith.mulf %736, %737 : vector<2x4xf32>
    %739 = vector.broadcast %685 : vector<2x1xf32> to vector<2x4xf32>
    %740 = vector.broadcast %24 : vector<1x4xf32> to vector<2x4xf32>
    %741 = arith.mulf %739, %740 : vector<2x4xf32>
    %742 = vector.broadcast %686 : vector<2x1xf32> to vector<2x4xf32>
    %743 = vector.broadcast %25 : vector<1x4xf32> to vector<2x4xf32>
    %744 = arith.mulf %742, %743 : vector<2x4xf32>
    %745 = vector.broadcast %687 : vector<2x1xf32> to vector<2x4xf32>
    %746 = vector.broadcast %26 : vector<1x4xf32> to vector<2x4xf32>
    %747 = arith.mulf %745, %746 : vector<2x4xf32>
    %748 = arith.addf %683, %738 : vector<2x4xf32>
    %749 = arith.addf %741, %744 : vector<2x4xf32>
    %750 = arith.addf %748, %749 : vector<2x4xf32>
    %751 = arith.addf %750, %747 : vector<2x4xf32>
    %752 = arith.negf %703 : vector<2x4xf32>
    %753 = math.exp %752 : vector<2x4xf32>
    %cst_30 = arith.constant 1.000000e+00 : f32
    %754 = vector.broadcast %cst_30 : f32 to vector<2x4xf32>
    %755 = arith.addf %754, %753 : vector<2x4xf32>
    %756 = arith.divf %754, %755 : vector<2x4xf32>
    %757 = arith.negf %719 : vector<2x4xf32>
    %758 = math.exp %757 : vector<2x4xf32>
    %cst_31 = arith.constant 1.000000e+00 : f32
    %759 = vector.broadcast %cst_31 : f32 to vector<2x4xf32>
    %760 = arith.addf %759, %758 : vector<2x4xf32>
    %761 = arith.divf %759, %760 : vector<2x4xf32>
    %762 = math.tanh %735 : vector<2x4xf32>
    %763 = arith.negf %751 : vector<2x4xf32>
    %764 = math.exp %763 : vector<2x4xf32>
    %cst_32 = arith.constant 1.000000e+00 : f32
    %765 = vector.broadcast %cst_32 : f32 to vector<2x4xf32>
    %766 = arith.addf %765, %764 : vector<2x4xf32>
    %767 = arith.divf %765, %766 : vector<2x4xf32>
    %768 = arith.mulf %761, %677 : vector<2x4xf32>
    %769 = arith.mulf %756, %762 : vector<2x4xf32>
    %770 = arith.addf %768, %769 : vector<2x4xf32>
    %771 = math.tanh %770 : vector<2x4xf32>
    %772 = arith.mulf %767, %771 : vector<2x4xf32>
    %c0_33 = arith.constant 0 : index
    %c0_34 = arith.constant 0 : index
    %773 = vector.load %arg5[%c0_33, %c0_34] : memref<4x16xf32, #tpu.memory_space<vmem>>, vector<4x16xf32>
    %774 = vector.extract_strided_slice %773 {offsets = [0, 0], sizes = [1, 4], strides = [1, 1]} : vector<4x16xf32> to vector<1x4xf32>
    %775 = vector.extract_strided_slice %773 {offsets = [1, 0], sizes = [1, 4], strides = [1, 1]} : vector<4x16xf32> to vector<1x4xf32>
    %776 = vector.extract_strided_slice %773 {offsets = [2, 0], sizes = [1, 4], strides = [1, 1]} : vector<4x16xf32> to vector<1x4xf32>
    %777 = vector.extract_strided_slice %773 {offsets = [3, 0], sizes = [1, 4], strides = [1, 1]} : vector<4x16xf32> to vector<1x4xf32>
    %778 = vector.extract_strided_slice %773 {offsets = [0, 4], sizes = [1, 4], strides = [1, 1]} : vector<4x16xf32> to vector<1x4xf32>
    %779 = vector.extract_strided_slice %773 {offsets = [1, 4], sizes = [1, 4], strides = [1, 1]} : vector<4x16xf32> to vector<1x4xf32>
    %780 = vector.extract_strided_slice %773 {offsets = [2, 4], sizes = [1, 4], strides = [1, 1]} : vector<4x16xf32> to vector<1x4xf32>
    %781 = vector.extract_strided_slice %773 {offsets = [3, 4], sizes = [1, 4], strides = [1, 1]} : vector<4x16xf32> to vector<1x4xf32>
    %782 = vector.extract_strided_slice %773 {offsets = [0, 8], sizes = [1, 4], strides = [1, 1]} : vector<4x16xf32> to vector<1x4xf32>
    %783 = vector.extract_strided_slice %773 {offsets = [1, 8], sizes = [1, 4], strides = [1, 1]} : vector<4x16xf32> to vector<1x4xf32>
    %784 = vector.extract_strided_slice %773 {offsets = [2, 8], sizes = [1, 4], strides = [1, 1]} : vector<4x16xf32> to vector<1x4xf32>
    %785 = vector.extract_strided_slice %773 {offsets = [3, 8], sizes = [1, 4], strides = [1, 1]} : vector<4x16xf32> to vector<1x4xf32>
    %786 = vector.extract_strided_slice %773 {offsets = [0, 12], sizes = [1, 4], strides = [1, 1]} : vector<4x16xf32> to vector<1x4xf32>
    %787 = vector.extract_strided_slice %773 {offsets = [1, 12], sizes = [1, 4], strides = [1, 1]} : vector<4x16xf32> to vector<1x4xf32>
    %788 = vector.extract_strided_slice %773 {offsets = [2, 12], sizes = [1, 4], strides = [1, 1]} : vector<4x16xf32> to vector<1x4xf32>
    %789 = vector.extract_strided_slice %773 {offsets = [3, 12], sizes = [1, 4], strides = [1, 1]} : vector<4x16xf32> to vector<1x4xf32>
    %c0_35 = arith.constant 0 : index
    %c0_36 = arith.constant 0 : index
    %790 = vector.load %arg4[%c0_35, %c0_36] : memref<4x16xf32, #tpu.memory_space<vmem>>, vector<4x16xf32>
    %791 = vector.extract_strided_slice %790 {offsets = [0, 0], sizes = [1, 4], strides = [1, 1]} : vector<4x16xf32> to vector<1x4xf32>
    %792 = vector.extract_strided_slice %790 {offsets = [1, 0], sizes = [1, 4], strides = [1, 1]} : vector<4x16xf32> to vector<1x4xf32>
    %793 = vector.extract_strided_slice %790 {offsets = [2, 0], sizes = [1, 4], strides = [1, 1]} : vector<4x16xf32> to vector<1x4xf32>
    %794 = vector.extract_strided_slice %790 {offsets = [3, 0], sizes = [1, 4], strides = [1, 1]} : vector<4x16xf32> to vector<1x4xf32>
    %795 = vector.extract_strided_slice %790 {offsets = [0, 4], sizes = [1, 4], strides = [1, 1]} : vector<4x16xf32> to vector<1x4xf32>
    %796 = vector.extract_strided_slice %790 {offsets = [1, 4], sizes = [1, 4], strides = [1, 1]} : vector<4x16xf32> to vector<1x4xf32>
    %797 = vector.extract_strided_slice %790 {offsets = [2, 4], sizes = [1, 4], strides = [1, 1]} : vector<4x16xf32> to vector<1x4xf32>
    %798 = vector.extract_strided_slice %790 {offsets = [3, 4], sizes = [1, 4], strides = [1, 1]} : vector<4x16xf32> to vector<1x4xf32>
    %799 = vector.extract_strided_slice %790 {offsets = [0, 8], sizes = [1, 4], strides = [1, 1]} : vector<4x16xf32> to vector<1x4xf32>
    %800 = vector.extract_strided_slice %790 {offsets = [1, 8], sizes = [1, 4], strides = [1, 1]} : vector<4x16xf32> to vector<1x4xf32>
    %801 = vector.extract_strided_slice %790 {offsets = [2, 8], sizes = [1, 4], strides = [1, 1]} : vector<4x16xf32> to vector<1x4xf32>
    %802 = vector.extract_strided_slice %790 {offsets = [3, 8], sizes = [1, 4], strides = [1, 1]} : vector<4x16xf32> to vector<1x4xf32>
    %803 = vector.extract_strided_slice %790 {offsets = [0, 12], sizes = [1, 4], strides = [1, 1]} : vector<4x16xf32> to vector<1x4xf32>
    %804 = vector.extract_strided_slice %790 {offsets = [1, 12], sizes = [1, 4], strides = [1, 1]} : vector<4x16xf32> to vector<1x4xf32>
    %805 = vector.extract_strided_slice %790 {offsets = [2, 12], sizes = [1, 4], strides = [1, 1]} : vector<4x16xf32> to vector<1x4xf32>
    %806 = vector.extract_strided_slice %790 {offsets = [3, 12], sizes = [1, 4], strides = [1, 1]} : vector<4x16xf32> to vector<1x4xf32>
    %c0_37 = arith.constant 0 : index
    %c0_38 = arith.constant 0 : index
    %807 = vector.load %arg6[%c0_37, %c0_38] : memref<1x16xf32, #tpu.memory_space<vmem>>, vector<1x16xf32>
    %808 = vector.extract_strided_slice %807 {offsets = [0, 0], sizes = [1, 4], strides = [1, 1]} : vector<1x16xf32> to vector<1x4xf32>
    %809 = vector.shape_cast %808 : vector<1x4xf32> to vector<1x4xf32>
    %810 = vector.broadcast %809 : vector<1x4xf32> to vector<2x4xf32>
    %811 = vector.extract_strided_slice %807 {offsets = [0, 4], sizes = [1, 4], strides = [1, 1]} : vector<1x16xf32> to vector<1x4xf32>
    %812 = vector.shape_cast %811 : vector<1x4xf32> to vector<1x4xf32>
    %813 = vector.broadcast %812 : vector<1x4xf32> to vector<2x4xf32>
    %814 = vector.extract_strided_slice %807 {offsets = [0, 8], sizes = [1, 4], strides = [1, 1]} : vector<1x16xf32> to vector<1x4xf32>
    %815 = vector.shape_cast %814 : vector<1x4xf32> to vector<1x4xf32>
    %816 = vector.broadcast %815 : vector<1x4xf32> to vector<2x4xf32>
    %817 = vector.extract_strided_slice %807 {offsets = [0, 12], sizes = [1, 4], strides = [1, 1]} : vector<1x16xf32> to vector<1x4xf32>
    %818 = vector.shape_cast %817 : vector<1x4xf32> to vector<1x4xf32>
    %819 = vector.broadcast %818 : vector<1x4xf32> to vector<2x4xf32>
    %cst_39 = arith.constant 0.000000e+00 : f32
    %820 = vector.broadcast %cst_39 : f32 to vector<2x4xf32>
    %821 = arith.maximumf %121, %820 : vector<2x4xf32>
    %822 = vector.extract_strided_slice %821 {offsets = [0, 0], sizes = [2, 1], strides = [1, 1]} : vector<2x4xf32> to vector<2x1xf32>
    %823 = vector.extract_strided_slice %821 {offsets = [0, 1], sizes = [2, 1], strides = [1, 1]} : vector<2x4xf32> to vector<2x1xf32>
    %824 = vector.extract_strided_slice %821 {offsets = [0, 2], sizes = [2, 1], strides = [1, 1]} : vector<2x4xf32> to vector<2x1xf32>
    %825 = vector.extract_strided_slice %821 {offsets = [0, 3], sizes = [2, 1], strides = [1, 1]} : vector<2x4xf32> to vector<2x1xf32>
    %826 = vector.broadcast %822 : vector<2x1xf32> to vector<2x4xf32>
    %827 = vector.broadcast %791 : vector<1x4xf32> to vector<2x4xf32>
    %828 = arith.mulf %826, %827 : vector<2x4xf32>
    %829 = vector.broadcast %823 : vector<2x1xf32> to vector<2x4xf32>
    %830 = vector.broadcast %792 : vector<1x4xf32> to vector<2x4xf32>
    %831 = arith.mulf %829, %830 : vector<2x4xf32>
    %832 = vector.broadcast %824 : vector<2x1xf32> to vector<2x4xf32>
    %833 = vector.broadcast %793 : vector<1x4xf32> to vector<2x4xf32>
    %834 = arith.mulf %832, %833 : vector<2x4xf32>
    %835 = vector.broadcast %825 : vector<2x1xf32> to vector<2x4xf32>
    %836 = vector.broadcast %794 : vector<1x4xf32> to vector<2x4xf32>
    %837 = arith.mulf %835, %836 : vector<2x4xf32>
    %838 = arith.addf %810, %828 : vector<2x4xf32>
    %839 = arith.addf %831, %834 : vector<2x4xf32>
    %840 = arith.addf %838, %839 : vector<2x4xf32>
    %841 = arith.addf %840, %837 : vector<2x4xf32>
    %842 = vector.broadcast %822 : vector<2x1xf32> to vector<2x4xf32>
    %843 = vector.broadcast %795 : vector<1x4xf32> to vector<2x4xf32>
    %844 = arith.mulf %842, %843 : vector<2x4xf32>
    %845 = vector.broadcast %823 : vector<2x1xf32> to vector<2x4xf32>
    %846 = vector.broadcast %796 : vector<1x4xf32> to vector<2x4xf32>
    %847 = arith.mulf %845, %846 : vector<2x4xf32>
    %848 = vector.broadcast %824 : vector<2x1xf32> to vector<2x4xf32>
    %849 = vector.broadcast %797 : vector<1x4xf32> to vector<2x4xf32>
    %850 = arith.mulf %848, %849 : vector<2x4xf32>
    %851 = vector.broadcast %825 : vector<2x1xf32> to vector<2x4xf32>
    %852 = vector.broadcast %798 : vector<1x4xf32> to vector<2x4xf32>
    %853 = arith.mulf %851, %852 : vector<2x4xf32>
    %854 = arith.addf %813, %844 : vector<2x4xf32>
    %855 = arith.addf %847, %850 : vector<2x4xf32>
    %856 = arith.addf %854, %855 : vector<2x4xf32>
    %857 = arith.addf %856, %853 : vector<2x4xf32>
    %858 = vector.broadcast %822 : vector<2x1xf32> to vector<2x4xf32>
    %859 = vector.broadcast %799 : vector<1x4xf32> to vector<2x4xf32>
    %860 = arith.mulf %858, %859 : vector<2x4xf32>
    %861 = vector.broadcast %823 : vector<2x1xf32> to vector<2x4xf32>
    %862 = vector.broadcast %800 : vector<1x4xf32> to vector<2x4xf32>
    %863 = arith.mulf %861, %862 : vector<2x4xf32>
    %864 = vector.broadcast %824 : vector<2x1xf32> to vector<2x4xf32>
    %865 = vector.broadcast %801 : vector<1x4xf32> to vector<2x4xf32>
    %866 = arith.mulf %864, %865 : vector<2x4xf32>
    %867 = vector.broadcast %825 : vector<2x1xf32> to vector<2x4xf32>
    %868 = vector.broadcast %802 : vector<1x4xf32> to vector<2x4xf32>
    %869 = arith.mulf %867, %868 : vector<2x4xf32>
    %870 = arith.addf %816, %860 : vector<2x4xf32>
    %871 = arith.addf %863, %866 : vector<2x4xf32>
    %872 = arith.addf %870, %871 : vector<2x4xf32>
    %873 = arith.addf %872, %869 : vector<2x4xf32>
    %874 = vector.broadcast %822 : vector<2x1xf32> to vector<2x4xf32>
    %875 = vector.broadcast %803 : vector<1x4xf32> to vector<2x4xf32>
    %876 = arith.mulf %874, %875 : vector<2x4xf32>
    %877 = vector.broadcast %823 : vector<2x1xf32> to vector<2x4xf32>
    %878 = vector.broadcast %804 : vector<1x4xf32> to vector<2x4xf32>
    %879 = arith.mulf %877, %878 : vector<2x4xf32>
    %880 = vector.broadcast %824 : vector<2x1xf32> to vector<2x4xf32>
    %881 = vector.broadcast %805 : vector<1x4xf32> to vector<2x4xf32>
    %882 = arith.mulf %880, %881 : vector<2x4xf32>
    %883 = vector.broadcast %825 : vector<2x1xf32> to vector<2x4xf32>
    %884 = vector.broadcast %806 : vector<1x4xf32> to vector<2x4xf32>
    %885 = arith.mulf %883, %884 : vector<2x4xf32>
    %886 = arith.addf %819, %876 : vector<2x4xf32>
    %887 = arith.addf %879, %882 : vector<2x4xf32>
    %888 = arith.addf %886, %887 : vector<2x4xf32>
    %889 = arith.addf %888, %885 : vector<2x4xf32>
    %890 = vector.extract_strided_slice %772 {offsets = [0, 0], sizes = [2, 1], strides = [1, 1]} : vector<2x4xf32> to vector<2x1xf32>
    %891 = vector.extract_strided_slice %772 {offsets = [0, 1], sizes = [2, 1], strides = [1, 1]} : vector<2x4xf32> to vector<2x1xf32>
    %892 = vector.extract_strided_slice %772 {offsets = [0, 2], sizes = [2, 1], strides = [1, 1]} : vector<2x4xf32> to vector<2x1xf32>
    %893 = vector.extract_strided_slice %772 {offsets = [0, 3], sizes = [2, 1], strides = [1, 1]} : vector<2x4xf32> to vector<2x1xf32>
    %894 = vector.broadcast %890 : vector<2x1xf32> to vector<2x4xf32>
    %895 = vector.broadcast %774 : vector<1x4xf32> to vector<2x4xf32>
    %896 = arith.mulf %894, %895 : vector<2x4xf32>
    %897 = vector.broadcast %891 : vector<2x1xf32> to vector<2x4xf32>
    %898 = vector.broadcast %775 : vector<1x4xf32> to vector<2x4xf32>
    %899 = arith.mulf %897, %898 : vector<2x4xf32>
    %900 = vector.broadcast %892 : vector<2x1xf32> to vector<2x4xf32>
    %901 = vector.broadcast %776 : vector<1x4xf32> to vector<2x4xf32>
    %902 = arith.mulf %900, %901 : vector<2x4xf32>
    %903 = vector.broadcast %893 : vector<2x1xf32> to vector<2x4xf32>
    %904 = vector.broadcast %777 : vector<1x4xf32> to vector<2x4xf32>
    %905 = arith.mulf %903, %904 : vector<2x4xf32>
    %906 = arith.addf %841, %896 : vector<2x4xf32>
    %907 = arith.addf %899, %902 : vector<2x4xf32>
    %908 = arith.addf %906, %907 : vector<2x4xf32>
    %909 = arith.addf %908, %905 : vector<2x4xf32>
    %910 = vector.broadcast %890 : vector<2x1xf32> to vector<2x4xf32>
    %911 = vector.broadcast %778 : vector<1x4xf32> to vector<2x4xf32>
    %912 = arith.mulf %910, %911 : vector<2x4xf32>
    %913 = vector.broadcast %891 : vector<2x1xf32> to vector<2x4xf32>
    %914 = vector.broadcast %779 : vector<1x4xf32> to vector<2x4xf32>
    %915 = arith.mulf %913, %914 : vector<2x4xf32>
    %916 = vector.broadcast %892 : vector<2x1xf32> to vector<2x4xf32>
    %917 = vector.broadcast %780 : vector<1x4xf32> to vector<2x4xf32>
    %918 = arith.mulf %916, %917 : vector<2x4xf32>
    %919 = vector.broadcast %893 : vector<2x1xf32> to vector<2x4xf32>
    %920 = vector.broadcast %781 : vector<1x4xf32> to vector<2x4xf32>
    %921 = arith.mulf %919, %920 : vector<2x4xf32>
    %922 = arith.addf %857, %912 : vector<2x4xf32>
    %923 = arith.addf %915, %918 : vector<2x4xf32>
    %924 = arith.addf %922, %923 : vector<2x4xf32>
    %925 = arith.addf %924, %921 : vector<2x4xf32>
    %926 = vector.broadcast %890 : vector<2x1xf32> to vector<2x4xf32>
    %927 = vector.broadcast %782 : vector<1x4xf32> to vector<2x4xf32>
    %928 = arith.mulf %926, %927 : vector<2x4xf32>
    %929 = vector.broadcast %891 : vector<2x1xf32> to vector<2x4xf32>
    %930 = vector.broadcast %783 : vector<1x4xf32> to vector<2x4xf32>
    %931 = arith.mulf %929, %930 : vector<2x4xf32>
    %932 = vector.broadcast %892 : vector<2x1xf32> to vector<2x4xf32>
    %933 = vector.broadcast %784 : vector<1x4xf32> to vector<2x4xf32>
    %934 = arith.mulf %932, %933 : vector<2x4xf32>
    %935 = vector.broadcast %893 : vector<2x1xf32> to vector<2x4xf32>
    %936 = vector.broadcast %785 : vector<1x4xf32> to vector<2x4xf32>
    %937 = arith.mulf %935, %936 : vector<2x4xf32>
    %938 = arith.addf %873, %928 : vector<2x4xf32>
    %939 = arith.addf %931, %934 : vector<2x4xf32>
    %940 = arith.addf %938, %939 : vector<2x4xf32>
    %941 = arith.addf %940, %937 : vector<2x4xf32>
    %942 = vector.broadcast %890 : vector<2x1xf32> to vector<2x4xf32>
    %943 = vector.broadcast %786 : vector<1x4xf32> to vector<2x4xf32>
    %944 = arith.mulf %942, %943 : vector<2x4xf32>
    %945 = vector.broadcast %891 : vector<2x1xf32> to vector<2x4xf32>
    %946 = vector.broadcast %787 : vector<1x4xf32> to vector<2x4xf32>
    %947 = arith.mulf %945, %946 : vector<2x4xf32>
    %948 = vector.broadcast %892 : vector<2x1xf32> to vector<2x4xf32>
    %949 = vector.broadcast %788 : vector<1x4xf32> to vector<2x4xf32>
    %950 = arith.mulf %948, %949 : vector<2x4xf32>
    %951 = vector.broadcast %893 : vector<2x1xf32> to vector<2x4xf32>
    %952 = vector.broadcast %789 : vector<1x4xf32> to vector<2x4xf32>
    %953 = arith.mulf %951, %952 : vector<2x4xf32>
    %954 = arith.addf %889, %944 : vector<2x4xf32>
    %955 = arith.addf %947, %950 : vector<2x4xf32>
    %956 = arith.addf %954, %955 : vector<2x4xf32>
    %957 = arith.addf %956, %953 : vector<2x4xf32>
    %958 = arith.negf %909 : vector<2x4xf32>
    %959 = math.exp %958 : vector<2x4xf32>
    %cst_40 = arith.constant 1.000000e+00 : f32
    %960 = vector.broadcast %cst_40 : f32 to vector<2x4xf32>
    %961 = arith.addf %960, %959 : vector<2x4xf32>
    %962 = arith.divf %960, %961 : vector<2x4xf32>
    %963 = arith.negf %925 : vector<2x4xf32>
    %964 = math.exp %963 : vector<2x4xf32>
    %cst_41 = arith.constant 1.000000e+00 : f32
    %965 = vector.broadcast %cst_41 : f32 to vector<2x4xf32>
    %966 = arith.addf %965, %964 : vector<2x4xf32>
    %967 = arith.divf %965, %966 : vector<2x4xf32>
    %968 = math.tanh %941 : vector<2x4xf32>
    %969 = arith.negf %957 : vector<2x4xf32>
    %970 = math.exp %969 : vector<2x4xf32>
    %cst_42 = arith.constant 1.000000e+00 : f32
    %971 = vector.broadcast %cst_42 : f32 to vector<2x4xf32>
    %972 = arith.addf %971, %970 : vector<2x4xf32>
    %973 = arith.divf %971, %972 : vector<2x4xf32>
    %974 = arith.mulf %967, %770 : vector<2x4xf32>
    %975 = arith.mulf %962, %968 : vector<2x4xf32>
    %976 = arith.addf %974, %975 : vector<2x4xf32>
    %977 = math.tanh %976 : vector<2x4xf32>
    %978 = arith.mulf %973, %977 : vector<2x4xf32>
    %cst_43 = arith.constant 0.000000e+00 : f32
    %979 = vector.broadcast %cst_43 : f32 to vector<2x4xf32>
    %980 = arith.maximumf %214, %979 : vector<2x4xf32>
    %981 = vector.extract_strided_slice %980 {offsets = [0, 0], sizes = [2, 1], strides = [1, 1]} : vector<2x4xf32> to vector<2x1xf32>
    %982 = vector.extract_strided_slice %980 {offsets = [0, 1], sizes = [2, 1], strides = [1, 1]} : vector<2x4xf32> to vector<2x1xf32>
    %983 = vector.extract_strided_slice %980 {offsets = [0, 2], sizes = [2, 1], strides = [1, 1]} : vector<2x4xf32> to vector<2x1xf32>
    %984 = vector.extract_strided_slice %980 {offsets = [0, 3], sizes = [2, 1], strides = [1, 1]} : vector<2x4xf32> to vector<2x1xf32>
    %985 = vector.broadcast %981 : vector<2x1xf32> to vector<2x4xf32>
    %986 = vector.broadcast %791 : vector<1x4xf32> to vector<2x4xf32>
    %987 = arith.mulf %985, %986 : vector<2x4xf32>
    %988 = vector.broadcast %982 : vector<2x1xf32> to vector<2x4xf32>
    %989 = vector.broadcast %792 : vector<1x4xf32> to vector<2x4xf32>
    %990 = arith.mulf %988, %989 : vector<2x4xf32>
    %991 = vector.broadcast %983 : vector<2x1xf32> to vector<2x4xf32>
    %992 = vector.broadcast %793 : vector<1x4xf32> to vector<2x4xf32>
    %993 = arith.mulf %991, %992 : vector<2x4xf32>
    %994 = vector.broadcast %984 : vector<2x1xf32> to vector<2x4xf32>
    %995 = vector.broadcast %794 : vector<1x4xf32> to vector<2x4xf32>
    %996 = arith.mulf %994, %995 : vector<2x4xf32>
    %997 = arith.addf %810, %987 : vector<2x4xf32>
    %998 = arith.addf %990, %993 : vector<2x4xf32>
    %999 = arith.addf %997, %998 : vector<2x4xf32>
    %1000 = arith.addf %999, %996 : vector<2x4xf32>
    %1001 = vector.broadcast %981 : vector<2x1xf32> to vector<2x4xf32>
    %1002 = vector.broadcast %795 : vector<1x4xf32> to vector<2x4xf32>
    %1003 = arith.mulf %1001, %1002 : vector<2x4xf32>
    %1004 = vector.broadcast %982 : vector<2x1xf32> to vector<2x4xf32>
    %1005 = vector.broadcast %796 : vector<1x4xf32> to vector<2x4xf32>
    %1006 = arith.mulf %1004, %1005 : vector<2x4xf32>
    %1007 = vector.broadcast %983 : vector<2x1xf32> to vector<2x4xf32>
    %1008 = vector.broadcast %797 : vector<1x4xf32> to vector<2x4xf32>
    %1009 = arith.mulf %1007, %1008 : vector<2x4xf32>
    %1010 = vector.broadcast %984 : vector<2x1xf32> to vector<2x4xf32>
    %1011 = vector.broadcast %798 : vector<1x4xf32> to vector<2x4xf32>
    %1012 = arith.mulf %1010, %1011 : vector<2x4xf32>
    %1013 = arith.addf %813, %1003 : vector<2x4xf32>
    %1014 = arith.addf %1006, %1009 : vector<2x4xf32>
    %1015 = arith.addf %1013, %1014 : vector<2x4xf32>
    %1016 = arith.addf %1015, %1012 : vector<2x4xf32>
    %1017 = vector.broadcast %981 : vector<2x1xf32> to vector<2x4xf32>
    %1018 = vector.broadcast %799 : vector<1x4xf32> to vector<2x4xf32>
    %1019 = arith.mulf %1017, %1018 : vector<2x4xf32>
    %1020 = vector.broadcast %982 : vector<2x1xf32> to vector<2x4xf32>
    %1021 = vector.broadcast %800 : vector<1x4xf32> to vector<2x4xf32>
    %1022 = arith.mulf %1020, %1021 : vector<2x4xf32>
    %1023 = vector.broadcast %983 : vector<2x1xf32> to vector<2x4xf32>
    %1024 = vector.broadcast %801 : vector<1x4xf32> to vector<2x4xf32>
    %1025 = arith.mulf %1023, %1024 : vector<2x4xf32>
    %1026 = vector.broadcast %984 : vector<2x1xf32> to vector<2x4xf32>
    %1027 = vector.broadcast %802 : vector<1x4xf32> to vector<2x4xf32>
    %1028 = arith.mulf %1026, %1027 : vector<2x4xf32>
    %1029 = arith.addf %816, %1019 : vector<2x4xf32>
    %1030 = arith.addf %1022, %1025 : vector<2x4xf32>
    %1031 = arith.addf %1029, %1030 : vector<2x4xf32>
    %1032 = arith.addf %1031, %1028 : vector<2x4xf32>
    %1033 = vector.broadcast %981 : vector<2x1xf32> to vector<2x4xf32>
    %1034 = vector.broadcast %803 : vector<1x4xf32> to vector<2x4xf32>
    %1035 = arith.mulf %1033, %1034 : vector<2x4xf32>
    %1036 = vector.broadcast %982 : vector<2x1xf32> to vector<2x4xf32>
    %1037 = vector.broadcast %804 : vector<1x4xf32> to vector<2x4xf32>
    %1038 = arith.mulf %1036, %1037 : vector<2x4xf32>
    %1039 = vector.broadcast %983 : vector<2x1xf32> to vector<2x4xf32>
    %1040 = vector.broadcast %805 : vector<1x4xf32> to vector<2x4xf32>
    %1041 = arith.mulf %1039, %1040 : vector<2x4xf32>
    %1042 = vector.broadcast %984 : vector<2x1xf32> to vector<2x4xf32>
    %1043 = vector.broadcast %806 : vector<1x4xf32> to vector<2x4xf32>
    %1044 = arith.mulf %1042, %1043 : vector<2x4xf32>
    %1045 = arith.addf %819, %1035 : vector<2x4xf32>
    %1046 = arith.addf %1038, %1041 : vector<2x4xf32>
    %1047 = arith.addf %1045, %1046 : vector<2x4xf32>
    %1048 = arith.addf %1047, %1044 : vector<2x4xf32>
    %1049 = vector.extract_strided_slice %978 {offsets = [0, 0], sizes = [2, 1], strides = [1, 1]} : vector<2x4xf32> to vector<2x1xf32>
    %1050 = vector.extract_strided_slice %978 {offsets = [0, 1], sizes = [2, 1], strides = [1, 1]} : vector<2x4xf32> to vector<2x1xf32>
    %1051 = vector.extract_strided_slice %978 {offsets = [0, 2], sizes = [2, 1], strides = [1, 1]} : vector<2x4xf32> to vector<2x1xf32>
    %1052 = vector.extract_strided_slice %978 {offsets = [0, 3], sizes = [2, 1], strides = [1, 1]} : vector<2x4xf32> to vector<2x1xf32>
    %1053 = vector.broadcast %1049 : vector<2x1xf32> to vector<2x4xf32>
    %1054 = vector.broadcast %774 : vector<1x4xf32> to vector<2x4xf32>
    %1055 = arith.mulf %1053, %1054 : vector<2x4xf32>
    %1056 = vector.broadcast %1050 : vector<2x1xf32> to vector<2x4xf32>
    %1057 = vector.broadcast %775 : vector<1x4xf32> to vector<2x4xf32>
    %1058 = arith.mulf %1056, %1057 : vector<2x4xf32>
    %1059 = vector.broadcast %1051 : vector<2x1xf32> to vector<2x4xf32>
    %1060 = vector.broadcast %776 : vector<1x4xf32> to vector<2x4xf32>
    %1061 = arith.mulf %1059, %1060 : vector<2x4xf32>
    %1062 = vector.broadcast %1052 : vector<2x1xf32> to vector<2x4xf32>
    %1063 = vector.broadcast %777 : vector<1x4xf32> to vector<2x4xf32>
    %1064 = arith.mulf %1062, %1063 : vector<2x4xf32>
    %1065 = arith.addf %1000, %1055 : vector<2x4xf32>
    %1066 = arith.addf %1058, %1061 : vector<2x4xf32>
    %1067 = arith.addf %1065, %1066 : vector<2x4xf32>
    %1068 = arith.addf %1067, %1064 : vector<2x4xf32>
    %1069 = vector.broadcast %1049 : vector<2x1xf32> to vector<2x4xf32>
    %1070 = vector.broadcast %778 : vector<1x4xf32> to vector<2x4xf32>
    %1071 = arith.mulf %1069, %1070 : vector<2x4xf32>
    %1072 = vector.broadcast %1050 : vector<2x1xf32> to vector<2x4xf32>
    %1073 = vector.broadcast %779 : vector<1x4xf32> to vector<2x4xf32>
    %1074 = arith.mulf %1072, %1073 : vector<2x4xf32>
    %1075 = vector.broadcast %1051 : vector<2x1xf32> to vector<2x4xf32>
    %1076 = vector.broadcast %780 : vector<1x4xf32> to vector<2x4xf32>
    %1077 = arith.mulf %1075, %1076 : vector<2x4xf32>
    %1078 = vector.broadcast %1052 : vector<2x1xf32> to vector<2x4xf32>
    %1079 = vector.broadcast %781 : vector<1x4xf32> to vector<2x4xf32>
    %1080 = arith.mulf %1078, %1079 : vector<2x4xf32>
    %1081 = arith.addf %1016, %1071 : vector<2x4xf32>
    %1082 = arith.addf %1074, %1077 : vector<2x4xf32>
    %1083 = arith.addf %1081, %1082 : vector<2x4xf32>
    %1084 = arith.addf %1083, %1080 : vector<2x4xf32>
    %1085 = vector.broadcast %1049 : vector<2x1xf32> to vector<2x4xf32>
    %1086 = vector.broadcast %782 : vector<1x4xf32> to vector<2x4xf32>
    %1087 = arith.mulf %1085, %1086 : vector<2x4xf32>
    %1088 = vector.broadcast %1050 : vector<2x1xf32> to vector<2x4xf32>
    %1089 = vector.broadcast %783 : vector<1x4xf32> to vector<2x4xf32>
    %1090 = arith.mulf %1088, %1089 : vector<2x4xf32>
    %1091 = vector.broadcast %1051 : vector<2x1xf32> to vector<2x4xf32>
    %1092 = vector.broadcast %784 : vector<1x4xf32> to vector<2x4xf32>
    %1093 = arith.mulf %1091, %1092 : vector<2x4xf32>
    %1094 = vector.broadcast %1052 : vector<2x1xf32> to vector<2x4xf32>
    %1095 = vector.broadcast %785 : vector<1x4xf32> to vector<2x4xf32>
    %1096 = arith.mulf %1094, %1095 : vector<2x4xf32>
    %1097 = arith.addf %1032, %1087 : vector<2x4xf32>
    %1098 = arith.addf %1090, %1093 : vector<2x4xf32>
    %1099 = arith.addf %1097, %1098 : vector<2x4xf32>
    %1100 = arith.addf %1099, %1096 : vector<2x4xf32>
    %1101 = vector.broadcast %1049 : vector<2x1xf32> to vector<2x4xf32>
    %1102 = vector.broadcast %786 : vector<1x4xf32> to vector<2x4xf32>
    %1103 = arith.mulf %1101, %1102 : vector<2x4xf32>
    %1104 = vector.broadcast %1050 : vector<2x1xf32> to vector<2x4xf32>
    %1105 = vector.broadcast %787 : vector<1x4xf32> to vector<2x4xf32>
    %1106 = arith.mulf %1104, %1105 : vector<2x4xf32>
    %1107 = vector.broadcast %1051 : vector<2x1xf32> to vector<2x4xf32>
    %1108 = vector.broadcast %788 : vector<1x4xf32> to vector<2x4xf32>
    %1109 = arith.mulf %1107, %1108 : vector<2x4xf32>
    %1110 = vector.broadcast %1052 : vector<2x1xf32> to vector<2x4xf32>
    %1111 = vector.broadcast %789 : vector<1x4xf32> to vector<2x4xf32>
    %1112 = arith.mulf %1110, %1111 : vector<2x4xf32>
    %1113 = arith.addf %1048, %1103 : vector<2x4xf32>
    %1114 = arith.addf %1106, %1109 : vector<2x4xf32>
    %1115 = arith.addf %1113, %1114 : vector<2x4xf32>
    %1116 = arith.addf %1115, %1112 : vector<2x4xf32>
    %1117 = arith.negf %1068 : vector<2x4xf32>
    %1118 = math.exp %1117 : vector<2x4xf32>
    %cst_44 = arith.constant 1.000000e+00 : f32
    %1119 = vector.broadcast %cst_44 : f32 to vector<2x4xf32>
    %1120 = arith.addf %1119, %1118 : vector<2x4xf32>
    %1121 = arith.divf %1119, %1120 : vector<2x4xf32>
    %1122 = arith.negf %1084 : vector<2x4xf32>
    %1123 = math.exp %1122 : vector<2x4xf32>
    %cst_45 = arith.constant 1.000000e+00 : f32
    %1124 = vector.broadcast %cst_45 : f32 to vector<2x4xf32>
    %1125 = arith.addf %1124, %1123 : vector<2x4xf32>
    %1126 = arith.divf %1124, %1125 : vector<2x4xf32>
    %1127 = math.tanh %1100 : vector<2x4xf32>
    %1128 = arith.negf %1116 : vector<2x4xf32>
    %1129 = math.exp %1128 : vector<2x4xf32>
    %cst_46 = arith.constant 1.000000e+00 : f32
    %1130 = vector.broadcast %cst_46 : f32 to vector<2x4xf32>
    %1131 = arith.addf %1130, %1129 : vector<2x4xf32>
    %1132 = arith.divf %1130, %1131 : vector<2x4xf32>
    %1133 = arith.mulf %1126, %976 : vector<2x4xf32>
    %1134 = arith.mulf %1121, %1127 : vector<2x4xf32>
    %1135 = arith.addf %1133, %1134 : vector<2x4xf32>
    %1136 = math.tanh %1135 : vector<2x4xf32>
    %1137 = arith.mulf %1132, %1136 : vector<2x4xf32>
    %cst_47 = arith.constant 0.000000e+00 : f32
    %1138 = vector.broadcast %cst_47 : f32 to vector<2x4xf32>
    %1139 = arith.maximumf %307, %1138 : vector<2x4xf32>
    %1140 = vector.extract_strided_slice %1139 {offsets = [0, 0], sizes = [2, 1], strides = [1, 1]} : vector<2x4xf32> to vector<2x1xf32>
    %1141 = vector.extract_strided_slice %1139 {offsets = [0, 1], sizes = [2, 1], strides = [1, 1]} : vector<2x4xf32> to vector<2x1xf32>
    %1142 = vector.extract_strided_slice %1139 {offsets = [0, 2], sizes = [2, 1], strides = [1, 1]} : vector<2x4xf32> to vector<2x1xf32>
    %1143 = vector.extract_strided_slice %1139 {offsets = [0, 3], sizes = [2, 1], strides = [1, 1]} : vector<2x4xf32> to vector<2x1xf32>
    %1144 = vector.broadcast %1140 : vector<2x1xf32> to vector<2x4xf32>
    %1145 = vector.broadcast %791 : vector<1x4xf32> to vector<2x4xf32>
    %1146 = arith.mulf %1144, %1145 : vector<2x4xf32>
    %1147 = vector.broadcast %1141 : vector<2x1xf32> to vector<2x4xf32>
    %1148 = vector.broadcast %792 : vector<1x4xf32> to vector<2x4xf32>
    %1149 = arith.mulf %1147, %1148 : vector<2x4xf32>
    %1150 = vector.broadcast %1142 : vector<2x1xf32> to vector<2x4xf32>
    %1151 = vector.broadcast %793 : vector<1x4xf32> to vector<2x4xf32>
    %1152 = arith.mulf %1150, %1151 : vector<2x4xf32>
    %1153 = vector.broadcast %1143 : vector<2x1xf32> to vector<2x4xf32>
    %1154 = vector.broadcast %794 : vector<1x4xf32> to vector<2x4xf32>
    %1155 = arith.mulf %1153, %1154 : vector<2x4xf32>
    %1156 = arith.addf %810, %1146 : vector<2x4xf32>
    %1157 = arith.addf %1149, %1152 : vector<2x4xf32>
    %1158 = arith.addf %1156, %1157 : vector<2x4xf32>
    %1159 = arith.addf %1158, %1155 : vector<2x4xf32>
    %1160 = vector.broadcast %1140 : vector<2x1xf32> to vector<2x4xf32>
    %1161 = vector.broadcast %795 : vector<1x4xf32> to vector<2x4xf32>
    %1162 = arith.mulf %1160, %1161 : vector<2x4xf32>
    %1163 = vector.broadcast %1141 : vector<2x1xf32> to vector<2x4xf32>
    %1164 = vector.broadcast %796 : vector<1x4xf32> to vector<2x4xf32>
    %1165 = arith.mulf %1163, %1164 : vector<2x4xf32>
    %1166 = vector.broadcast %1142 : vector<2x1xf32> to vector<2x4xf32>
    %1167 = vector.broadcast %797 : vector<1x4xf32> to vector<2x4xf32>
    %1168 = arith.mulf %1166, %1167 : vector<2x4xf32>
    %1169 = vector.broadcast %1143 : vector<2x1xf32> to vector<2x4xf32>
    %1170 = vector.broadcast %798 : vector<1x4xf32> to vector<2x4xf32>
    %1171 = arith.mulf %1169, %1170 : vector<2x4xf32>
    %1172 = arith.addf %813, %1162 : vector<2x4xf32>
    %1173 = arith.addf %1165, %1168 : vector<2x4xf32>
    %1174 = arith.addf %1172, %1173 : vector<2x4xf32>
    %1175 = arith.addf %1174, %1171 : vector<2x4xf32>
    %1176 = vector.broadcast %1140 : vector<2x1xf32> to vector<2x4xf32>
    %1177 = vector.broadcast %799 : vector<1x4xf32> to vector<2x4xf32>
    %1178 = arith.mulf %1176, %1177 : vector<2x4xf32>
    %1179 = vector.broadcast %1141 : vector<2x1xf32> to vector<2x4xf32>
    %1180 = vector.broadcast %800 : vector<1x4xf32> to vector<2x4xf32>
    %1181 = arith.mulf %1179, %1180 : vector<2x4xf32>
    %1182 = vector.broadcast %1142 : vector<2x1xf32> to vector<2x4xf32>
    %1183 = vector.broadcast %801 : vector<1x4xf32> to vector<2x4xf32>
    %1184 = arith.mulf %1182, %1183 : vector<2x4xf32>
    %1185 = vector.broadcast %1143 : vector<2x1xf32> to vector<2x4xf32>
    %1186 = vector.broadcast %802 : vector<1x4xf32> to vector<2x4xf32>
    %1187 = arith.mulf %1185, %1186 : vector<2x4xf32>
    %1188 = arith.addf %816, %1178 : vector<2x4xf32>
    %1189 = arith.addf %1181, %1184 : vector<2x4xf32>
    %1190 = arith.addf %1188, %1189 : vector<2x4xf32>
    %1191 = arith.addf %1190, %1187 : vector<2x4xf32>
    %1192 = vector.broadcast %1140 : vector<2x1xf32> to vector<2x4xf32>
    %1193 = vector.broadcast %803 : vector<1x4xf32> to vector<2x4xf32>
    %1194 = arith.mulf %1192, %1193 : vector<2x4xf32>
    %1195 = vector.broadcast %1141 : vector<2x1xf32> to vector<2x4xf32>
    %1196 = vector.broadcast %804 : vector<1x4xf32> to vector<2x4xf32>
    %1197 = arith.mulf %1195, %1196 : vector<2x4xf32>
    %1198 = vector.broadcast %1142 : vector<2x1xf32> to vector<2x4xf32>
    %1199 = vector.broadcast %805 : vector<1x4xf32> to vector<2x4xf32>
    %1200 = arith.mulf %1198, %1199 : vector<2x4xf32>
    %1201 = vector.broadcast %1143 : vector<2x1xf32> to vector<2x4xf32>
    %1202 = vector.broadcast %806 : vector<1x4xf32> to vector<2x4xf32>
    %1203 = arith.mulf %1201, %1202 : vector<2x4xf32>
    %1204 = arith.addf %819, %1194 : vector<2x4xf32>
    %1205 = arith.addf %1197, %1200 : vector<2x4xf32>
    %1206 = arith.addf %1204, %1205 : vector<2x4xf32>
    %1207 = arith.addf %1206, %1203 : vector<2x4xf32>
    %1208 = vector.extract_strided_slice %1137 {offsets = [0, 0], sizes = [2, 1], strides = [1, 1]} : vector<2x4xf32> to vector<2x1xf32>
    %1209 = vector.extract_strided_slice %1137 {offsets = [0, 1], sizes = [2, 1], strides = [1, 1]} : vector<2x4xf32> to vector<2x1xf32>
    %1210 = vector.extract_strided_slice %1137 {offsets = [0, 2], sizes = [2, 1], strides = [1, 1]} : vector<2x4xf32> to vector<2x1xf32>
    %1211 = vector.extract_strided_slice %1137 {offsets = [0, 3], sizes = [2, 1], strides = [1, 1]} : vector<2x4xf32> to vector<2x1xf32>
    %1212 = vector.broadcast %1208 : vector<2x1xf32> to vector<2x4xf32>
    %1213 = vector.broadcast %774 : vector<1x4xf32> to vector<2x4xf32>
    %1214 = arith.mulf %1212, %1213 : vector<2x4xf32>
    %1215 = vector.broadcast %1209 : vector<2x1xf32> to vector<2x4xf32>
    %1216 = vector.broadcast %775 : vector<1x4xf32> to vector<2x4xf32>
    %1217 = arith.mulf %1215, %1216 : vector<2x4xf32>
    %1218 = vector.broadcast %1210 : vector<2x1xf32> to vector<2x4xf32>
    %1219 = vector.broadcast %776 : vector<1x4xf32> to vector<2x4xf32>
    %1220 = arith.mulf %1218, %1219 : vector<2x4xf32>
    %1221 = vector.broadcast %1211 : vector<2x1xf32> to vector<2x4xf32>
    %1222 = vector.broadcast %777 : vector<1x4xf32> to vector<2x4xf32>
    %1223 = arith.mulf %1221, %1222 : vector<2x4xf32>
    %1224 = arith.addf %1159, %1214 : vector<2x4xf32>
    %1225 = arith.addf %1217, %1220 : vector<2x4xf32>
    %1226 = arith.addf %1224, %1225 : vector<2x4xf32>
    %1227 = arith.addf %1226, %1223 : vector<2x4xf32>
    %1228 = vector.broadcast %1208 : vector<2x1xf32> to vector<2x4xf32>
    %1229 = vector.broadcast %778 : vector<1x4xf32> to vector<2x4xf32>
    %1230 = arith.mulf %1228, %1229 : vector<2x4xf32>
    %1231 = vector.broadcast %1209 : vector<2x1xf32> to vector<2x4xf32>
    %1232 = vector.broadcast %779 : vector<1x4xf32> to vector<2x4xf32>
    %1233 = arith.mulf %1231, %1232 : vector<2x4xf32>
    %1234 = vector.broadcast %1210 : vector<2x1xf32> to vector<2x4xf32>
    %1235 = vector.broadcast %780 : vector<1x4xf32> to vector<2x4xf32>
    %1236 = arith.mulf %1234, %1235 : vector<2x4xf32>
    %1237 = vector.broadcast %1211 : vector<2x1xf32> to vector<2x4xf32>
    %1238 = vector.broadcast %781 : vector<1x4xf32> to vector<2x4xf32>
    %1239 = arith.mulf %1237, %1238 : vector<2x4xf32>
    %1240 = arith.addf %1175, %1230 : vector<2x4xf32>
    %1241 = arith.addf %1233, %1236 : vector<2x4xf32>
    %1242 = arith.addf %1240, %1241 : vector<2x4xf32>
    %1243 = arith.addf %1242, %1239 : vector<2x4xf32>
    %1244 = vector.broadcast %1208 : vector<2x1xf32> to vector<2x4xf32>
    %1245 = vector.broadcast %782 : vector<1x4xf32> to vector<2x4xf32>
    %1246 = arith.mulf %1244, %1245 : vector<2x4xf32>
    %1247 = vector.broadcast %1209 : vector<2x1xf32> to vector<2x4xf32>
    %1248 = vector.broadcast %783 : vector<1x4xf32> to vector<2x4xf32>
    %1249 = arith.mulf %1247, %1248 : vector<2x4xf32>
    %1250 = vector.broadcast %1210 : vector<2x1xf32> to vector<2x4xf32>
    %1251 = vector.broadcast %784 : vector<1x4xf32> to vector<2x4xf32>
    %1252 = arith.mulf %1250, %1251 : vector<2x4xf32>
    %1253 = vector.broadcast %1211 : vector<2x1xf32> to vector<2x4xf32>
    %1254 = vector.broadcast %785 : vector<1x4xf32> to vector<2x4xf32>
    %1255 = arith.mulf %1253, %1254 : vector<2x4xf32>
    %1256 = arith.addf %1191, %1246 : vector<2x4xf32>
    %1257 = arith.addf %1249, %1252 : vector<2x4xf32>
    %1258 = arith.addf %1256, %1257 : vector<2x4xf32>
    %1259 = arith.addf %1258, %1255 : vector<2x4xf32>
    %1260 = vector.broadcast %1208 : vector<2x1xf32> to vector<2x4xf32>
    %1261 = vector.broadcast %786 : vector<1x4xf32> to vector<2x4xf32>
    %1262 = arith.mulf %1260, %1261 : vector<2x4xf32>
    %1263 = vector.broadcast %1209 : vector<2x1xf32> to vector<2x4xf32>
    %1264 = vector.broadcast %787 : vector<1x4xf32> to vector<2x4xf32>
    %1265 = arith.mulf %1263, %1264 : vector<2x4xf32>
    %1266 = vector.broadcast %1210 : vector<2x1xf32> to vector<2x4xf32>
    %1267 = vector.broadcast %788 : vector<1x4xf32> to vector<2x4xf32>
    %1268 = arith.mulf %1266, %1267 : vector<2x4xf32>
    %1269 = vector.broadcast %1211 : vector<2x1xf32> to vector<2x4xf32>
    %1270 = vector.broadcast %789 : vector<1x4xf32> to vector<2x4xf32>
    %1271 = arith.mulf %1269, %1270 : vector<2x4xf32>
    %1272 = arith.addf %1207, %1262 : vector<2x4xf32>
    %1273 = arith.addf %1265, %1268 : vector<2x4xf32>
    %1274 = arith.addf %1272, %1273 : vector<2x4xf32>
    %1275 = arith.addf %1274, %1271 : vector<2x4xf32>
    %1276 = arith.negf %1227 : vector<2x4xf32>
    %1277 = math.exp %1276 : vector<2x4xf32>
    %cst_48 = arith.constant 1.000000e+00 : f32
    %1278 = vector.broadcast %cst_48 : f32 to vector<2x4xf32>
    %1279 = arith.addf %1278, %1277 : vector<2x4xf32>
    %1280 = arith.divf %1278, %1279 : vector<2x4xf32>
    %1281 = arith.negf %1243 : vector<2x4xf32>
    %1282 = math.exp %1281 : vector<2x4xf32>
    %cst_49 = arith.constant 1.000000e+00 : f32
    %1283 = vector.broadcast %cst_49 : f32 to vector<2x4xf32>
    %1284 = arith.addf %1283, %1282 : vector<2x4xf32>
    %1285 = arith.divf %1283, %1284 : vector<2x4xf32>
    %1286 = math.tanh %1259 : vector<2x4xf32>
    %1287 = arith.negf %1275 : vector<2x4xf32>
    %1288 = math.exp %1287 : vector<2x4xf32>
    %cst_50 = arith.constant 1.000000e+00 : f32
    %1289 = vector.broadcast %cst_50 : f32 to vector<2x4xf32>
    %1290 = arith.addf %1289, %1288 : vector<2x4xf32>
    %1291 = arith.divf %1289, %1290 : vector<2x4xf32>
    %1292 = arith.mulf %1285, %1135 : vector<2x4xf32>
    %1293 = arith.mulf %1280, %1286 : vector<2x4xf32>
    %1294 = arith.addf %1292, %1293 : vector<2x4xf32>
    %1295 = math.tanh %1294 : vector<2x4xf32>
    %1296 = arith.mulf %1291, %1295 : vector<2x4xf32>
    %cst_51 = arith.constant 0.000000e+00 : f32
    %1297 = vector.broadcast %cst_51 : f32 to vector<2x4xf32>
    %1298 = arith.maximumf %400, %1297 : vector<2x4xf32>
    %1299 = vector.extract_strided_slice %1298 {offsets = [0, 0], sizes = [2, 1], strides = [1, 1]} : vector<2x4xf32> to vector<2x1xf32>
    %1300 = vector.extract_strided_slice %1298 {offsets = [0, 1], sizes = [2, 1], strides = [1, 1]} : vector<2x4xf32> to vector<2x1xf32>
    %1301 = vector.extract_strided_slice %1298 {offsets = [0, 2], sizes = [2, 1], strides = [1, 1]} : vector<2x4xf32> to vector<2x1xf32>
    %1302 = vector.extract_strided_slice %1298 {offsets = [0, 3], sizes = [2, 1], strides = [1, 1]} : vector<2x4xf32> to vector<2x1xf32>
    %1303 = vector.broadcast %1299 : vector<2x1xf32> to vector<2x4xf32>
    %1304 = vector.broadcast %791 : vector<1x4xf32> to vector<2x4xf32>
    %1305 = arith.mulf %1303, %1304 : vector<2x4xf32>
    %1306 = vector.broadcast %1300 : vector<2x1xf32> to vector<2x4xf32>
    %1307 = vector.broadcast %792 : vector<1x4xf32> to vector<2x4xf32>
    %1308 = arith.mulf %1306, %1307 : vector<2x4xf32>
    %1309 = vector.broadcast %1301 : vector<2x1xf32> to vector<2x4xf32>
    %1310 = vector.broadcast %793 : vector<1x4xf32> to vector<2x4xf32>
    %1311 = arith.mulf %1309, %1310 : vector<2x4xf32>
    %1312 = vector.broadcast %1302 : vector<2x1xf32> to vector<2x4xf32>
    %1313 = vector.broadcast %794 : vector<1x4xf32> to vector<2x4xf32>
    %1314 = arith.mulf %1312, %1313 : vector<2x4xf32>
    %1315 = arith.addf %810, %1305 : vector<2x4xf32>
    %1316 = arith.addf %1308, %1311 : vector<2x4xf32>
    %1317 = arith.addf %1315, %1316 : vector<2x4xf32>
    %1318 = arith.addf %1317, %1314 : vector<2x4xf32>
    %1319 = vector.broadcast %1299 : vector<2x1xf32> to vector<2x4xf32>
    %1320 = vector.broadcast %795 : vector<1x4xf32> to vector<2x4xf32>
    %1321 = arith.mulf %1319, %1320 : vector<2x4xf32>
    %1322 = vector.broadcast %1300 : vector<2x1xf32> to vector<2x4xf32>
    %1323 = vector.broadcast %796 : vector<1x4xf32> to vector<2x4xf32>
    %1324 = arith.mulf %1322, %1323 : vector<2x4xf32>
    %1325 = vector.broadcast %1301 : vector<2x1xf32> to vector<2x4xf32>
    %1326 = vector.broadcast %797 : vector<1x4xf32> to vector<2x4xf32>
    %1327 = arith.mulf %1325, %1326 : vector<2x4xf32>
    %1328 = vector.broadcast %1302 : vector<2x1xf32> to vector<2x4xf32>
    %1329 = vector.broadcast %798 : vector<1x4xf32> to vector<2x4xf32>
    %1330 = arith.mulf %1328, %1329 : vector<2x4xf32>
    %1331 = arith.addf %813, %1321 : vector<2x4xf32>
    %1332 = arith.addf %1324, %1327 : vector<2x4xf32>
    %1333 = arith.addf %1331, %1332 : vector<2x4xf32>
    %1334 = arith.addf %1333, %1330 : vector<2x4xf32>
    %1335 = vector.broadcast %1299 : vector<2x1xf32> to vector<2x4xf32>
    %1336 = vector.broadcast %799 : vector<1x4xf32> to vector<2x4xf32>
    %1337 = arith.mulf %1335, %1336 : vector<2x4xf32>
    %1338 = vector.broadcast %1300 : vector<2x1xf32> to vector<2x4xf32>
    %1339 = vector.broadcast %800 : vector<1x4xf32> to vector<2x4xf32>
    %1340 = arith.mulf %1338, %1339 : vector<2x4xf32>
    %1341 = vector.broadcast %1301 : vector<2x1xf32> to vector<2x4xf32>
    %1342 = vector.broadcast %801 : vector<1x4xf32> to vector<2x4xf32>
    %1343 = arith.mulf %1341, %1342 : vector<2x4xf32>
    %1344 = vector.broadcast %1302 : vector<2x1xf32> to vector<2x4xf32>
    %1345 = vector.broadcast %802 : vector<1x4xf32> to vector<2x4xf32>
    %1346 = arith.mulf %1344, %1345 : vector<2x4xf32>
    %1347 = arith.addf %816, %1337 : vector<2x4xf32>
    %1348 = arith.addf %1340, %1343 : vector<2x4xf32>
    %1349 = arith.addf %1347, %1348 : vector<2x4xf32>
    %1350 = arith.addf %1349, %1346 : vector<2x4xf32>
    %1351 = vector.broadcast %1299 : vector<2x1xf32> to vector<2x4xf32>
    %1352 = vector.broadcast %803 : vector<1x4xf32> to vector<2x4xf32>
    %1353 = arith.mulf %1351, %1352 : vector<2x4xf32>
    %1354 = vector.broadcast %1300 : vector<2x1xf32> to vector<2x4xf32>
    %1355 = vector.broadcast %804 : vector<1x4xf32> to vector<2x4xf32>
    %1356 = arith.mulf %1354, %1355 : vector<2x4xf32>
    %1357 = vector.broadcast %1301 : vector<2x1xf32> to vector<2x4xf32>
    %1358 = vector.broadcast %805 : vector<1x4xf32> to vector<2x4xf32>
    %1359 = arith.mulf %1357, %1358 : vector<2x4xf32>
    %1360 = vector.broadcast %1302 : vector<2x1xf32> to vector<2x4xf32>
    %1361 = vector.broadcast %806 : vector<1x4xf32> to vector<2x4xf32>
    %1362 = arith.mulf %1360, %1361 : vector<2x4xf32>
    %1363 = arith.addf %819, %1353 : vector<2x4xf32>
    %1364 = arith.addf %1356, %1359 : vector<2x4xf32>
    %1365 = arith.addf %1363, %1364 : vector<2x4xf32>
    %1366 = arith.addf %1365, %1362 : vector<2x4xf32>
    %1367 = vector.extract_strided_slice %1296 {offsets = [0, 0], sizes = [2, 1], strides = [1, 1]} : vector<2x4xf32> to vector<2x1xf32>
    %1368 = vector.extract_strided_slice %1296 {offsets = [0, 1], sizes = [2, 1], strides = [1, 1]} : vector<2x4xf32> to vector<2x1xf32>
    %1369 = vector.extract_strided_slice %1296 {offsets = [0, 2], sizes = [2, 1], strides = [1, 1]} : vector<2x4xf32> to vector<2x1xf32>
    %1370 = vector.extract_strided_slice %1296 {offsets = [0, 3], sizes = [2, 1], strides = [1, 1]} : vector<2x4xf32> to vector<2x1xf32>
    %1371 = vector.broadcast %1367 : vector<2x1xf32> to vector<2x4xf32>
    %1372 = vector.broadcast %774 : vector<1x4xf32> to vector<2x4xf32>
    %1373 = arith.mulf %1371, %1372 : vector<2x4xf32>
    %1374 = vector.broadcast %1368 : vector<2x1xf32> to vector<2x4xf32>
    %1375 = vector.broadcast %775 : vector<1x4xf32> to vector<2x4xf32>
    %1376 = arith.mulf %1374, %1375 : vector<2x4xf32>
    %1377 = vector.broadcast %1369 : vector<2x1xf32> to vector<2x4xf32>
    %1378 = vector.broadcast %776 : vector<1x4xf32> to vector<2x4xf32>
    %1379 = arith.mulf %1377, %1378 : vector<2x4xf32>
    %1380 = vector.broadcast %1370 : vector<2x1xf32> to vector<2x4xf32>
    %1381 = vector.broadcast %777 : vector<1x4xf32> to vector<2x4xf32>
    %1382 = arith.mulf %1380, %1381 : vector<2x4xf32>
    %1383 = arith.addf %1318, %1373 : vector<2x4xf32>
    %1384 = arith.addf %1376, %1379 : vector<2x4xf32>
    %1385 = arith.addf %1383, %1384 : vector<2x4xf32>
    %1386 = arith.addf %1385, %1382 : vector<2x4xf32>
    %1387 = vector.broadcast %1367 : vector<2x1xf32> to vector<2x4xf32>
    %1388 = vector.broadcast %778 : vector<1x4xf32> to vector<2x4xf32>
    %1389 = arith.mulf %1387, %1388 : vector<2x4xf32>
    %1390 = vector.broadcast %1368 : vector<2x1xf32> to vector<2x4xf32>
    %1391 = vector.broadcast %779 : vector<1x4xf32> to vector<2x4xf32>
    %1392 = arith.mulf %1390, %1391 : vector<2x4xf32>
    %1393 = vector.broadcast %1369 : vector<2x1xf32> to vector<2x4xf32>
    %1394 = vector.broadcast %780 : vector<1x4xf32> to vector<2x4xf32>
    %1395 = arith.mulf %1393, %1394 : vector<2x4xf32>
    %1396 = vector.broadcast %1370 : vector<2x1xf32> to vector<2x4xf32>
    %1397 = vector.broadcast %781 : vector<1x4xf32> to vector<2x4xf32>
    %1398 = arith.mulf %1396, %1397 : vector<2x4xf32>
    %1399 = arith.addf %1334, %1389 : vector<2x4xf32>
    %1400 = arith.addf %1392, %1395 : vector<2x4xf32>
    %1401 = arith.addf %1399, %1400 : vector<2x4xf32>
    %1402 = arith.addf %1401, %1398 : vector<2x4xf32>
    %1403 = vector.broadcast %1367 : vector<2x1xf32> to vector<2x4xf32>
    %1404 = vector.broadcast %782 : vector<1x4xf32> to vector<2x4xf32>
    %1405 = arith.mulf %1403, %1404 : vector<2x4xf32>
    %1406 = vector.broadcast %1368 : vector<2x1xf32> to vector<2x4xf32>
    %1407 = vector.broadcast %783 : vector<1x4xf32> to vector<2x4xf32>
    %1408 = arith.mulf %1406, %1407 : vector<2x4xf32>
    %1409 = vector.broadcast %1369 : vector<2x1xf32> to vector<2x4xf32>
    %1410 = vector.broadcast %784 : vector<1x4xf32> to vector<2x4xf32>
    %1411 = arith.mulf %1409, %1410 : vector<2x4xf32>
    %1412 = vector.broadcast %1370 : vector<2x1xf32> to vector<2x4xf32>
    %1413 = vector.broadcast %785 : vector<1x4xf32> to vector<2x4xf32>
    %1414 = arith.mulf %1412, %1413 : vector<2x4xf32>
    %1415 = arith.addf %1350, %1405 : vector<2x4xf32>
    %1416 = arith.addf %1408, %1411 : vector<2x4xf32>
    %1417 = arith.addf %1415, %1416 : vector<2x4xf32>
    %1418 = arith.addf %1417, %1414 : vector<2x4xf32>
    %1419 = vector.broadcast %1367 : vector<2x1xf32> to vector<2x4xf32>
    %1420 = vector.broadcast %786 : vector<1x4xf32> to vector<2x4xf32>
    %1421 = arith.mulf %1419, %1420 : vector<2x4xf32>
    %1422 = vector.broadcast %1368 : vector<2x1xf32> to vector<2x4xf32>
    %1423 = vector.broadcast %787 : vector<1x4xf32> to vector<2x4xf32>
    %1424 = arith.mulf %1422, %1423 : vector<2x4xf32>
    %1425 = vector.broadcast %1369 : vector<2x1xf32> to vector<2x4xf32>
    %1426 = vector.broadcast %788 : vector<1x4xf32> to vector<2x4xf32>
    %1427 = arith.mulf %1425, %1426 : vector<2x4xf32>
    %1428 = vector.broadcast %1370 : vector<2x1xf32> to vector<2x4xf32>
    %1429 = vector.broadcast %789 : vector<1x4xf32> to vector<2x4xf32>
    %1430 = arith.mulf %1428, %1429 : vector<2x4xf32>
    %1431 = arith.addf %1366, %1421 : vector<2x4xf32>
    %1432 = arith.addf %1424, %1427 : vector<2x4xf32>
    %1433 = arith.addf %1431, %1432 : vector<2x4xf32>
    %1434 = arith.addf %1433, %1430 : vector<2x4xf32>
    %1435 = arith.negf %1386 : vector<2x4xf32>
    %1436 = math.exp %1435 : vector<2x4xf32>
    %cst_52 = arith.constant 1.000000e+00 : f32
    %1437 = vector.broadcast %cst_52 : f32 to vector<2x4xf32>
    %1438 = arith.addf %1437, %1436 : vector<2x4xf32>
    %1439 = arith.divf %1437, %1438 : vector<2x4xf32>
    %1440 = arith.negf %1402 : vector<2x4xf32>
    %1441 = math.exp %1440 : vector<2x4xf32>
    %cst_53 = arith.constant 1.000000e+00 : f32
    %1442 = vector.broadcast %cst_53 : f32 to vector<2x4xf32>
    %1443 = arith.addf %1442, %1441 : vector<2x4xf32>
    %1444 = arith.divf %1442, %1443 : vector<2x4xf32>
    %1445 = math.tanh %1418 : vector<2x4xf32>
    %1446 = arith.negf %1434 : vector<2x4xf32>
    %1447 = math.exp %1446 : vector<2x4xf32>
    %cst_54 = arith.constant 1.000000e+00 : f32
    %1448 = vector.broadcast %cst_54 : f32 to vector<2x4xf32>
    %1449 = arith.addf %1448, %1447 : vector<2x4xf32>
    %1450 = arith.divf %1448, %1449 : vector<2x4xf32>
    %1451 = arith.mulf %1444, %1294 : vector<2x4xf32>
    %1452 = arith.mulf %1439, %1445 : vector<2x4xf32>
    %1453 = arith.addf %1451, %1452 : vector<2x4xf32>
    %1454 = math.tanh %1453 : vector<2x4xf32>
    %1455 = arith.mulf %1450, %1454 : vector<2x4xf32>
    %cst_55 = arith.constant 0.000000e+00 : f32
    %1456 = vector.broadcast %cst_55 : f32 to vector<2x4xf32>
    %1457 = arith.maximumf %493, %1456 : vector<2x4xf32>
    %1458 = vector.extract_strided_slice %1457 {offsets = [0, 0], sizes = [2, 1], strides = [1, 1]} : vector<2x4xf32> to vector<2x1xf32>
    %1459 = vector.extract_strided_slice %1457 {offsets = [0, 1], sizes = [2, 1], strides = [1, 1]} : vector<2x4xf32> to vector<2x1xf32>
    %1460 = vector.extract_strided_slice %1457 {offsets = [0, 2], sizes = [2, 1], strides = [1, 1]} : vector<2x4xf32> to vector<2x1xf32>
    %1461 = vector.extract_strided_slice %1457 {offsets = [0, 3], sizes = [2, 1], strides = [1, 1]} : vector<2x4xf32> to vector<2x1xf32>
    %1462 = vector.broadcast %1458 : vector<2x1xf32> to vector<2x4xf32>
    %1463 = vector.broadcast %791 : vector<1x4xf32> to vector<2x4xf32>
    %1464 = arith.mulf %1462, %1463 : vector<2x4xf32>
    %1465 = vector.broadcast %1459 : vector<2x1xf32> to vector<2x4xf32>
    %1466 = vector.broadcast %792 : vector<1x4xf32> to vector<2x4xf32>
    %1467 = arith.mulf %1465, %1466 : vector<2x4xf32>
    %1468 = vector.broadcast %1460 : vector<2x1xf32> to vector<2x4xf32>
    %1469 = vector.broadcast %793 : vector<1x4xf32> to vector<2x4xf32>
    %1470 = arith.mulf %1468, %1469 : vector<2x4xf32>
    %1471 = vector.broadcast %1461 : vector<2x1xf32> to vector<2x4xf32>
    %1472 = vector.broadcast %794 : vector<1x4xf32> to vector<2x4xf32>
    %1473 = arith.mulf %1471, %1472 : vector<2x4xf32>
    %1474 = arith.addf %810, %1464 : vector<2x4xf32>
    %1475 = arith.addf %1467, %1470 : vector<2x4xf32>
    %1476 = arith.addf %1474, %1475 : vector<2x4xf32>
    %1477 = arith.addf %1476, %1473 : vector<2x4xf32>
    %1478 = vector.broadcast %1458 : vector<2x1xf32> to vector<2x4xf32>
    %1479 = vector.broadcast %795 : vector<1x4xf32> to vector<2x4xf32>
    %1480 = arith.mulf %1478, %1479 : vector<2x4xf32>
    %1481 = vector.broadcast %1459 : vector<2x1xf32> to vector<2x4xf32>
    %1482 = vector.broadcast %796 : vector<1x4xf32> to vector<2x4xf32>
    %1483 = arith.mulf %1481, %1482 : vector<2x4xf32>
    %1484 = vector.broadcast %1460 : vector<2x1xf32> to vector<2x4xf32>
    %1485 = vector.broadcast %797 : vector<1x4xf32> to vector<2x4xf32>
    %1486 = arith.mulf %1484, %1485 : vector<2x4xf32>
    %1487 = vector.broadcast %1461 : vector<2x1xf32> to vector<2x4xf32>
    %1488 = vector.broadcast %798 : vector<1x4xf32> to vector<2x4xf32>
    %1489 = arith.mulf %1487, %1488 : vector<2x4xf32>
    %1490 = arith.addf %813, %1480 : vector<2x4xf32>
    %1491 = arith.addf %1483, %1486 : vector<2x4xf32>
    %1492 = arith.addf %1490, %1491 : vector<2x4xf32>
    %1493 = arith.addf %1492, %1489 : vector<2x4xf32>
    %1494 = vector.broadcast %1458 : vector<2x1xf32> to vector<2x4xf32>
    %1495 = vector.broadcast %799 : vector<1x4xf32> to vector<2x4xf32>
    %1496 = arith.mulf %1494, %1495 : vector<2x4xf32>
    %1497 = vector.broadcast %1459 : vector<2x1xf32> to vector<2x4xf32>
    %1498 = vector.broadcast %800 : vector<1x4xf32> to vector<2x4xf32>
    %1499 = arith.mulf %1497, %1498 : vector<2x4xf32>
    %1500 = vector.broadcast %1460 : vector<2x1xf32> to vector<2x4xf32>
    %1501 = vector.broadcast %801 : vector<1x4xf32> to vector<2x4xf32>
    %1502 = arith.mulf %1500, %1501 : vector<2x4xf32>
    %1503 = vector.broadcast %1461 : vector<2x1xf32> to vector<2x4xf32>
    %1504 = vector.broadcast %802 : vector<1x4xf32> to vector<2x4xf32>
    %1505 = arith.mulf %1503, %1504 : vector<2x4xf32>
    %1506 = arith.addf %816, %1496 : vector<2x4xf32>
    %1507 = arith.addf %1499, %1502 : vector<2x4xf32>
    %1508 = arith.addf %1506, %1507 : vector<2x4xf32>
    %1509 = arith.addf %1508, %1505 : vector<2x4xf32>
    %1510 = vector.broadcast %1458 : vector<2x1xf32> to vector<2x4xf32>
    %1511 = vector.broadcast %803 : vector<1x4xf32> to vector<2x4xf32>
    %1512 = arith.mulf %1510, %1511 : vector<2x4xf32>
    %1513 = vector.broadcast %1459 : vector<2x1xf32> to vector<2x4xf32>
    %1514 = vector.broadcast %804 : vector<1x4xf32> to vector<2x4xf32>
    %1515 = arith.mulf %1513, %1514 : vector<2x4xf32>
    %1516 = vector.broadcast %1460 : vector<2x1xf32> to vector<2x4xf32>
    %1517 = vector.broadcast %805 : vector<1x4xf32> to vector<2x4xf32>
    %1518 = arith.mulf %1516, %1517 : vector<2x4xf32>
    %1519 = vector.broadcast %1461 : vector<2x1xf32> to vector<2x4xf32>
    %1520 = vector.broadcast %806 : vector<1x4xf32> to vector<2x4xf32>
    %1521 = arith.mulf %1519, %1520 : vector<2x4xf32>
    %1522 = arith.addf %819, %1512 : vector<2x4xf32>
    %1523 = arith.addf %1515, %1518 : vector<2x4xf32>
    %1524 = arith.addf %1522, %1523 : vector<2x4xf32>
    %1525 = arith.addf %1524, %1521 : vector<2x4xf32>
    %1526 = vector.extract_strided_slice %1455 {offsets = [0, 0], sizes = [2, 1], strides = [1, 1]} : vector<2x4xf32> to vector<2x1xf32>
    %1527 = vector.extract_strided_slice %1455 {offsets = [0, 1], sizes = [2, 1], strides = [1, 1]} : vector<2x4xf32> to vector<2x1xf32>
    %1528 = vector.extract_strided_slice %1455 {offsets = [0, 2], sizes = [2, 1], strides = [1, 1]} : vector<2x4xf32> to vector<2x1xf32>
    %1529 = vector.extract_strided_slice %1455 {offsets = [0, 3], sizes = [2, 1], strides = [1, 1]} : vector<2x4xf32> to vector<2x1xf32>
    %1530 = vector.broadcast %1526 : vector<2x1xf32> to vector<2x4xf32>
    %1531 = vector.broadcast %774 : vector<1x4xf32> to vector<2x4xf32>
    %1532 = arith.mulf %1530, %1531 : vector<2x4xf32>
    %1533 = vector.broadcast %1527 : vector<2x1xf32> to vector<2x4xf32>
    %1534 = vector.broadcast %775 : vector<1x4xf32> to vector<2x4xf32>
    %1535 = arith.mulf %1533, %1534 : vector<2x4xf32>
    %1536 = vector.broadcast %1528 : vector<2x1xf32> to vector<2x4xf32>
    %1537 = vector.broadcast %776 : vector<1x4xf32> to vector<2x4xf32>
    %1538 = arith.mulf %1536, %1537 : vector<2x4xf32>
    %1539 = vector.broadcast %1529 : vector<2x1xf32> to vector<2x4xf32>
    %1540 = vector.broadcast %777 : vector<1x4xf32> to vector<2x4xf32>
    %1541 = arith.mulf %1539, %1540 : vector<2x4xf32>
    %1542 = arith.addf %1477, %1532 : vector<2x4xf32>
    %1543 = arith.addf %1535, %1538 : vector<2x4xf32>
    %1544 = arith.addf %1542, %1543 : vector<2x4xf32>
    %1545 = arith.addf %1544, %1541 : vector<2x4xf32>
    %1546 = vector.broadcast %1526 : vector<2x1xf32> to vector<2x4xf32>
    %1547 = vector.broadcast %778 : vector<1x4xf32> to vector<2x4xf32>
    %1548 = arith.mulf %1546, %1547 : vector<2x4xf32>
    %1549 = vector.broadcast %1527 : vector<2x1xf32> to vector<2x4xf32>
    %1550 = vector.broadcast %779 : vector<1x4xf32> to vector<2x4xf32>
    %1551 = arith.mulf %1549, %1550 : vector<2x4xf32>
    %1552 = vector.broadcast %1528 : vector<2x1xf32> to vector<2x4xf32>
    %1553 = vector.broadcast %780 : vector<1x4xf32> to vector<2x4xf32>
    %1554 = arith.mulf %1552, %1553 : vector<2x4xf32>
    %1555 = vector.broadcast %1529 : vector<2x1xf32> to vector<2x4xf32>
    %1556 = vector.broadcast %781 : vector<1x4xf32> to vector<2x4xf32>
    %1557 = arith.mulf %1555, %1556 : vector<2x4xf32>
    %1558 = arith.addf %1493, %1548 : vector<2x4xf32>
    %1559 = arith.addf %1551, %1554 : vector<2x4xf32>
    %1560 = arith.addf %1558, %1559 : vector<2x4xf32>
    %1561 = arith.addf %1560, %1557 : vector<2x4xf32>
    %1562 = vector.broadcast %1526 : vector<2x1xf32> to vector<2x4xf32>
    %1563 = vector.broadcast %782 : vector<1x4xf32> to vector<2x4xf32>
    %1564 = arith.mulf %1562, %1563 : vector<2x4xf32>
    %1565 = vector.broadcast %1527 : vector<2x1xf32> to vector<2x4xf32>
    %1566 = vector.broadcast %783 : vector<1x4xf32> to vector<2x4xf32>
    %1567 = arith.mulf %1565, %1566 : vector<2x4xf32>
    %1568 = vector.broadcast %1528 : vector<2x1xf32> to vector<2x4xf32>
    %1569 = vector.broadcast %784 : vector<1x4xf32> to vector<2x4xf32>
    %1570 = arith.mulf %1568, %1569 : vector<2x4xf32>
    %1571 = vector.broadcast %1529 : vector<2x1xf32> to vector<2x4xf32>
    %1572 = vector.broadcast %785 : vector<1x4xf32> to vector<2x4xf32>
    %1573 = arith.mulf %1571, %1572 : vector<2x4xf32>
    %1574 = arith.addf %1509, %1564 : vector<2x4xf32>
    %1575 = arith.addf %1567, %1570 : vector<2x4xf32>
    %1576 = arith.addf %1574, %1575 : vector<2x4xf32>
    %1577 = arith.addf %1576, %1573 : vector<2x4xf32>
    %1578 = vector.broadcast %1526 : vector<2x1xf32> to vector<2x4xf32>
    %1579 = vector.broadcast %786 : vector<1x4xf32> to vector<2x4xf32>
    %1580 = arith.mulf %1578, %1579 : vector<2x4xf32>
    %1581 = vector.broadcast %1527 : vector<2x1xf32> to vector<2x4xf32>
    %1582 = vector.broadcast %787 : vector<1x4xf32> to vector<2x4xf32>
    %1583 = arith.mulf %1581, %1582 : vector<2x4xf32>
    %1584 = vector.broadcast %1528 : vector<2x1xf32> to vector<2x4xf32>
    %1585 = vector.broadcast %788 : vector<1x4xf32> to vector<2x4xf32>
    %1586 = arith.mulf %1584, %1585 : vector<2x4xf32>
    %1587 = vector.broadcast %1529 : vector<2x1xf32> to vector<2x4xf32>
    %1588 = vector.broadcast %789 : vector<1x4xf32> to vector<2x4xf32>
    %1589 = arith.mulf %1587, %1588 : vector<2x4xf32>
    %1590 = arith.addf %1525, %1580 : vector<2x4xf32>
    %1591 = arith.addf %1583, %1586 : vector<2x4xf32>
    %1592 = arith.addf %1590, %1591 : vector<2x4xf32>
    %1593 = arith.addf %1592, %1589 : vector<2x4xf32>
    %1594 = arith.negf %1545 : vector<2x4xf32>
    %1595 = math.exp %1594 : vector<2x4xf32>
    %cst_56 = arith.constant 1.000000e+00 : f32
    %1596 = vector.broadcast %cst_56 : f32 to vector<2x4xf32>
    %1597 = arith.addf %1596, %1595 : vector<2x4xf32>
    %1598 = arith.divf %1596, %1597 : vector<2x4xf32>
    %1599 = arith.negf %1561 : vector<2x4xf32>
    %1600 = math.exp %1599 : vector<2x4xf32>
    %cst_57 = arith.constant 1.000000e+00 : f32
    %1601 = vector.broadcast %cst_57 : f32 to vector<2x4xf32>
    %1602 = arith.addf %1601, %1600 : vector<2x4xf32>
    %1603 = arith.divf %1601, %1602 : vector<2x4xf32>
    %1604 = math.tanh %1577 : vector<2x4xf32>
    %1605 = arith.negf %1593 : vector<2x4xf32>
    %1606 = math.exp %1605 : vector<2x4xf32>
    %cst_58 = arith.constant 1.000000e+00 : f32
    %1607 = vector.broadcast %cst_58 : f32 to vector<2x4xf32>
    %1608 = arith.addf %1607, %1606 : vector<2x4xf32>
    %1609 = arith.divf %1607, %1608 : vector<2x4xf32>
    %1610 = arith.mulf %1603, %1453 : vector<2x4xf32>
    %1611 = arith.mulf %1598, %1604 : vector<2x4xf32>
    %1612 = arith.addf %1610, %1611 : vector<2x4xf32>
    %1613 = math.tanh %1612 : vector<2x4xf32>
    %1614 = arith.mulf %1609, %1613 : vector<2x4xf32>
    %cst_59 = arith.constant 0.000000e+00 : f32
    %1615 = vector.broadcast %cst_59 : f32 to vector<2x4xf32>
    %1616 = arith.maximumf %586, %1615 : vector<2x4xf32>
    %1617 = vector.extract_strided_slice %1616 {offsets = [0, 0], sizes = [2, 1], strides = [1, 1]} : vector<2x4xf32> to vector<2x1xf32>
    %1618 = vector.extract_strided_slice %1616 {offsets = [0, 1], sizes = [2, 1], strides = [1, 1]} : vector<2x4xf32> to vector<2x1xf32>
    %1619 = vector.extract_strided_slice %1616 {offsets = [0, 2], sizes = [2, 1], strides = [1, 1]} : vector<2x4xf32> to vector<2x1xf32>
    %1620 = vector.extract_strided_slice %1616 {offsets = [0, 3], sizes = [2, 1], strides = [1, 1]} : vector<2x4xf32> to vector<2x1xf32>
    %1621 = vector.broadcast %1617 : vector<2x1xf32> to vector<2x4xf32>
    %1622 = vector.broadcast %791 : vector<1x4xf32> to vector<2x4xf32>
    %1623 = arith.mulf %1621, %1622 : vector<2x4xf32>
    %1624 = vector.broadcast %1618 : vector<2x1xf32> to vector<2x4xf32>
    %1625 = vector.broadcast %792 : vector<1x4xf32> to vector<2x4xf32>
    %1626 = arith.mulf %1624, %1625 : vector<2x4xf32>
    %1627 = vector.broadcast %1619 : vector<2x1xf32> to vector<2x4xf32>
    %1628 = vector.broadcast %793 : vector<1x4xf32> to vector<2x4xf32>
    %1629 = arith.mulf %1627, %1628 : vector<2x4xf32>
    %1630 = vector.broadcast %1620 : vector<2x1xf32> to vector<2x4xf32>
    %1631 = vector.broadcast %794 : vector<1x4xf32> to vector<2x4xf32>
    %1632 = arith.mulf %1630, %1631 : vector<2x4xf32>
    %1633 = arith.addf %810, %1623 : vector<2x4xf32>
    %1634 = arith.addf %1626, %1629 : vector<2x4xf32>
    %1635 = arith.addf %1633, %1634 : vector<2x4xf32>
    %1636 = arith.addf %1635, %1632 : vector<2x4xf32>
    %1637 = vector.broadcast %1617 : vector<2x1xf32> to vector<2x4xf32>
    %1638 = vector.broadcast %795 : vector<1x4xf32> to vector<2x4xf32>
    %1639 = arith.mulf %1637, %1638 : vector<2x4xf32>
    %1640 = vector.broadcast %1618 : vector<2x1xf32> to vector<2x4xf32>
    %1641 = vector.broadcast %796 : vector<1x4xf32> to vector<2x4xf32>
    %1642 = arith.mulf %1640, %1641 : vector<2x4xf32>
    %1643 = vector.broadcast %1619 : vector<2x1xf32> to vector<2x4xf32>
    %1644 = vector.broadcast %797 : vector<1x4xf32> to vector<2x4xf32>
    %1645 = arith.mulf %1643, %1644 : vector<2x4xf32>
    %1646 = vector.broadcast %1620 : vector<2x1xf32> to vector<2x4xf32>
    %1647 = vector.broadcast %798 : vector<1x4xf32> to vector<2x4xf32>
    %1648 = arith.mulf %1646, %1647 : vector<2x4xf32>
    %1649 = arith.addf %813, %1639 : vector<2x4xf32>
    %1650 = arith.addf %1642, %1645 : vector<2x4xf32>
    %1651 = arith.addf %1649, %1650 : vector<2x4xf32>
    %1652 = arith.addf %1651, %1648 : vector<2x4xf32>
    %1653 = vector.broadcast %1617 : vector<2x1xf32> to vector<2x4xf32>
    %1654 = vector.broadcast %799 : vector<1x4xf32> to vector<2x4xf32>
    %1655 = arith.mulf %1653, %1654 : vector<2x4xf32>
    %1656 = vector.broadcast %1618 : vector<2x1xf32> to vector<2x4xf32>
    %1657 = vector.broadcast %800 : vector<1x4xf32> to vector<2x4xf32>
    %1658 = arith.mulf %1656, %1657 : vector<2x4xf32>
    %1659 = vector.broadcast %1619 : vector<2x1xf32> to vector<2x4xf32>
    %1660 = vector.broadcast %801 : vector<1x4xf32> to vector<2x4xf32>
    %1661 = arith.mulf %1659, %1660 : vector<2x4xf32>
    %1662 = vector.broadcast %1620 : vector<2x1xf32> to vector<2x4xf32>
    %1663 = vector.broadcast %802 : vector<1x4xf32> to vector<2x4xf32>
    %1664 = arith.mulf %1662, %1663 : vector<2x4xf32>
    %1665 = arith.addf %816, %1655 : vector<2x4xf32>
    %1666 = arith.addf %1658, %1661 : vector<2x4xf32>
    %1667 = arith.addf %1665, %1666 : vector<2x4xf32>
    %1668 = arith.addf %1667, %1664 : vector<2x4xf32>
    %1669 = vector.broadcast %1617 : vector<2x1xf32> to vector<2x4xf32>
    %1670 = vector.broadcast %803 : vector<1x4xf32> to vector<2x4xf32>
    %1671 = arith.mulf %1669, %1670 : vector<2x4xf32>
    %1672 = vector.broadcast %1618 : vector<2x1xf32> to vector<2x4xf32>
    %1673 = vector.broadcast %804 : vector<1x4xf32> to vector<2x4xf32>
    %1674 = arith.mulf %1672, %1673 : vector<2x4xf32>
    %1675 = vector.broadcast %1619 : vector<2x1xf32> to vector<2x4xf32>
    %1676 = vector.broadcast %805 : vector<1x4xf32> to vector<2x4xf32>
    %1677 = arith.mulf %1675, %1676 : vector<2x4xf32>
    %1678 = vector.broadcast %1620 : vector<2x1xf32> to vector<2x4xf32>
    %1679 = vector.broadcast %806 : vector<1x4xf32> to vector<2x4xf32>
    %1680 = arith.mulf %1678, %1679 : vector<2x4xf32>
    %1681 = arith.addf %819, %1671 : vector<2x4xf32>
    %1682 = arith.addf %1674, %1677 : vector<2x4xf32>
    %1683 = arith.addf %1681, %1682 : vector<2x4xf32>
    %1684 = arith.addf %1683, %1680 : vector<2x4xf32>
    %1685 = vector.extract_strided_slice %1614 {offsets = [0, 0], sizes = [2, 1], strides = [1, 1]} : vector<2x4xf32> to vector<2x1xf32>
    %1686 = vector.extract_strided_slice %1614 {offsets = [0, 1], sizes = [2, 1], strides = [1, 1]} : vector<2x4xf32> to vector<2x1xf32>
    %1687 = vector.extract_strided_slice %1614 {offsets = [0, 2], sizes = [2, 1], strides = [1, 1]} : vector<2x4xf32> to vector<2x1xf32>
    %1688 = vector.extract_strided_slice %1614 {offsets = [0, 3], sizes = [2, 1], strides = [1, 1]} : vector<2x4xf32> to vector<2x1xf32>
    %1689 = vector.broadcast %1685 : vector<2x1xf32> to vector<2x4xf32>
    %1690 = vector.broadcast %774 : vector<1x4xf32> to vector<2x4xf32>
    %1691 = arith.mulf %1689, %1690 : vector<2x4xf32>
    %1692 = vector.broadcast %1686 : vector<2x1xf32> to vector<2x4xf32>
    %1693 = vector.broadcast %775 : vector<1x4xf32> to vector<2x4xf32>
    %1694 = arith.mulf %1692, %1693 : vector<2x4xf32>
    %1695 = vector.broadcast %1687 : vector<2x1xf32> to vector<2x4xf32>
    %1696 = vector.broadcast %776 : vector<1x4xf32> to vector<2x4xf32>
    %1697 = arith.mulf %1695, %1696 : vector<2x4xf32>
    %1698 = vector.broadcast %1688 : vector<2x1xf32> to vector<2x4xf32>
    %1699 = vector.broadcast %777 : vector<1x4xf32> to vector<2x4xf32>
    %1700 = arith.mulf %1698, %1699 : vector<2x4xf32>
    %1701 = arith.addf %1636, %1691 : vector<2x4xf32>
    %1702 = arith.addf %1694, %1697 : vector<2x4xf32>
    %1703 = arith.addf %1701, %1702 : vector<2x4xf32>
    %1704 = arith.addf %1703, %1700 : vector<2x4xf32>
    %1705 = vector.broadcast %1685 : vector<2x1xf32> to vector<2x4xf32>
    %1706 = vector.broadcast %778 : vector<1x4xf32> to vector<2x4xf32>
    %1707 = arith.mulf %1705, %1706 : vector<2x4xf32>
    %1708 = vector.broadcast %1686 : vector<2x1xf32> to vector<2x4xf32>
    %1709 = vector.broadcast %779 : vector<1x4xf32> to vector<2x4xf32>
    %1710 = arith.mulf %1708, %1709 : vector<2x4xf32>
    %1711 = vector.broadcast %1687 : vector<2x1xf32> to vector<2x4xf32>
    %1712 = vector.broadcast %780 : vector<1x4xf32> to vector<2x4xf32>
    %1713 = arith.mulf %1711, %1712 : vector<2x4xf32>
    %1714 = vector.broadcast %1688 : vector<2x1xf32> to vector<2x4xf32>
    %1715 = vector.broadcast %781 : vector<1x4xf32> to vector<2x4xf32>
    %1716 = arith.mulf %1714, %1715 : vector<2x4xf32>
    %1717 = arith.addf %1652, %1707 : vector<2x4xf32>
    %1718 = arith.addf %1710, %1713 : vector<2x4xf32>
    %1719 = arith.addf %1717, %1718 : vector<2x4xf32>
    %1720 = arith.addf %1719, %1716 : vector<2x4xf32>
    %1721 = vector.broadcast %1685 : vector<2x1xf32> to vector<2x4xf32>
    %1722 = vector.broadcast %782 : vector<1x4xf32> to vector<2x4xf32>
    %1723 = arith.mulf %1721, %1722 : vector<2x4xf32>
    %1724 = vector.broadcast %1686 : vector<2x1xf32> to vector<2x4xf32>
    %1725 = vector.broadcast %783 : vector<1x4xf32> to vector<2x4xf32>
    %1726 = arith.mulf %1724, %1725 : vector<2x4xf32>
    %1727 = vector.broadcast %1687 : vector<2x1xf32> to vector<2x4xf32>
    %1728 = vector.broadcast %784 : vector<1x4xf32> to vector<2x4xf32>
    %1729 = arith.mulf %1727, %1728 : vector<2x4xf32>
    %1730 = vector.broadcast %1688 : vector<2x1xf32> to vector<2x4xf32>
    %1731 = vector.broadcast %785 : vector<1x4xf32> to vector<2x4xf32>
    %1732 = arith.mulf %1730, %1731 : vector<2x4xf32>
    %1733 = arith.addf %1668, %1723 : vector<2x4xf32>
    %1734 = arith.addf %1726, %1729 : vector<2x4xf32>
    %1735 = arith.addf %1733, %1734 : vector<2x4xf32>
    %1736 = arith.addf %1735, %1732 : vector<2x4xf32>
    %1737 = vector.broadcast %1685 : vector<2x1xf32> to vector<2x4xf32>
    %1738 = vector.broadcast %786 : vector<1x4xf32> to vector<2x4xf32>
    %1739 = arith.mulf %1737, %1738 : vector<2x4xf32>
    %1740 = vector.broadcast %1686 : vector<2x1xf32> to vector<2x4xf32>
    %1741 = vector.broadcast %787 : vector<1x4xf32> to vector<2x4xf32>
    %1742 = arith.mulf %1740, %1741 : vector<2x4xf32>
    %1743 = vector.broadcast %1687 : vector<2x1xf32> to vector<2x4xf32>
    %1744 = vector.broadcast %788 : vector<1x4xf32> to vector<2x4xf32>
    %1745 = arith.mulf %1743, %1744 : vector<2x4xf32>
    %1746 = vector.broadcast %1688 : vector<2x1xf32> to vector<2x4xf32>
    %1747 = vector.broadcast %789 : vector<1x4xf32> to vector<2x4xf32>
    %1748 = arith.mulf %1746, %1747 : vector<2x4xf32>
    %1749 = arith.addf %1684, %1739 : vector<2x4xf32>
    %1750 = arith.addf %1742, %1745 : vector<2x4xf32>
    %1751 = arith.addf %1749, %1750 : vector<2x4xf32>
    %1752 = arith.addf %1751, %1748 : vector<2x4xf32>
    %1753 = arith.negf %1704 : vector<2x4xf32>
    %1754 = math.exp %1753 : vector<2x4xf32>
    %cst_60 = arith.constant 1.000000e+00 : f32
    %1755 = vector.broadcast %cst_60 : f32 to vector<2x4xf32>
    %1756 = arith.addf %1755, %1754 : vector<2x4xf32>
    %1757 = arith.divf %1755, %1756 : vector<2x4xf32>
    %1758 = arith.negf %1720 : vector<2x4xf32>
    %1759 = math.exp %1758 : vector<2x4xf32>
    %cst_61 = arith.constant 1.000000e+00 : f32
    %1760 = vector.broadcast %cst_61 : f32 to vector<2x4xf32>
    %1761 = arith.addf %1760, %1759 : vector<2x4xf32>
    %1762 = arith.divf %1760, %1761 : vector<2x4xf32>
    %1763 = math.tanh %1736 : vector<2x4xf32>
    %1764 = arith.negf %1752 : vector<2x4xf32>
    %1765 = math.exp %1764 : vector<2x4xf32>
    %cst_62 = arith.constant 1.000000e+00 : f32
    %1766 = vector.broadcast %cst_62 : f32 to vector<2x4xf32>
    %1767 = arith.addf %1766, %1765 : vector<2x4xf32>
    %1768 = arith.divf %1766, %1767 : vector<2x4xf32>
    %1769 = arith.mulf %1762, %1612 : vector<2x4xf32>
    %1770 = arith.mulf %1757, %1763 : vector<2x4xf32>
    %1771 = arith.addf %1769, %1770 : vector<2x4xf32>
    %1772 = math.tanh %1771 : vector<2x4xf32>
    %1773 = arith.mulf %1768, %1772 : vector<2x4xf32>
    %cst_63 = arith.constant 0.000000e+00 : f32
    %1774 = vector.broadcast %cst_63 : f32 to vector<2x4xf32>
    %1775 = arith.maximumf %679, %1774 : vector<2x4xf32>
    %1776 = vector.extract_strided_slice %1775 {offsets = [0, 0], sizes = [2, 1], strides = [1, 1]} : vector<2x4xf32> to vector<2x1xf32>
    %1777 = vector.extract_strided_slice %1775 {offsets = [0, 1], sizes = [2, 1], strides = [1, 1]} : vector<2x4xf32> to vector<2x1xf32>
    %1778 = vector.extract_strided_slice %1775 {offsets = [0, 2], sizes = [2, 1], strides = [1, 1]} : vector<2x4xf32> to vector<2x1xf32>
    %1779 = vector.extract_strided_slice %1775 {offsets = [0, 3], sizes = [2, 1], strides = [1, 1]} : vector<2x4xf32> to vector<2x1xf32>
    %1780 = vector.broadcast %1776 : vector<2x1xf32> to vector<2x4xf32>
    %1781 = vector.broadcast %791 : vector<1x4xf32> to vector<2x4xf32>
    %1782 = arith.mulf %1780, %1781 : vector<2x4xf32>
    %1783 = vector.broadcast %1777 : vector<2x1xf32> to vector<2x4xf32>
    %1784 = vector.broadcast %792 : vector<1x4xf32> to vector<2x4xf32>
    %1785 = arith.mulf %1783, %1784 : vector<2x4xf32>
    %1786 = vector.broadcast %1778 : vector<2x1xf32> to vector<2x4xf32>
    %1787 = vector.broadcast %793 : vector<1x4xf32> to vector<2x4xf32>
    %1788 = arith.mulf %1786, %1787 : vector<2x4xf32>
    %1789 = vector.broadcast %1779 : vector<2x1xf32> to vector<2x4xf32>
    %1790 = vector.broadcast %794 : vector<1x4xf32> to vector<2x4xf32>
    %1791 = arith.mulf %1789, %1790 : vector<2x4xf32>
    %1792 = arith.addf %810, %1782 : vector<2x4xf32>
    %1793 = arith.addf %1785, %1788 : vector<2x4xf32>
    %1794 = arith.addf %1792, %1793 : vector<2x4xf32>
    %1795 = arith.addf %1794, %1791 : vector<2x4xf32>
    %1796 = vector.broadcast %1776 : vector<2x1xf32> to vector<2x4xf32>
    %1797 = vector.broadcast %795 : vector<1x4xf32> to vector<2x4xf32>
    %1798 = arith.mulf %1796, %1797 : vector<2x4xf32>
    %1799 = vector.broadcast %1777 : vector<2x1xf32> to vector<2x4xf32>
    %1800 = vector.broadcast %796 : vector<1x4xf32> to vector<2x4xf32>
    %1801 = arith.mulf %1799, %1800 : vector<2x4xf32>
    %1802 = vector.broadcast %1778 : vector<2x1xf32> to vector<2x4xf32>
    %1803 = vector.broadcast %797 : vector<1x4xf32> to vector<2x4xf32>
    %1804 = arith.mulf %1802, %1803 : vector<2x4xf32>
    %1805 = vector.broadcast %1779 : vector<2x1xf32> to vector<2x4xf32>
    %1806 = vector.broadcast %798 : vector<1x4xf32> to vector<2x4xf32>
    %1807 = arith.mulf %1805, %1806 : vector<2x4xf32>
    %1808 = arith.addf %813, %1798 : vector<2x4xf32>
    %1809 = arith.addf %1801, %1804 : vector<2x4xf32>
    %1810 = arith.addf %1808, %1809 : vector<2x4xf32>
    %1811 = arith.addf %1810, %1807 : vector<2x4xf32>
    %1812 = vector.broadcast %1776 : vector<2x1xf32> to vector<2x4xf32>
    %1813 = vector.broadcast %799 : vector<1x4xf32> to vector<2x4xf32>
    %1814 = arith.mulf %1812, %1813 : vector<2x4xf32>
    %1815 = vector.broadcast %1777 : vector<2x1xf32> to vector<2x4xf32>
    %1816 = vector.broadcast %800 : vector<1x4xf32> to vector<2x4xf32>
    %1817 = arith.mulf %1815, %1816 : vector<2x4xf32>
    %1818 = vector.broadcast %1778 : vector<2x1xf32> to vector<2x4xf32>
    %1819 = vector.broadcast %801 : vector<1x4xf32> to vector<2x4xf32>
    %1820 = arith.mulf %1818, %1819 : vector<2x4xf32>
    %1821 = vector.broadcast %1779 : vector<2x1xf32> to vector<2x4xf32>
    %1822 = vector.broadcast %802 : vector<1x4xf32> to vector<2x4xf32>
    %1823 = arith.mulf %1821, %1822 : vector<2x4xf32>
    %1824 = arith.addf %816, %1814 : vector<2x4xf32>
    %1825 = arith.addf %1817, %1820 : vector<2x4xf32>
    %1826 = arith.addf %1824, %1825 : vector<2x4xf32>
    %1827 = arith.addf %1826, %1823 : vector<2x4xf32>
    %1828 = vector.broadcast %1776 : vector<2x1xf32> to vector<2x4xf32>
    %1829 = vector.broadcast %803 : vector<1x4xf32> to vector<2x4xf32>
    %1830 = arith.mulf %1828, %1829 : vector<2x4xf32>
    %1831 = vector.broadcast %1777 : vector<2x1xf32> to vector<2x4xf32>
    %1832 = vector.broadcast %804 : vector<1x4xf32> to vector<2x4xf32>
    %1833 = arith.mulf %1831, %1832 : vector<2x4xf32>
    %1834 = vector.broadcast %1778 : vector<2x1xf32> to vector<2x4xf32>
    %1835 = vector.broadcast %805 : vector<1x4xf32> to vector<2x4xf32>
    %1836 = arith.mulf %1834, %1835 : vector<2x4xf32>
    %1837 = vector.broadcast %1779 : vector<2x1xf32> to vector<2x4xf32>
    %1838 = vector.broadcast %806 : vector<1x4xf32> to vector<2x4xf32>
    %1839 = arith.mulf %1837, %1838 : vector<2x4xf32>
    %1840 = arith.addf %819, %1830 : vector<2x4xf32>
    %1841 = arith.addf %1833, %1836 : vector<2x4xf32>
    %1842 = arith.addf %1840, %1841 : vector<2x4xf32>
    %1843 = arith.addf %1842, %1839 : vector<2x4xf32>
    %1844 = vector.extract_strided_slice %1773 {offsets = [0, 0], sizes = [2, 1], strides = [1, 1]} : vector<2x4xf32> to vector<2x1xf32>
    %1845 = vector.extract_strided_slice %1773 {offsets = [0, 1], sizes = [2, 1], strides = [1, 1]} : vector<2x4xf32> to vector<2x1xf32>
    %1846 = vector.extract_strided_slice %1773 {offsets = [0, 2], sizes = [2, 1], strides = [1, 1]} : vector<2x4xf32> to vector<2x1xf32>
    %1847 = vector.extract_strided_slice %1773 {offsets = [0, 3], sizes = [2, 1], strides = [1, 1]} : vector<2x4xf32> to vector<2x1xf32>
    %1848 = vector.broadcast %1844 : vector<2x1xf32> to vector<2x4xf32>
    %1849 = vector.broadcast %774 : vector<1x4xf32> to vector<2x4xf32>
    %1850 = arith.mulf %1848, %1849 : vector<2x4xf32>
    %1851 = vector.broadcast %1845 : vector<2x1xf32> to vector<2x4xf32>
    %1852 = vector.broadcast %775 : vector<1x4xf32> to vector<2x4xf32>
    %1853 = arith.mulf %1851, %1852 : vector<2x4xf32>
    %1854 = vector.broadcast %1846 : vector<2x1xf32> to vector<2x4xf32>
    %1855 = vector.broadcast %776 : vector<1x4xf32> to vector<2x4xf32>
    %1856 = arith.mulf %1854, %1855 : vector<2x4xf32>
    %1857 = vector.broadcast %1847 : vector<2x1xf32> to vector<2x4xf32>
    %1858 = vector.broadcast %777 : vector<1x4xf32> to vector<2x4xf32>
    %1859 = arith.mulf %1857, %1858 : vector<2x4xf32>
    %1860 = arith.addf %1795, %1850 : vector<2x4xf32>
    %1861 = arith.addf %1853, %1856 : vector<2x4xf32>
    %1862 = arith.addf %1860, %1861 : vector<2x4xf32>
    %1863 = arith.addf %1862, %1859 : vector<2x4xf32>
    %1864 = vector.broadcast %1844 : vector<2x1xf32> to vector<2x4xf32>
    %1865 = vector.broadcast %778 : vector<1x4xf32> to vector<2x4xf32>
    %1866 = arith.mulf %1864, %1865 : vector<2x4xf32>
    %1867 = vector.broadcast %1845 : vector<2x1xf32> to vector<2x4xf32>
    %1868 = vector.broadcast %779 : vector<1x4xf32> to vector<2x4xf32>
    %1869 = arith.mulf %1867, %1868 : vector<2x4xf32>
    %1870 = vector.broadcast %1846 : vector<2x1xf32> to vector<2x4xf32>
    %1871 = vector.broadcast %780 : vector<1x4xf32> to vector<2x4xf32>
    %1872 = arith.mulf %1870, %1871 : vector<2x4xf32>
    %1873 = vector.broadcast %1847 : vector<2x1xf32> to vector<2x4xf32>
    %1874 = vector.broadcast %781 : vector<1x4xf32> to vector<2x4xf32>
    %1875 = arith.mulf %1873, %1874 : vector<2x4xf32>
    %1876 = arith.addf %1811, %1866 : vector<2x4xf32>
    %1877 = arith.addf %1869, %1872 : vector<2x4xf32>
    %1878 = arith.addf %1876, %1877 : vector<2x4xf32>
    %1879 = arith.addf %1878, %1875 : vector<2x4xf32>
    %1880 = vector.broadcast %1844 : vector<2x1xf32> to vector<2x4xf32>
    %1881 = vector.broadcast %782 : vector<1x4xf32> to vector<2x4xf32>
    %1882 = arith.mulf %1880, %1881 : vector<2x4xf32>
    %1883 = vector.broadcast %1845 : vector<2x1xf32> to vector<2x4xf32>
    %1884 = vector.broadcast %783 : vector<1x4xf32> to vector<2x4xf32>
    %1885 = arith.mulf %1883, %1884 : vector<2x4xf32>
    %1886 = vector.broadcast %1846 : vector<2x1xf32> to vector<2x4xf32>
    %1887 = vector.broadcast %784 : vector<1x4xf32> to vector<2x4xf32>
    %1888 = arith.mulf %1886, %1887 : vector<2x4xf32>
    %1889 = vector.broadcast %1847 : vector<2x1xf32> to vector<2x4xf32>
    %1890 = vector.broadcast %785 : vector<1x4xf32> to vector<2x4xf32>
    %1891 = arith.mulf %1889, %1890 : vector<2x4xf32>
    %1892 = arith.addf %1827, %1882 : vector<2x4xf32>
    %1893 = arith.addf %1885, %1888 : vector<2x4xf32>
    %1894 = arith.addf %1892, %1893 : vector<2x4xf32>
    %1895 = arith.addf %1894, %1891 : vector<2x4xf32>
    %1896 = vector.broadcast %1844 : vector<2x1xf32> to vector<2x4xf32>
    %1897 = vector.broadcast %786 : vector<1x4xf32> to vector<2x4xf32>
    %1898 = arith.mulf %1896, %1897 : vector<2x4xf32>
    %1899 = vector.broadcast %1845 : vector<2x1xf32> to vector<2x4xf32>
    %1900 = vector.broadcast %787 : vector<1x4xf32> to vector<2x4xf32>
    %1901 = arith.mulf %1899, %1900 : vector<2x4xf32>
    %1902 = vector.broadcast %1846 : vector<2x1xf32> to vector<2x4xf32>
    %1903 = vector.broadcast %788 : vector<1x4xf32> to vector<2x4xf32>
    %1904 = arith.mulf %1902, %1903 : vector<2x4xf32>
    %1905 = vector.broadcast %1847 : vector<2x1xf32> to vector<2x4xf32>
    %1906 = vector.broadcast %789 : vector<1x4xf32> to vector<2x4xf32>
    %1907 = arith.mulf %1905, %1906 : vector<2x4xf32>
    %1908 = arith.addf %1843, %1898 : vector<2x4xf32>
    %1909 = arith.addf %1901, %1904 : vector<2x4xf32>
    %1910 = arith.addf %1908, %1909 : vector<2x4xf32>
    %1911 = arith.addf %1910, %1907 : vector<2x4xf32>
    %1912 = arith.negf %1863 : vector<2x4xf32>
    %1913 = math.exp %1912 : vector<2x4xf32>
    %cst_64 = arith.constant 1.000000e+00 : f32
    %1914 = vector.broadcast %cst_64 : f32 to vector<2x4xf32>
    %1915 = arith.addf %1914, %1913 : vector<2x4xf32>
    %1916 = arith.divf %1914, %1915 : vector<2x4xf32>
    %1917 = arith.negf %1879 : vector<2x4xf32>
    %1918 = math.exp %1917 : vector<2x4xf32>
    %cst_65 = arith.constant 1.000000e+00 : f32
    %1919 = vector.broadcast %cst_65 : f32 to vector<2x4xf32>
    %1920 = arith.addf %1919, %1918 : vector<2x4xf32>
    %1921 = arith.divf %1919, %1920 : vector<2x4xf32>
    %1922 = math.tanh %1895 : vector<2x4xf32>
    %1923 = arith.negf %1911 : vector<2x4xf32>
    %1924 = math.exp %1923 : vector<2x4xf32>
    %cst_66 = arith.constant 1.000000e+00 : f32
    %1925 = vector.broadcast %cst_66 : f32 to vector<2x4xf32>
    %1926 = arith.addf %1925, %1924 : vector<2x4xf32>
    %1927 = arith.divf %1925, %1926 : vector<2x4xf32>
    %1928 = arith.mulf %1921, %1771 : vector<2x4xf32>
    %1929 = arith.mulf %1916, %1922 : vector<2x4xf32>
    %1930 = arith.addf %1928, %1929 : vector<2x4xf32>
    %1931 = math.tanh %1930 : vector<2x4xf32>
    %1932 = arith.mulf %1927, %1931 : vector<2x4xf32>
    %cst_67 = arith.constant 0.000000e+00 : f32
    %1933 = vector.broadcast %cst_67 : f32 to vector<2x4xf32>
    %1934 = arith.maximumf %772, %1933 : vector<2x4xf32>
    %1935 = vector.extract_strided_slice %1934 {offsets = [0, 0], sizes = [2, 1], strides = [1, 1]} : vector<2x4xf32> to vector<2x1xf32>
    %1936 = vector.extract_strided_slice %1934 {offsets = [0, 1], sizes = [2, 1], strides = [1, 1]} : vector<2x4xf32> to vector<2x1xf32>
    %1937 = vector.extract_strided_slice %1934 {offsets = [0, 2], sizes = [2, 1], strides = [1, 1]} : vector<2x4xf32> to vector<2x1xf32>
    %1938 = vector.extract_strided_slice %1934 {offsets = [0, 3], sizes = [2, 1], strides = [1, 1]} : vector<2x4xf32> to vector<2x1xf32>
    %1939 = vector.broadcast %1935 : vector<2x1xf32> to vector<2x4xf32>
    %1940 = vector.broadcast %791 : vector<1x4xf32> to vector<2x4xf32>
    %1941 = arith.mulf %1939, %1940 : vector<2x4xf32>
    %1942 = vector.broadcast %1936 : vector<2x1xf32> to vector<2x4xf32>
    %1943 = vector.broadcast %792 : vector<1x4xf32> to vector<2x4xf32>
    %1944 = arith.mulf %1942, %1943 : vector<2x4xf32>
    %1945 = vector.broadcast %1937 : vector<2x1xf32> to vector<2x4xf32>
    %1946 = vector.broadcast %793 : vector<1x4xf32> to vector<2x4xf32>
    %1947 = arith.mulf %1945, %1946 : vector<2x4xf32>
    %1948 = vector.broadcast %1938 : vector<2x1xf32> to vector<2x4xf32>
    %1949 = vector.broadcast %794 : vector<1x4xf32> to vector<2x4xf32>
    %1950 = arith.mulf %1948, %1949 : vector<2x4xf32>
    %1951 = arith.addf %810, %1941 : vector<2x4xf32>
    %1952 = arith.addf %1944, %1947 : vector<2x4xf32>
    %1953 = arith.addf %1951, %1952 : vector<2x4xf32>
    %1954 = arith.addf %1953, %1950 : vector<2x4xf32>
    %1955 = vector.broadcast %1935 : vector<2x1xf32> to vector<2x4xf32>
    %1956 = vector.broadcast %795 : vector<1x4xf32> to vector<2x4xf32>
    %1957 = arith.mulf %1955, %1956 : vector<2x4xf32>
    %1958 = vector.broadcast %1936 : vector<2x1xf32> to vector<2x4xf32>
    %1959 = vector.broadcast %796 : vector<1x4xf32> to vector<2x4xf32>
    %1960 = arith.mulf %1958, %1959 : vector<2x4xf32>
    %1961 = vector.broadcast %1937 : vector<2x1xf32> to vector<2x4xf32>
    %1962 = vector.broadcast %797 : vector<1x4xf32> to vector<2x4xf32>
    %1963 = arith.mulf %1961, %1962 : vector<2x4xf32>
    %1964 = vector.broadcast %1938 : vector<2x1xf32> to vector<2x4xf32>
    %1965 = vector.broadcast %798 : vector<1x4xf32> to vector<2x4xf32>
    %1966 = arith.mulf %1964, %1965 : vector<2x4xf32>
    %1967 = arith.addf %813, %1957 : vector<2x4xf32>
    %1968 = arith.addf %1960, %1963 : vector<2x4xf32>
    %1969 = arith.addf %1967, %1968 : vector<2x4xf32>
    %1970 = arith.addf %1969, %1966 : vector<2x4xf32>
    %1971 = vector.broadcast %1935 : vector<2x1xf32> to vector<2x4xf32>
    %1972 = vector.broadcast %799 : vector<1x4xf32> to vector<2x4xf32>
    %1973 = arith.mulf %1971, %1972 : vector<2x4xf32>
    %1974 = vector.broadcast %1936 : vector<2x1xf32> to vector<2x4xf32>
    %1975 = vector.broadcast %800 : vector<1x4xf32> to vector<2x4xf32>
    %1976 = arith.mulf %1974, %1975 : vector<2x4xf32>
    %1977 = vector.broadcast %1937 : vector<2x1xf32> to vector<2x4xf32>
    %1978 = vector.broadcast %801 : vector<1x4xf32> to vector<2x4xf32>
    %1979 = arith.mulf %1977, %1978 : vector<2x4xf32>
    %1980 = vector.broadcast %1938 : vector<2x1xf32> to vector<2x4xf32>
    %1981 = vector.broadcast %802 : vector<1x4xf32> to vector<2x4xf32>
    %1982 = arith.mulf %1980, %1981 : vector<2x4xf32>
    %1983 = arith.addf %816, %1973 : vector<2x4xf32>
    %1984 = arith.addf %1976, %1979 : vector<2x4xf32>
    %1985 = arith.addf %1983, %1984 : vector<2x4xf32>
    %1986 = arith.addf %1985, %1982 : vector<2x4xf32>
    %1987 = vector.broadcast %1935 : vector<2x1xf32> to vector<2x4xf32>
    %1988 = vector.broadcast %803 : vector<1x4xf32> to vector<2x4xf32>
    %1989 = arith.mulf %1987, %1988 : vector<2x4xf32>
    %1990 = vector.broadcast %1936 : vector<2x1xf32> to vector<2x4xf32>
    %1991 = vector.broadcast %804 : vector<1x4xf32> to vector<2x4xf32>
    %1992 = arith.mulf %1990, %1991 : vector<2x4xf32>
    %1993 = vector.broadcast %1937 : vector<2x1xf32> to vector<2x4xf32>
    %1994 = vector.broadcast %805 : vector<1x4xf32> to vector<2x4xf32>
    %1995 = arith.mulf %1993, %1994 : vector<2x4xf32>
    %1996 = vector.broadcast %1938 : vector<2x1xf32> to vector<2x4xf32>
    %1997 = vector.broadcast %806 : vector<1x4xf32> to vector<2x4xf32>
    %1998 = arith.mulf %1996, %1997 : vector<2x4xf32>
    %1999 = arith.addf %819, %1989 : vector<2x4xf32>
    %2000 = arith.addf %1992, %1995 : vector<2x4xf32>
    %2001 = arith.addf %1999, %2000 : vector<2x4xf32>
    %2002 = arith.addf %2001, %1998 : vector<2x4xf32>
    %2003 = vector.extract_strided_slice %1932 {offsets = [0, 0], sizes = [2, 1], strides = [1, 1]} : vector<2x4xf32> to vector<2x1xf32>
    %2004 = vector.extract_strided_slice %1932 {offsets = [0, 1], sizes = [2, 1], strides = [1, 1]} : vector<2x4xf32> to vector<2x1xf32>
    %2005 = vector.extract_strided_slice %1932 {offsets = [0, 2], sizes = [2, 1], strides = [1, 1]} : vector<2x4xf32> to vector<2x1xf32>
    %2006 = vector.extract_strided_slice %1932 {offsets = [0, 3], sizes = [2, 1], strides = [1, 1]} : vector<2x4xf32> to vector<2x1xf32>
    %2007 = vector.broadcast %2003 : vector<2x1xf32> to vector<2x4xf32>
    %2008 = vector.broadcast %774 : vector<1x4xf32> to vector<2x4xf32>
    %2009 = arith.mulf %2007, %2008 : vector<2x4xf32>
    %2010 = vector.broadcast %2004 : vector<2x1xf32> to vector<2x4xf32>
    %2011 = vector.broadcast %775 : vector<1x4xf32> to vector<2x4xf32>
    %2012 = arith.mulf %2010, %2011 : vector<2x4xf32>
    %2013 = vector.broadcast %2005 : vector<2x1xf32> to vector<2x4xf32>
    %2014 = vector.broadcast %776 : vector<1x4xf32> to vector<2x4xf32>
    %2015 = arith.mulf %2013, %2014 : vector<2x4xf32>
    %2016 = vector.broadcast %2006 : vector<2x1xf32> to vector<2x4xf32>
    %2017 = vector.broadcast %777 : vector<1x4xf32> to vector<2x4xf32>
    %2018 = arith.mulf %2016, %2017 : vector<2x4xf32>
    %2019 = arith.addf %1954, %2009 : vector<2x4xf32>
    %2020 = arith.addf %2012, %2015 : vector<2x4xf32>
    %2021 = arith.addf %2019, %2020 : vector<2x4xf32>
    %2022 = arith.addf %2021, %2018 : vector<2x4xf32>
    %2023 = vector.broadcast %2003 : vector<2x1xf32> to vector<2x4xf32>
    %2024 = vector.broadcast %778 : vector<1x4xf32> to vector<2x4xf32>
    %2025 = arith.mulf %2023, %2024 : vector<2x4xf32>
    %2026 = vector.broadcast %2004 : vector<2x1xf32> to vector<2x4xf32>
    %2027 = vector.broadcast %779 : vector<1x4xf32> to vector<2x4xf32>
    %2028 = arith.mulf %2026, %2027 : vector<2x4xf32>
    %2029 = vector.broadcast %2005 : vector<2x1xf32> to vector<2x4xf32>
    %2030 = vector.broadcast %780 : vector<1x4xf32> to vector<2x4xf32>
    %2031 = arith.mulf %2029, %2030 : vector<2x4xf32>
    %2032 = vector.broadcast %2006 : vector<2x1xf32> to vector<2x4xf32>
    %2033 = vector.broadcast %781 : vector<1x4xf32> to vector<2x4xf32>
    %2034 = arith.mulf %2032, %2033 : vector<2x4xf32>
    %2035 = arith.addf %1970, %2025 : vector<2x4xf32>
    %2036 = arith.addf %2028, %2031 : vector<2x4xf32>
    %2037 = arith.addf %2035, %2036 : vector<2x4xf32>
    %2038 = arith.addf %2037, %2034 : vector<2x4xf32>
    %2039 = vector.broadcast %2003 : vector<2x1xf32> to vector<2x4xf32>
    %2040 = vector.broadcast %782 : vector<1x4xf32> to vector<2x4xf32>
    %2041 = arith.mulf %2039, %2040 : vector<2x4xf32>
    %2042 = vector.broadcast %2004 : vector<2x1xf32> to vector<2x4xf32>
    %2043 = vector.broadcast %783 : vector<1x4xf32> to vector<2x4xf32>
    %2044 = arith.mulf %2042, %2043 : vector<2x4xf32>
    %2045 = vector.broadcast %2005 : vector<2x1xf32> to vector<2x4xf32>
    %2046 = vector.broadcast %784 : vector<1x4xf32> to vector<2x4xf32>
    %2047 = arith.mulf %2045, %2046 : vector<2x4xf32>
    %2048 = vector.broadcast %2006 : vector<2x1xf32> to vector<2x4xf32>
    %2049 = vector.broadcast %785 : vector<1x4xf32> to vector<2x4xf32>
    %2050 = arith.mulf %2048, %2049 : vector<2x4xf32>
    %2051 = arith.addf %1986, %2041 : vector<2x4xf32>
    %2052 = arith.addf %2044, %2047 : vector<2x4xf32>
    %2053 = arith.addf %2051, %2052 : vector<2x4xf32>
    %2054 = arith.addf %2053, %2050 : vector<2x4xf32>
    %2055 = vector.broadcast %2003 : vector<2x1xf32> to vector<2x4xf32>
    %2056 = vector.broadcast %786 : vector<1x4xf32> to vector<2x4xf32>
    %2057 = arith.mulf %2055, %2056 : vector<2x4xf32>
    %2058 = vector.broadcast %2004 : vector<2x1xf32> to vector<2x4xf32>
    %2059 = vector.broadcast %787 : vector<1x4xf32> to vector<2x4xf32>
    %2060 = arith.mulf %2058, %2059 : vector<2x4xf32>
    %2061 = vector.broadcast %2005 : vector<2x1xf32> to vector<2x4xf32>
    %2062 = vector.broadcast %788 : vector<1x4xf32> to vector<2x4xf32>
    %2063 = arith.mulf %2061, %2062 : vector<2x4xf32>
    %2064 = vector.broadcast %2006 : vector<2x1xf32> to vector<2x4xf32>
    %2065 = vector.broadcast %789 : vector<1x4xf32> to vector<2x4xf32>
    %2066 = arith.mulf %2064, %2065 : vector<2x4xf32>
    %2067 = arith.addf %2002, %2057 : vector<2x4xf32>
    %2068 = arith.addf %2060, %2063 : vector<2x4xf32>
    %2069 = arith.addf %2067, %2068 : vector<2x4xf32>
    %2070 = arith.addf %2069, %2066 : vector<2x4xf32>
    %2071 = arith.negf %2022 : vector<2x4xf32>
    %2072 = math.exp %2071 : vector<2x4xf32>
    %cst_68 = arith.constant 1.000000e+00 : f32
    %2073 = vector.broadcast %cst_68 : f32 to vector<2x4xf32>
    %2074 = arith.addf %2073, %2072 : vector<2x4xf32>
    %2075 = arith.divf %2073, %2074 : vector<2x4xf32>
    %2076 = arith.negf %2038 : vector<2x4xf32>
    %2077 = math.exp %2076 : vector<2x4xf32>
    %cst_69 = arith.constant 1.000000e+00 : f32
    %2078 = vector.broadcast %cst_69 : f32 to vector<2x4xf32>
    %2079 = arith.addf %2078, %2077 : vector<2x4xf32>
    %2080 = arith.divf %2078, %2079 : vector<2x4xf32>
    %2081 = math.tanh %2054 : vector<2x4xf32>
    %2082 = arith.negf %2070 : vector<2x4xf32>
    %2083 = math.exp %2082 : vector<2x4xf32>
    %cst_70 = arith.constant 1.000000e+00 : f32
    %2084 = vector.broadcast %cst_70 : f32 to vector<2x4xf32>
    %2085 = arith.addf %2084, %2083 : vector<2x4xf32>
    %2086 = arith.divf %2084, %2085 : vector<2x4xf32>
    %2087 = arith.mulf %2080, %1930 : vector<2x4xf32>
    %2088 = arith.mulf %2075, %2081 : vector<2x4xf32>
    %2089 = arith.addf %2087, %2088 : vector<2x4xf32>
    %2090 = math.tanh %2089 : vector<2x4xf32>
    %2091 = arith.mulf %2086, %2090 : vector<2x4xf32>
    %cst_71 = arith.constant 0.000000e+00 : f32
    %2092 = vector.broadcast %cst_71 : f32 to vector<2x4xf32>
    %2093 = arith.maximumf %2091, %2092 : vector<2x4xf32>
    %c0_72 = arith.constant 0 : index
    %c0_73 = arith.constant 0 : index
    %2094 = vector.load %arg7[%c0_72, %c0_73] : memref<4x64xf32, #tpu.memory_space<vmem>>, vector<4x64xf32>
    %cst_74 = arith.constant dense<0.000000e+00> : vector<2x64xf32>
    %2095 = tpu.matmul %2093, %2094, %cst_74 {dimension_numbers = #tpu.dot_dimension_numbers<[1], [0], [0], [1], [0, 0, 1, 1], [], []>} : vector<2x4xf32>, vector<4x64xf32>, vector<2x64xf32> -> vector<2x64xf32>
    %c0_75 = arith.constant 0 : index
    %c0_76 = arith.constant 0 : index
    %2096 = vector.load %arg8[%c0_75, %c0_76] : memref<1x64xf32, #tpu.memory_space<vmem>>, vector<1x64xf32>
    %2097 = vector.broadcast %2096 : vector<1x64xf32> to vector<2x64xf32>
    %2098 = arith.addf %2095, %2097 : vector<2x64xf32>
    %cst_77 = arith.constant 0.000000e+00 : f32
    %2099 = vector.broadcast %cst_77 : f32 to vector<2x64xf32>
    %2100 = arith.maximumf %2098, %2099 : vector<2x64xf32>
    %c0_78 = arith.constant 0 : index
    %c0_79 = arith.constant 0 : index
    %2101 = vector.load %arg9[%c0_78, %c0_79] : memref<64x4xf32, #tpu.memory_space<vmem>>, vector<64x4xf32>
    %cst_80 = arith.constant dense<0.000000e+00> : vector<2x4xf32>
    %2102 = tpu.matmul %2100, %2101, %cst_80 {dimension_numbers = #tpu.dot_dimension_numbers<[1], [0], [0], [1], [0, 0, 1, 1], [], []>} : vector<2x64xf32>, vector<64x4xf32>, vector<2x4xf32> -> vector<2x4xf32>
    %c0_81 = arith.constant 0 : index
    %c0_82 = arith.constant 0 : index
    %2103 = vector.load %arg10[%c0_81, %c0_82] : memref<1x4xf32, #tpu.memory_space<vmem>>, vector<1x4xf32>
    %2104 = vector.broadcast %2103 : vector<1x4xf32> to vector<2x4xf32>
    %2105 = arith.addf %2102, %2104 : vector<2x4xf32>
    %c0_83 = arith.constant 0 : index
    %c0_84 = arith.constant 0 : index
    %2106 = vector.load %arg11[%c0_83, %c0_84] : memref<2x4xf32, #tpu.memory_space<vmem>>, vector<2x4xf32>
    tpu.vector_store %arg11[%c0_83, %c0_84], %2105 {strides = array<i32>} : memref<2x4xf32, #tpu.memory_space<vmem>>, vector<2x4xf32>,
    return
  }
}

</mosaic_0001>

<llo_original>
// kernel: tpu_custom_call.1
$region0: #{tpu_custom_call.1}
  #allocation0 [shape = 'u32[]', space=smem, size = 0x4, offset = 0x4, fixed_abs, tag = 'smem constant byte address 0x4 - core index']
  #allocation1 [shape = 'u32[144,128]{1,0:T(1,128)}', space=vmem, size = 0x12000, scoped, tag = 'internal scratch']
  %s0 = inlined_call_operand.vmem [shape: f32[16,4], index: 0, kind: input, shape index: {}]
  %s1 = inlined_call_operand.vmem [shape: f32[4,16], index: 1, kind: input, shape index: {}]
  %s2 = inlined_call_operand.vmem [shape: f32[4,16], index: 2, kind: input, shape index: {}]
  %s3 = inlined_call_operand.vmem [shape: f32[1,16], index: 3, kind: input, shape index: {}]
  %s4 = inlined_call_operand.vmem [shape: f32[4,16], index: 4, kind: input, shape index: {}]
  %s5 = inlined_call_operand.vmem [shape: f32[4,16], index: 5, kind: input, shape index: {}]
  %s6 = inlined_call_operand.vmem [shape: f32[1,16], index: 6, kind: input, shape index: {}]
  %s7 = inlined_call_operand.vmem [shape: f32[4,64], index: 7, kind: input, shape index: {}]
  %s8 = inlined_call_operand.vmem [shape: f32[1,64], index: 8, kind: input, shape index: {}]
  %s9 = inlined_call_operand.vmem [shape: f32[64,4], index: 9, kind: input, shape index: {}]
  %s10 = inlined_call_operand.vmem [shape: f32[1,4], index: 10, kind: input, shape index: {}]
  %s11 = inlined_call_operand.hbm [shape: f32[2,4], index: 11, kind: output, shape index: {}]
  %s12 = sld [smem:[#allocation0]]
  $region54: #{tpu_custom_call.1} parent=0
    _
  %s14 = ssub.s32 1, %s12
  %s15 = scalar_select 0, %s14, %s12
  $region1: #{tpu_custom_call.1} parent=0
    #allocation2 [shape = 'u8[1024]{0}', space=vmem, size = 0x400, scoped, tag = 'output window, operand 0, single buffered']
    #allocation3 [shape = 's32[1]{0}', space=sflag, size = 0x4, scoped, tag = 'scoped memory for tpu_custom_call.1']
    %16 = vsyncpa [#allocation3], 0
    // Predicated region
    $region2: #{tpu_custom_call.1} parent=1 // pred_check
      _
    $region3: #{tpu_custom_call.1} parent=1 // pred_check_branch
      %18 = sbr.rel (0) target = $region5
    $region4: #{tpu_custom_call.1} parent=1 // pred_region
      _
    $region5: #{tpu_custom_call.1} parent=1 // pred_fallthru
      _
    // Predicated region
    $region6: #{tpu_custom_call.1} parent=1 // pred_check
      _
    $region7: #{tpu_custom_call.1} parent=1 // pred_check_branch
      %20 = sbr.rel (0) target = $region9
    $region8: #{tpu_custom_call.1} parent=1 // pred_region
      _
    $region9: #{tpu_custom_call.1} parent=1 // pred_fallthru
      _
    // Predicated region
    $region10: #{tpu_custom_call.1} parent=1 // pred_check
      _
    $region11: #{tpu_custom_call.1} parent=1 // pred_check_branch
      %22 = sbr.rel (0) target = $region13
    $region12: #{tpu_custom_call.1} parent=1 // pred_region
      _
    $region13: #{tpu_custom_call.1} parent=1 // pred_fallthru
      _
    // Predicated region
    $region14: #{tpu_custom_call.1} parent=1 // pred_check
      _
    $region15: #{tpu_custom_call.1} parent=1 // pred_check_branch
      %24 = sbr.rel (0) target = $region17
    $region16: #{tpu_custom_call.1} parent=1 // pred_region
      _
    $region17: #{tpu_custom_call.1} parent=1 // pred_fallthru
      _
    // Predicated region
    $region18: #{tpu_custom_call.1} parent=1 // pred_check
      _
    $region19: #{tpu_custom_call.1} parent=1 // pred_check_branch
      %26 = sbr.rel (0) target = $region21
    $region20: #{tpu_custom_call.1} parent=1 // pred_region
      _
    $region21: #{tpu_custom_call.1} parent=1 // pred_fallthru
      _
    // Predicated region
    $region22: #{tpu_custom_call.1} parent=1 // pred_check
      _
    $region23: #{tpu_custom_call.1} parent=1 // pred_check_branch
      %28 = sbr.rel (0) target = $region25
    $region24: #{tpu_custom_call.1} parent=1 // pred_region
      _
    $region25: #{tpu_custom_call.1} parent=1 // pred_fallthru
      _
    // Predicated region
    $region26: #{tpu_custom_call.1} parent=1 // pred_check
      _
    $region27: #{tpu_custom_call.1} parent=1 // pred_check_branch
      %30 = sbr.rel (0) target = $region29
    $region28: #{tpu_custom_call.1} parent=1 // pred_region
      _
    $region29: #{tpu_custom_call.1} parent=1 // pred_fallthru
      _
    // Predicated region
    $region30: #{tpu_custom_call.1} parent=1 // pred_check
      _
    $region31: #{tpu_custom_call.1} parent=1 // pred_check_branch
      %32 = sbr.rel (0) target = $region33
    $region32: #{tpu_custom_call.1} parent=1 // pred_region
      _
    $region33: #{tpu_custom_call.1} parent=1 // pred_fallthru
      _
    // Predicated region
    $region34: #{tpu_custom_call.1} parent=1 // pred_check
      _
    $region35: #{tpu_custom_call.1} parent=1 // pred_check_branch
      %34 = sbr.rel (0) target = $region37
    $region36: #{tpu_custom_call.1} parent=1 // pred_region
      _
    $region37: #{tpu_custom_call.1} parent=1 // pred_fallthru
      _
    // Predicated region
    $region38: #{tpu_custom_call.1} parent=1 // pred_check
      _
    $region39: #{tpu_custom_call.1} parent=1 // pred_check_branch
      %36 = sbr.rel (0) target = $region41
    $region40: #{tpu_custom_call.1} parent=1 // pred_region
      _
    $region41: #{tpu_custom_call.1} parent=1 // pred_fallthru
      _
    // Predicated region
    $region42: #{tpu_custom_call.1} parent=1 // pred_check
      _
    $region43: #{tpu_custom_call.1} parent=1 // pred_check_branch
      %38 = sbr.rel (0) target = $region45
    $region44: #{tpu_custom_call.1} parent=1 // pred_region
      _
    $region45: #{tpu_custom_call.1} parent=1 // pred_fallthru
      _
    %v39 = vld [vmem:[%s0] sm:$0xff]
    %v40 = vld [vmem:[%s0 + $0x8] sm:$0xff]
    %v41 = vld [vmem:[%s1] sm:$0xf]
    %v42 = vld [vmem:[%s3] sm:$0x1]
    %v44 = vlaneseq
    %v45 = vshrl.u32 %v44, 7
    %v46 = vsub.s32 0, %v45
    %v47 = vrot.slane %v42, %v46
    %vm49 = vcmask 31744
    %v51 = vsel %vm49, %v39, 0
    %v54 = vsel %vm49, %v40, 0
    %vm56 = vcmask 1043456
    %v58 = vsel %vm56, %v41, 0
    %60 = vmatprep.subr.mxu0 0.0
    %61 = vmatpush1.msra.mxu0 %v58
    %62 = vmatprep.subr.mxu0 0.0
    %63 = vmatpush1.msra.mxu0 0.0
    %64 = vmatprep.subr.mxu0 0.0
    %65 = vmatpush1.msra.mxu0 0.0
    %66 = vmatprep.subr.mxu0 0.0
    %67 = vmatpush1.msra.mxu0 0.0
    %68 = vmatprep.subr.mxu0 0.0
    %69 = vmatpush1.msra.mxu0 0.0
    %70 = vmatprep.subr.mxu0 0.0
    %71 = vmatpush1.msra.mxu0 0.0
    %72 = vmatprep.subr.mxu0 0.0
    %73 = vmatpush1.msra.mxu0 0.0
    %74 = vmatprep.subr.mxu0 0.0
    %75 = vmatpush1.msra.mxu0 0.0
    %76 = vmatprep.subr.mxu0 0.0
    %77 = vmatpush1.msra.mxu0 0.0
    %78 = vmatprep.subr.mxu0 0.0
    %79 = vmatpush1.msra.mxu0 0.0
    %80 = vmatprep.subr.mxu0 0.0
    %81 = vmatpush1.msra.mxu0 0.0
    %82 = vmatprep.subr.mxu0 0.0
    %83 = vmatpush1.msra.mxu0 0.0
    %84 = vmatprep.subr.mxu0 0.0
    %85 = vmatpush1.msra.mxu0 0.0
    %86 = vmatprep.subr.mxu0 0.0
    %87 = vmatpush1.msra.mxu0 0.0
    %88 = vmatprep.subr.mxu0 0.0
    %89 = vmatpush1.msra.mxu0 0.0
    %90 = vmatprep.subr.mxu0 0.0
    %91 = vmatpush1.msra.mxu0 0.0
    %92 = vmatprep.subr.mxu0 0.0
    %93 = vmatpush1.msra.mxu0 0.0
    %94 = vmatprep.subr.mxu0 0.0
    %95 = vmatpush1.msra.mxu0 0.0
    %96 = vmatprep.subr.mxu0 0.0
    %97 = vmatpush1.msra.mxu0 0.0
    %98 = vmatprep.subr.mxu0 0.0
    %99 = vmatpush1.msra.mxu0 0.0
    %100 = vmatprep.subr.mxu0 0.0
    %101 = vmatpush1.msra.mxu0 0.0
    %102 = vmatprep.subr.mxu0 0.0
    %103 = vmatpush1.msra.mxu0 0.0
    %104 = vmatprep.subr.mxu0 0.0
    %105 = vmatpush1.msra.mxu0 0.0
    %106 = vmatprep.subr.mxu0 0.0
    %107 = vmatpush1.msra.mxu0 0.0
    %108 = vmatprep.subr.mxu0 0.0
    %109 = vmatpush1.msra.mxu0 0.0
    %110 = vmatprep.subr.mxu0 0.0
    %111 = vmatpush1.msra.mxu0 0.0
    %112 = vmatprep.subr.mxu0 0.0
    %113 = vmatpush1.msra.mxu0 0.0
    %114 = vmatprep.subr.mxu0 0.0
    %115 = vmatpush1.msra.mxu0 0.0
    %116 = vmatprep.subr.mxu0 0.0
    %117 = vmatpush1.msra.mxu0 0.0
    %118 = vmatprep.subr.mxu0 0.0
    %119 = vmatpush1.msra.mxu0 0.0
    %120 = vmatprep.subr.mxu0 0.0
    %121 = vmatpush1.msra.mxu0 0.0
    %122 = vmatprep.subr.mxu0 0.0
    %123 = vmatpush1.msra.mxu0 0.0
    %124 = vmatprep.mubr.f32.mxu0 0.0
    %125 = vmatmul.mubr.f32.gmra.mrb[0].mxu0 %v51
    %v126 = vpop.f32.mrb[0].mxu0
    %v127 = vadd.f32 %v47, %v126
    %v128 = vpop.f32.mrb[0].mxu0
    %129 = vmatprep.mubr.f32.mxu0 0.0
    %130 = vmatmul.mubr.f32.gmra.mrb[0].mxu0 %v54
    %v131 = vpop.f32.mrb[0].mxu0
    %v132 = vadd.f32 %v47, %v131
    %v133 = vpop.f32.mrb[0].mxu0
    %134 = vdwg.mxu0
    %v135 = vld [vmem:[%s2] sm:$0xf]
    %v136 = vlaneseq
    %v137 = vshrl.u32 %v136, 7
    %v138 = vsub.s32 0, %v137
    %v139 = vrot.slane %v135, %v138
    %v140 = vmul.f32 %v139, 0.0
    %v141 = vlaneseq
    %v142 = vshrl.u32 %v141, 7
    %v143 = vsub.s32 1, %v142
    %v144 = vrot.slane %v135, %v143
    %v145 = vmul.f32 %v144, 0.0
    %v146 = vlaneseq
    %v147 = vshrl.u32 %v146, 7
    %v148 = vsub.s32 2, %v147
    %v149 = vrot.slane %v135, %v148
    %v150 = vmul.f32 %v149, 0.0
    %v151 = vlaneseq
    %v152 = vshrl.u32 %v151, 7
    %v153 = vsub.s32 3, %v152
    %v154 = vrot.slane %v135, %v153
    %v155 = vmul.f32 %v154, 0.0
    %v156 = vadd.f32 %v127, %v140
    %v157 = vadd.f32 %v145, %v150
    %v158 = vadd.f32 %v156, %v157
    %v159 = vadd.f32 %v158, %v155
    %v160 = vxor.u32 %v159, 2147483648
    %v161 = vmul.f32 %v160, 1.442695
    %v162 = vpow.pop %v161
    %v163 = vadd.f32 %v162, 1.0
    %v164 = vrcp.pop %v163
    %v165 = vmul.f32 1.0, %v164
    %v166 = vtanh.pop %v159
    %v167 = vmul.f32 %v165, 0.0
    %169 = vrot.lane.b32.xlu0 %v166, 120
    %v170 = vpop.permute.xlu0 %169
    %v172 = vmul.f32 %v165, %v170
    %174 = vrot.lane.b32.xlu0 %v172, 4
    %v175 = vpop.permute.xlu0 %174
    %v177 = vadd.f32 %v167, %v175
    %v178 = vtanh.pop %v177
    %180 = vrot.lane.b32.xlu0 %v178, 8
    %v181 = vpop.permute.xlu0 %180
    %v183 = vmul.f32 %v165, %v181
    %185 = vset.pattern.permute.xlu0 12
    %186 = vperm.xlu0 %185, %v183
    %v187 = vpop.permute.xlu0 %186
    %v189 = vmul.f32 %v187, %v139
    %190 = vset.pattern.permute.xlu0 13
    %191 = vperm.xlu0 %190, %v183
    %v192 = vpop.permute.xlu0 %191
    %v194 = vmul.f32 %v192, %v144
    %195 = vset.pattern.permute.xlu0 14
    %196 = vperm.xlu0 %195, %v183
    %v197 = vpop.permute.xlu0 %196
    %v199 = vmul.f32 %v197, %v149
    %200 = vset.pattern.permute.xlu0 15
    %201 = vperm.xlu0 %200, %v183
    %v202 = vpop.permute.xlu0 %201
    %v204 = vmul.f32 %v202, %v154
    %v206 = vrot.slane %v189, 6
    %v208 = vadd.f32 %v127, %v206
    %v209 = vadd.f32 %v194, %v199
    %v211 = vrot.slane %v209, 6
    %v213 = vadd.f32 %v208, %v211
    %v215 = vrot.slane %v204, 6
    %v217 = vadd.f32 %v213, %v215
    %v218 = vxor.u32 %v217, 2147483648
    %v219 = vmul.f32 %v218, 1.442695
    %v220 = vpow.pop %v219
    %v221 = vadd.f32 %v220, 1.0
    %v222 = vrcp.pop %v221
    %v223 = vmul.f32 1.0, %v222
    %v224 = vtanh.pop %v217
    %v226 = vrot.slane %v177, 6
    %v228 = vmul.f32 %v223, %v226
    %230 = vrot.lane.b32.xlu0 %v224, 120
    %v231 = vpop.permute.xlu0 %230
    %v233 = vmul.f32 %v223, %v231
    %235 = vrot.lane.b32.xlu0 %v233, 4
    %v236 = vpop.permute.xlu0 %235
    %v238 = vadd.f32 %v228, %v236
    %v239 = vtanh.pop %v238
    %241 = vrot.lane.b32.xlu0 %v239, 8
    %v242 = vpop.permute.xlu0 %241
    %v244 = vmul.f32 %v223, %v242
    %246 = vset.pattern.permute.xlu0 12
    %247 = vperm.xlu0 %246, %v244
    %v248 = vpop.permute.xlu0 %247
    %v250 = vmul.f32 %v248, %v139
    %251 = vset.pattern.permute.xlu0 13
    %252 = vperm.xlu0 %251, %v244
    %v253 = vpop.permute.xlu0 %252
    %v255 = vmul.f32 %v253, %v144
    %256 = vset.pattern.permute.xlu0 14
    %257 = vperm.xlu0 %256, %v244
    %v258 = vpop.permute.xlu0 %257
    %v260 = vmul.f32 %v258, %v149
    %261 = vset.pattern.permute.xlu0 15
    %262 = vperm.xlu0 %261, %v244
    %v263 = vpop.permute.xlu0 %262
    %v265 = vmul.f32 %v263, %v154
    %v267 = vrot.slane %v250, 6
    %v269 = vadd.f32 %v127, %v267
    %v270 = vadd.f32 %v255, %v260
    %v272 = vrot.slane %v270, 6
    %v274 = vadd.f32 %v269, %v272
    %v276 = vrot.slane %v265, 6
    %v278 = vadd.f32 %v274, %v276
    %v279 = vxor.u32 %v278, 2147483648
    %v280 = vmul.f32 %v279, 1.442695
    %v281 = vpow.pop %v280
    %v282 = vadd.f32 %v281, 1.0
    %v283 = vrcp.pop %v282
    %v284 = vmul.f32 1.0, %v283
    %v285 = vtanh.pop %v278
    %v287 = vrot.slane %v238, 6
    %v289 = vmul.f32 %v284, %v287
    %291 = vrot.lane.b32.xlu0 %v285, 120
    %v292 = vpop.permute.xlu0 %291
    %v294 = vmul.f32 %v284, %v292
    %296 = vrot.lane.b32.xlu0 %v294, 4
    %v297 = vpop.permute.xlu0 %296
    %v299 = vadd.f32 %v289, %v297
    %v300 = vtanh.pop %v299
    %302 = vrot.lane.b32.xlu0 %v300, 8
    %v303 = vpop.permute.xlu0 %302
    %v305 = vmul.f32 %v284, %v303
    %307 = vset.pattern.permute.xlu0 12
    %308 = vperm.xlu0 %307, %v305
    %v309 = vpop.permute.xlu0 %308
    %v311 = vmul.f32 %v309, %v139
    %312 = vset.pattern.permute.xlu0 13
    %313 = vperm.xlu0 %312, %v305
    %v314 = vpop.permute.xlu0 %313
    %v316 = vmul.f32 %v314, %v144
    %317 = vset.pattern.permute.xlu0 14
    %318 = vperm.xlu0 %317, %v305
    %v319 = vpop.permute.xlu0 %318
    %v321 = vmul.f32 %v319, %v149
    %322 = vset.pattern.permute.xlu0 15
    %323 = vperm.xlu0 %322, %v305
    %v324 = vpop.permute.xlu0 %323
    %v326 = vmul.f32 %v324, %v154
    %v328 = vrot.slane %v311, 6
    %v330 = vadd.f32 %v127, %v328
    %v331 = vadd.f32 %v316, %v321
    %v333 = vrot.slane %v331, 6
    %v335 = vadd.f32 %v330, %v333
    %v337 = vrot.slane %v326, 6
    %v339 = vadd.f32 %v335, %v337
    %v340 = vxor.u32 %v339, 2147483648
    %v341 = vmul.f32 %v340, 1.442695
    %v342 = vpow.pop %v341
    %v343 = vadd.f32 %v342, 1.0
    %v344 = vrcp.pop %v343
    %v345 = vmul.f32 1.0, %v344
    %v346 = vtanh.pop %v339
    %v348 = vrot.slane %v299, 6
    %v350 = vmul.f32 %v345, %v348
    %352 = vrot.lane.b32.xlu0 %v346, 120
    %v353 = vpop.permute.xlu0 %352
    %v355 = vmul.f32 %v345, %v353
    %357 = vrot.lane.b32.xlu0 %v355, 4
    %v358 = vpop.permute.xlu0 %357
    %v360 = vadd.f32 %v350, %v358
    %v361 = vtanh.pop %v360
    %363 = vrot.lane.b32.xlu0 %v361, 8
    %v364 = vpop.permute.xlu0 %363
    %v366 = vmul.f32 %v345, %v364
    %368 = vset.pattern.permute.xlu0 12
    %369 = vperm.xlu0 %368, %v366
    %v370 = vpop.permute.xlu0 %369
    %v372 = vmul.f32 %v370, %v139
    %373 = vset.pattern.permute.xlu0 13
    %374 = vperm.xlu0 %373, %v366
    %v375 = vpop.permute.xlu0 %374
    %v377 = vmul.f32 %v375, %v144
    %378 = vset.pattern.permute.xlu0 14
    %379 = vperm.xlu0 %378, %v366
    %v380 = vpop.permute.xlu0 %379
    %v382 = vmul.f32 %v380, %v149
    %383 = vset.pattern.permute.xlu0 15
    %384 = vperm.xlu0 %383, %v366
    %v385 = vpop.permute.xlu0 %384
    %v387 = vmul.f32 %v385, %v154
    %v389 = vrot.slane %v372, 6
    %v391 = vadd.f32 %v132, %v389
    %v392 = vadd.f32 %v377, %v382
    %v394 = vrot.slane %v392, 6
    %v396 = vadd.f32 %v391, %v394
    %v398 = vrot.slane %v387, 6
    %v400 = vadd.f32 %v396, %v398
    %v401 = vxor.u32 %v400, 2147483648
    %v402 = vmul.f32 %v401, 1.442695
    %v403 = vpow.pop %v402
    %v404 = vadd.f32 %v403, 1.0
    %v405 = vrcp.pop %v404
    %v406 = vmul.f32 1.0, %v405
    %v407 = vtanh.pop %v400
    %v409 = vrot.slane %v360, 6
    %v411 = vmul.f32 %v406, %v409
    %413 = vrot.lane.b32.xlu0 %v407, 120
    %v414 = vpop.permute.xlu0 %413
    %v416 = vmul.f32 %v406, %v414
    %418 = vrot.lane.b32.xlu0 %v416, 4
    %v419 = vpop.permute.xlu0 %418
    %v421 = vadd.f32 %v411, %v419
    %v422 = vtanh.pop %v421
    %424 = vrot.lane.b32.xlu0 %v422, 8
    %v425 = vpop.permute.xlu0 %424
    %v427 = vmul.f32 %v406, %v425
    %429 = vset.pattern.permute.xlu0 12
    %430 = vperm.xlu0 %429, %v427
    %v431 = vpop.permute.xlu0 %430
    %v433 = vmul.f32 %v431, %v139
    %434 = vset.pattern.permute.xlu0 13
    %435 = vperm.xlu0 %434, %v427
    %v436 = vpop.permute.xlu0 %435
    %v438 = vmul.f32 %v436, %v144
    %439 = vset.pattern.permute.xlu0 14
    %440 = vperm.xlu0 %439, %v427
    %v441 = vpop.permute.xlu0 %440
    %v443 = vmul.f32 %v441, %v149
    %444 = vset.pattern.permute.xlu0 15
    %445 = vperm.xlu0 %444, %v427
    %v446 = vpop.permute.xlu0 %445
    %v448 = vmul.f32 %v446, %v154
    %v450 = vrot.slane %v433, 6
    %v452 = vadd.f32 %v132, %v450
    %v453 = vadd.f32 %v438, %v443
    %v455 = vrot.slane %v453, 6
    %v457 = vadd.f32 %v452, %v455
    %v459 = vrot.slane %v448, 6
    %v461 = vadd.f32 %v457, %v459
    %v462 = vxor.u32 %v461, 2147483648
    %v463 = vmul.f32 %v462, 1.442695
    %v464 = vpow.pop %v463
    %v465 = vadd.f32 %v464, 1.0
    %v466 = vrcp.pop %v465
    %v467 = vmul.f32 1.0, %v466
    %v468 = vtanh.pop %v461
    %v470 = vrot.slane %v421, 6
    %v472 = vmul.f32 %v467, %v470
    %474 = vrot.lane.b32.xlu0 %v468, 120
    %v475 = vpop.permute.xlu0 %474
    %v477 = vmul.f32 %v467, %v475
    %479 = vrot.lane.b32.xlu0 %v477, 4
    %v480 = vpop.permute.xlu0 %479
    %v482 = vadd.f32 %v472, %v480
    %v483 = vtanh.pop %v482
    %485 = vrot.lane.b32.xlu0 %v483, 8
    %v486 = vpop.permute.xlu0 %485
    %v488 = vmul.f32 %v467, %v486
    %490 = vset.pattern.permute.xlu0 12
    %491 = vperm.xlu0 %490, %v488
    %v492 = vpop.permute.xlu0 %491
    %v494 = vmul.f32 %v492, %v139
    %495 = vset.pattern.permute.xlu0 13
    %496 = vperm.xlu0 %495, %v488
    %v497 = vpop.permute.xlu0 %496
    %v499 = vmul.f32 %v497, %v144
    %500 = vset.pattern.permute.xlu0 14
    %501 = vperm.xlu0 %500, %v488
    %v502 = vpop.permute.xlu0 %501
    %v504 = vmul.f32 %v502, %v149
    %505 = vset.pattern.permute.xlu0 15
    %506 = vperm.xlu0 %505, %v488
    %v507 = vpop.permute.xlu0 %506
    %v509 = vmul.f32 %v507, %v154
    %v511 = vrot.slane %v494, 6
    %v513 = vadd.f32 %v132, %v511
    %v514 = vadd.f32 %v499, %v504
    %v516 = vrot.slane %v514, 6
    %v518 = vadd.f32 %v513, %v516
    %v520 = vrot.slane %v509, 6
    %v522 = vadd.f32 %v518, %v520
    %v523 = vxor.u32 %v522, 2147483648
    %v524 = vmul.f32 %v523, 1.442695
    %v525 = vpow.pop %v524
    %v526 = vadd.f32 %v525, 1.0
    %v527 = vrcp.pop %v526
    %v528 = vmul.f32 1.0, %v527
    %v529 = vtanh.pop %v522
    %v531 = vrot.slane %v482, 6
    %v533 = vmul.f32 %v528, %v531
    %535 = vrot.lane.b32.xlu0 %v529, 120
    %v536 = vpop.permute.xlu0 %535
    %v538 = vmul.f32 %v528, %v536
    %540 = vrot.lane.b32.xlu0 %v538, 4
    %v541 = vpop.permute.xlu0 %540
    %v543 = vadd.f32 %v533, %v541
    %v544 = vtanh.pop %v543
    %546 = vrot.lane.b32.xlu0 %v544, 8
    %v547 = vpop.permute.xlu0 %546
    %v549 = vmul.f32 %v528, %v547
    %551 = vset.pattern.permute.xlu0 12
    %552 = vperm.xlu0 %551, %v549
    %v553 = vpop.permute.xlu0 %552
    %v555 = vmul.f32 %v553, %v139
    %556 = vset.pattern.permute.xlu0 13
    %557 = vperm.xlu0 %556, %v549
    %v558 = vpop.permute.xlu0 %557
    %v560 = vmul.f32 %v558, %v144
    %561 = vset.pattern.permute.xlu0 14
    %562 = vperm.xlu0 %561, %v549
    %v563 = vpop.permute.xlu0 %562
    %v565 = vmul.f32 %v563, %v149
    %566 = vset.pattern.permute.xlu0 15
    %567 = vperm.xlu0 %566, %v549
    %v568 = vpop.permute.xlu0 %567
    %v570 = vmul.f32 %v568, %v154
    %v572 = vrot.slane %v555, 6
    %v574 = vadd.f32 %v132, %v572
    %v575 = vadd.f32 %v560, %v565
    %v577 = vrot.slane %v575, 6
    %v579 = vadd.f32 %v574, %v577
    %v581 = vrot.slane %v570, 6
    %v583 = vadd.f32 %v579, %v581
    %v584 = vxor.u32 %v583, 2147483648
    %v585 = vmul.f32 %v584, 1.442695
    %v586 = vpow.pop %v585
    %v587 = vadd.f32 %v586, 1.0
    %v588 = vrcp.pop %v587
    %v589 = vmul.f32 1.0, %v588
    %v590 = vtanh.pop %v583
    %v592 = vrot.slane %v543, 6
    %v594 = vmul.f32 %v589, %v592
    %596 = vrot.lane.b32.xlu0 %v590, 120
    %v597 = vpop.permute.xlu0 %596
    %v599 = vmul.f32 %v589, %v597
    %601 = vrot.lane.b32.xlu0 %v599, 4
    %v602 = vpop.permute.xlu0 %601
    %v604 = vadd.f32 %v594, %v602
    %v605 = vtanh.pop %v604
    %607 = vrot.lane.b32.xlu0 %v605, 8
    %v608 = vpop.permute.xlu0 %607
    %v610 = vmul.f32 %v589, %v608
    %v611 = vld [vmem:[%s5] sm:$0xf]
    %v612 = vld [vmem:[%s4] sm:$0xf]
    %v613 = vld [vmem:[%s6] sm:$0x1]
    %v615 = vlaneseq
    %v616 = vshrl.u32 %v615, 7
    %v617 = vsub.s32 0, %v616
    %v618 = vrot.slane %v613, %v617
    %v620 = vmax.f32 %v183, 0.0
    %622 = vset.pattern.permute.xlu0 12
    %623 = vperm.xlu0 %622, %v620
    %v624 = vpop.permute.xlu0 %623
    %v626 = vlaneseq
    %v627 = vshrl.u32 %v626, 7
    %v628 = vsub.s32 0, %v627
    %v629 = vrot.slane %v612, %v628
    %v630 = vmul.f32 %v624, %v629
    %631 = vset.pattern.permute.xlu0 13
    %632 = vperm.xlu0 %631, %v620
    %v633 = vpop.permute.xlu0 %632
    %v635 = vlaneseq
    %v636 = vshrl.u32 %v635, 7
    %v637 = vsub.s32 1, %v636
    %v638 = vrot.slane %v612, %v637
    %v639 = vmul.f32 %v633, %v638
    %640 = vset.pattern.permute.xlu0 14
    %641 = vperm.xlu0 %640, %v620
    %v642 = vpop.permute.xlu0 %641
    %v644 = vlaneseq
    %v645 = vshrl.u32 %v644, 7
    %v646 = vsub.s32 2, %v645
    %v647 = vrot.slane %v612, %v646
    %v648 = vmul.f32 %v642, %v647
    %649 = vset.pattern.permute.xlu0 15
    %650 = vperm.xlu0 %649, %v620
    %v651 = vpop.permute.xlu0 %650
    %v653 = vlaneseq
    %v654 = vshrl.u32 %v653, 7
    %v655 = vsub.s32 3, %v654
    %v656 = vrot.slane %v612, %v655
    %v657 = vmul.f32 %v651, %v656
    %v658 = vadd.f32 %v618, %v630
    %v659 = vadd.f32 %v639, %v648
    %v660 = vadd.f32 %v658, %v659
    %v661 = vadd.f32 %v660, %v657
    %663 = vset.pattern.permute.xlu0 12
    %664 = vperm.xlu0 %663, %v610
    %v665 = vpop.permute.xlu0 %664
    %v667 = vlaneseq
    %v668 = vshrl.u32 %v667, 7
    %v669 = vsub.s32 0, %v668
    %v670 = vrot.slane %v611, %v669
    %v671 = vmul.f32 %v665, %v670
    %672 = vset.pattern.permute.xlu0 13
    %673 = vperm.xlu0 %672, %v610
    %v674 = vpop.permute.xlu0 %673
    %v676 = vlaneseq
    %v677 = vshrl.u32 %v676, 7
    %v678 = vsub.s32 1, %v677
    %v679 = vrot.slane %v611, %v678
    %v680 = vmul.f32 %v674, %v679
    %681 = vset.pattern.permute.xlu0 14
    %682 = vperm.xlu0 %681, %v610
    %v683 = vpop.permute.xlu0 %682
    %v685 = vlaneseq
    %v686 = vshrl.u32 %v685, 7
    %v687 = vsub.s32 2, %v686
    %v688 = vrot.slane %v611, %v687
    %v689 = vmul.f32 %v683, %v688
    %690 = vset.pattern.permute.xlu0 15
    %691 = vperm.xlu0 %690, %v610
    %v692 = vpop.permute.xlu0 %691
    %v694 = vlaneseq
    %v695 = vshrl.u32 %v694, 7
    %v696 = vsub.s32 3, %v695
    %v697 = vrot.slane %v611, %v696
    %v698 = vmul.f32 %v692, %v697
    %v700 = vrot.slane %v671, 6
    %v702 = vadd.f32 %v661, %v700
    %v703 = vadd.f32 %v680, %v689
    %v705 = vrot.slane %v703, 6
    %v707 = vadd.f32 %v702, %v705
    %v709 = vrot.slane %v698, 6
    %v711 = vadd.f32 %v707, %v709
    %v712 = vxor.u32 %v711, 2147483648
    %v713 = vmul.f32 %v712, 1.442695
    %v714 = vpow.pop %v713
    %v715 = vadd.f32 %v714, 1.0
    %v716 = vrcp.pop %v715
    %v717 = vmul.f32 1.0, %v716
    %v718 = vtanh.pop %v711
    %v720 = vrot.slane %v604, 6
    %v722 = vmul.f32 %v717, %v720
    %724 = vrot.lane.b32.xlu0 %v718, 120
    %v725 = vpop.permute.xlu0 %724
    %v727 = vmul.f32 %v717, %v725
    %729 = vrot.lane.b32.xlu0 %v727, 4
    %v730 = vpop.permute.xlu0 %729
    %v732 = vadd.f32 %v722, %v730
    %v733 = vtanh.pop %v732
    %735 = vrot.lane.b32.xlu0 %v733, 8
    %v736 = vpop.permute.xlu0 %735
    %v738 = vmul.f32 %v717, %v736
    %v739 = vmax.f32 %v244, 0.0
    %741 = vset.pattern.permute.xlu0 12
    %742 = vperm.xlu0 %741, %v739
    %v743 = vpop.permute.xlu0 %742
    %v745 = vmul.f32 %v743, %v629
    %746 = vset.pattern.permute.xlu0 13
    %747 = vperm.xlu0 %746, %v739
    %v748 = vpop.permute.xlu0 %747
    %v750 = vmul.f32 %v748, %v638
    %751 = vset.pattern.permute.xlu0 14
    %752 = vperm.xlu0 %751, %v739
    %v753 = vpop.permute.xlu0 %752
    %v755 = vmul.f32 %v753, %v647
    %756 = vset.pattern.permute.xlu0 15
    %757 = vperm.xlu0 %756, %v739
    %v758 = vpop.permute.xlu0 %757
    %v760 = vmul.f32 %v758, %v656
    %v761 = vadd.f32 %v618, %v745
    %v762 = vadd.f32 %v750, %v755
    %v763 = vadd.f32 %v761, %v762
    %v764 = vadd.f32 %v763, %v760
    %766 = vset.pattern.permute.xlu0 12
    %767 = vperm.xlu0 %766, %v738
    %v768 = vpop.permute.xlu0 %767
    %v770 = vmul.f32 %v768, %v670
    %771 = vset.pattern.permute.xlu0 13
    %772 = vperm.xlu0 %771, %v738
    %v773 = vpop.permute.xlu0 %772
    %v775 = vmul.f32 %v773, %v679
    %776 = vset.pattern.permute.xlu0 14
    %777 = vperm.xlu0 %776, %v738
    %v778 = vpop.permute.xlu0 %777
    %v780 = vmul.f32 %v778, %v688
    %781 = vset.pattern.permute.xlu0 15
    %782 = vperm.xlu0 %781, %v738
    %v783 = vpop.permute.xlu0 %782
    %v785 = vmul.f32 %v783, %v697
    %v787 = vrot.slane %v770, 6
    %v789 = vadd.f32 %v764, %v787
    %v790 = vadd.f32 %v775, %v780
    %v792 = vrot.slane %v790, 6
    %v794 = vadd.f32 %v789, %v792
    %v796 = vrot.slane %v785, 6
    %v798 = vadd.f32 %v794, %v796
    %v799 = vxor.u32 %v798, 2147483648
    %v800 = vmul.f32 %v799, 1.442695
    %v801 = vpow.pop %v800
    %v802 = vadd.f32 %v801, 1.0
    %v803 = vrcp.pop %v802
    %v804 = vmul.f32 1.0, %v803
    %v805 = vtanh.pop %v798
    %v807 = vrot.slane %v732, 6
    %v809 = vmul.f32 %v804, %v807
    %811 = vrot.lane.b32.xlu0 %v805, 120
    %v812 = vpop.permute.xlu0 %811
    %v814 = vmul.f32 %v804, %v812
    %816 = vrot.lane.b32.xlu0 %v814, 4
    %v817 = vpop.permute.xlu0 %816
    %v819 = vadd.f32 %v809, %v817
    %v820 = vtanh.pop %v819
    %822 = vrot.lane.b32.xlu0 %v820, 8
    %v823 = vpop.permute.xlu0 %822
    %v825 = vmul.f32 %v804, %v823
    %v826 = vmax.f32 %v305, 0.0
    %828 = vset.pattern.permute.xlu0 12
    %829 = vperm.xlu0 %828, %v826
    %v830 = vpop.permute.xlu0 %829
    %v832 = vmul.f32 %v830, %v629
    %833 = vset.pattern.permute.xlu0 13
    %834 = vperm.xlu0 %833, %v826
    %v835 = vpop.permute.xlu0 %834
    %v837 = vmul.f32 %v835, %v638
    %838 = vset.pattern.permute.xlu0 14
    %839 = vperm.xlu0 %838, %v826
    %v840 = vpop.permute.xlu0 %839
    %v842 = vmul.f32 %v840, %v647
    %843 = vset.pattern.permute.xlu0 15
    %844 = vperm.xlu0 %843, %v826
    %v845 = vpop.permute.xlu0 %844
    %v847 = vmul.f32 %v845, %v656
    %v848 = vadd.f32 %v618, %v832
    %v849 = vadd.f32 %v837, %v842
    %v850 = vadd.f32 %v848, %v849
    %v851 = vadd.f32 %v850, %v847
    %853 = vset.pattern.permute.xlu0 12
    %854 = vperm.xlu0 %853, %v825
    %v855 = vpop.permute.xlu0 %854
    %v857 = vmul.f32 %v855, %v670
    %858 = vset.pattern.permute.xlu0 13
    %859 = vperm.xlu0 %858, %v825
    %v860 = vpop.permute.xlu0 %859
    %v862 = vmul.f32 %v860, %v679
    %863 = vset.pattern.permute.xlu0 14
    %864 = vperm.xlu0 %863, %v825
    %v865 = vpop.permute.xlu0 %864
    %v867 = vmul.f32 %v865, %v688
    %868 = vset.pattern.permute.xlu0 15
    %869 = vperm.xlu0 %868, %v825
    %v870 = vpop.permute.xlu0 %869
    %v872 = vmul.f32 %v870, %v697
    %v874 = vrot.slane %v857, 6
    %v876 = vadd.f32 %v851, %v874
    %v877 = vadd.f32 %v862, %v867
    %v879 = vrot.slane %v877, 6
    %v881 = vadd.f32 %v876, %v879
    %v883 = vrot.slane %v872, 6
    %v885 = vadd.f32 %v881, %v883
    %v886 = vxor.u32 %v885, 2147483648
    %v887 = vmul.f32 %v886, 1.442695
    %v888 = vpow.pop %v887
    %v889 = vadd.f32 %v888, 1.0
    %v890 = vrcp.pop %v889
    %v891 = vmul.f32 1.0, %v890
    %v892 = vtanh.pop %v885
    %v894 = vrot.slane %v819, 6
    %v896 = vmul.f32 %v891, %v894
    %898 = vrot.lane.b32.xlu0 %v892, 120
    %v899 = vpop.permute.xlu0 %898
    %v901 = vmul.f32 %v891, %v899
    %903 = vrot.lane.b32.xlu0 %v901, 4
    %v904 = vpop.permute.xlu0 %903
    %v906 = vadd.f32 %v896, %v904
    %v907 = vtanh.pop %v906
    %909 = vrot.lane.b32.xlu0 %v907, 8
    %v910 = vpop.permute.xlu0 %909
    %v912 = vmul.f32 %v891, %v910
    %v913 = vmax.f32 %v366, 0.0
    %915 = vset.pattern.permute.xlu0 12
    %916 = vperm.xlu0 %915, %v913
    %v917 = vpop.permute.xlu0 %916
    %v919 = vmul.f32 %v917, %v629
    %920 = vset.pattern.permute.xlu0 13
    %921 = vperm.xlu0 %920, %v913
    %v922 = vpop.permute.xlu0 %921
    %v924 = vmul.f32 %v922, %v638
    %925 = vset.pattern.permute.xlu0 14
    %926 = vperm.xlu0 %925, %v913
    %v927 = vpop.permute.xlu0 %926
    %v929 = vmul.f32 %v927, %v647
    %930 = vset.pattern.permute.xlu0 15
    %931 = vperm.xlu0 %930, %v913
    %v932 = vpop.permute.xlu0 %931
    %v934 = vmul.f32 %v932, %v656
    %v935 = vadd.f32 %v618, %v919
    %v936 = vadd.f32 %v924, %v929
    %v937 = vadd.f32 %v935, %v936
    %v938 = vadd.f32 %v937, %v934
    %940 = vset.pattern.permute.xlu0 12
    %941 = vperm.xlu0 %940, %v912
    %v942 = vpop.permute.xlu0 %941
    %v944 = vmul.f32 %v942, %v670
    %945 = vset.pattern.permute.xlu0 13
    %946 = vperm.xlu0 %945, %v912
    %v947 = vpop.permute.xlu0 %946
    %v949 = vmul.f32 %v947, %v679
    %950 = vset.pattern.permute.xlu0 14
    %951 = vperm.xlu0 %950, %v912
    %v952 = vpop.permute.xlu0 %951
    %v954 = vmul.f32 %v952, %v688
    %955 = vset.pattern.permute.xlu0 15
    %956 = vperm.xlu0 %955, %v912
    %v957 = vpop.permute.xlu0 %956
    %v959 = vmul.f32 %v957, %v697
    %v961 = vrot.slane %v944, 6
    %v963 = vadd.f32 %v938, %v961
    %v964 = vadd.f32 %v949, %v954
    %v966 = vrot.slane %v964, 6
    %v968 = vadd.f32 %v963, %v966
    %v970 = vrot.slane %v959, 6
    %v972 = vadd.f32 %v968, %v970
    %v973 = vxor.u32 %v972, 2147483648
    %v974 = vmul.f32 %v973, 1.442695
    %v975 = vpow.pop %v974
    %v976 = vadd.f32 %v975, 1.0
    %v977 = vrcp.pop %v976
    %v978 = vmul.f32 1.0, %v977
    %v979 = vtanh.pop %v972
    %v981 = vrot.slane %v906, 6
    %v983 = vmul.f32 %v978, %v981
    %985 = vrot.lane.b32.xlu0 %v979, 120
    %v986 = vpop.permute.xlu0 %985
    %v988 = vmul.f32 %v978, %v986
    %990 = vrot.lane.b32.xlu0 %v988, 4
    %v991 = vpop.permute.xlu0 %990
    %v993 = vadd.f32 %v983, %v991
    %v994 = vtanh.pop %v993
    %996 = vrot.lane.b32.xlu0 %v994, 8
    %v997 = vpop.permute.xlu0 %996
    %v999 = vmul.f32 %v978, %v997
    %v1000 = vmax.f32 %v427, 0.0
    %1002 = vset.pattern.permute.xlu0 12
    %1003 = vperm.xlu0 %1002, %v1000
    %v1004 = vpop.permute.xlu0 %1003
    %v1006 = vmul.f32 %v1004, %v629
    %1007 = vset.pattern.permute.xlu0 13
    %1008 = vperm.xlu0 %1007, %v1000
    %v1009 = vpop.permute.xlu0 %1008
    %v1011 = vmul.f32 %v1009, %v638
    %1012 = vset.pattern.permute.xlu0 14
    %1013 = vperm.xlu0 %1012, %v1000
    %v1014 = vpop.permute.xlu0 %1013
    %v1016 = vmul.f32 %v1014, %v647
    %1017 = vset.pattern.permute.xlu0 15
    %1018 = vperm.xlu0 %1017, %v1000
    %v1019 = vpop.permute.xlu0 %1018
    %v1021 = vmul.f32 %v1019, %v656
    %v1022 = vadd.f32 %v618, %v1006
    %v1023 = vadd.f32 %v1011, %v1016
    %v1024 = vadd.f32 %v1022, %v1023
    %v1025 = vadd.f32 %v1024, %v1021
    %1027 = vset.pattern.permute.xlu0 12
    %1028 = vperm.xlu0 %1027, %v999
    %v1029 = vpop.permute.xlu0 %1028
    %v1031 = vmul.f32 %v1029, %v670
    %1032 = vset.pattern.permute.xlu0 13
    %1033 = vperm.xlu0 %1032, %v999
    %v1034 = vpop.permute.xlu0 %1033
    %v1036 = vmul.f32 %v1034, %v679
    %1037 = vset.pattern.permute.xlu0 14
    %1038 = vperm.xlu0 %1037, %v999
    %v1039 = vpop.permute.xlu0 %1038
    %v1041 = vmul.f32 %v1039, %v688
    %1042 = vset.pattern.permute.xlu0 15
    %1043 = vperm.xlu0 %1042, %v999
    %v1044 = vpop.permute.xlu0 %1043
    %v1046 = vmul.f32 %v1044, %v697
    %v1048 = vrot.slane %v1031, 6
    %v1050 = vadd.f32 %v1025, %v1048
    %v1051 = vadd.f32 %v1036, %v1041
    %v1053 = vrot.slane %v1051, 6
    %v1055 = vadd.f32 %v1050, %v1053
    %v1057 = vrot.slane %v1046, 6
    %v1059 = vadd.f32 %v1055, %v1057
    %v1060 = vxor.u32 %v1059, 2147483648
    %v1061 = vmul.f32 %v1060, 1.442695
    %v1062 = vpow.pop %v1061
    %v1063 = vadd.f32 %v1062, 1.0
    %v1064 = vrcp.pop %v1063
    %v1065 = vmul.f32 1.0, %v1064
    %v1066 = vtanh.pop %v1059
    %v1068 = vrot.slane %v993, 6
    %v1070 = vmul.f32 %v1065, %v1068
    %1072 = vrot.lane.b32.xlu0 %v1066, 120
    %v1073 = vpop.permute.xlu0 %1072
    %v1075 = vmul.f32 %v1065, %v1073
    %1077 = vrot.lane.b32.xlu0 %v1075, 4
    %v1078 = vpop.permute.xlu0 %1077
    %v1080 = vadd.f32 %v1070, %v1078
    %v1081 = vtanh.pop %v1080
    %1083 = vrot.lane.b32.xlu0 %v1081, 8
    %v1084 = vpop.permute.xlu0 %1083
    %v1086 = vmul.f32 %v1065, %v1084
    %v1087 = vmax.f32 %v488, 0.0
    %1089 = vset.pattern.permute.xlu0 12
    %1090 = vperm.xlu0 %1089, %v1087
    %v1091 = vpop.permute.xlu0 %1090
    %v1093 = vmul.f32 %v1091, %v629
    %1094 = vset.pattern.permute.xlu0 13
    %1095 = vperm.xlu0 %1094, %v1087
    %v1096 = vpop.permute.xlu0 %1095
    %v1098 = vmul.f32 %v1096, %v638
    %1099 = vset.pattern.permute.xlu0 14
    %1100 = vperm.xlu0 %1099, %v1087
    %v1101 = vpop.permute.xlu0 %1100
    %v1103 = vmul.f32 %v1101, %v647
    %1104 = vset.pattern.permute.xlu0 15
    %1105 = vperm.xlu0 %1104, %v1087
    %v1106 = vpop.permute.xlu0 %1105
    %v1108 = vmul.f32 %v1106, %v656
    %v1109 = vadd.f32 %v618, %v1093
    %v1110 = vadd.f32 %v1098, %v1103
    %v1111 = vadd.f32 %v1109, %v1110
    %v1112 = vadd.f32 %v1111, %v1108
    %1114 = vset.pattern.permute.xlu0 12
    %1115 = vperm.xlu0 %1114, %v1086
    %v1116 = vpop.permute.xlu0 %1115
    %v1118 = vmul.f32 %v1116, %v670
    %1119 = vset.pattern.permute.xlu0 13
    %1120 = vperm.xlu0 %1119, %v1086
    %v1121 = vpop.permute.xlu0 %1120
    %v1123 = vmul.f32 %v1121, %v679
    %1124 = vset.pattern.permute.xlu0 14
    %1125 = vperm.xlu0 %1124, %v1086
    %v1126 = vpop.permute.xlu0 %1125
    %v1128 = vmul.f32 %v1126, %v688
    %1129 = vset.pattern.permute.xlu0 15
    %1130 = vperm.xlu0 %1129, %v1086
    %v1131 = vpop.permute.xlu0 %1130
    %v1133 = vmul.f32 %v1131, %v697
    %v1135 = vrot.slane %v1118, 6
    %v1137 = vadd.f32 %v1112, %v1135
    %v1138 = vadd.f32 %v1123, %v1128
    %v1140 = vrot.slane %v1138, 6
    %v1142 = vadd.f32 %v1137, %v1140
    %v1144 = vrot.slane %v1133, 6
    %v1146 = vadd.f32 %v1142, %v1144
    %v1147 = vxor.u32 %v1146, 2147483648
    %v1148 = vmul.f32 %v1147, 1.442695
    %v1149 = vpow.pop %v1148
    %v1150 = vadd.f32 %v1149, 1.0
    %v1151 = vrcp.pop %v1150
    %v1152 = vmul.f32 1.0, %v1151
    %v1153 = vtanh.pop %v1146
    %v1155 = vrot.slane %v1080, 6
    %v1157 = vmul.f32 %v1152, %v1155
    %1159 = vrot.lane.b32.xlu0 %v1153, 120
    %v1160 = vpop.permute.xlu0 %1159
    %v1162 = vmul.f32 %v1152, %v1160
    %1164 = vrot.lane.b32.xlu0 %v1162, 4
    %v1165 = vpop.permute.xlu0 %1164
    %v1167 = vadd.f32 %v1157, %v1165
    %v1168 = vtanh.pop %v1167
    %1170 = vrot.lane.b32.xlu0 %v1168, 8
    %v1171 = vpop.permute.xlu0 %1170
    %v1173 = vmul.f32 %v1152, %v1171
    %v1174 = vmax.f32 %v549, 0.0
    %1176 = vset.pattern.permute.xlu0 12
    %1177 = vperm.xlu0 %1176, %v1174
    %v1178 = vpop.permute.xlu0 %1177
    %v1180 = vmul.f32 %v1178, %v629
    %1181 = vset.pattern.permute.xlu0 13
    %1182 = vperm.xlu0 %1181, %v1174
    %v1183 = vpop.permute.xlu0 %1182
    %v1185 = vmul.f32 %v1183, %v638
    %1186 = vset.pattern.permute.xlu0 14
    %1187 = vperm.xlu0 %1186, %v1174
    %v1188 = vpop.permute.xlu0 %1187
    %v1190 = vmul.f32 %v1188, %v647
    %1191 = vset.pattern.permute.xlu0 15
    %1192 = vperm.xlu0 %1191, %v1174
    %v1193 = vpop.permute.xlu0 %1192
    %v1195 = vmul.f32 %v1193, %v656
    %v1196 = vadd.f32 %v618, %v1180
    %v1197 = vadd.f32 %v1185, %v1190
    %v1198 = vadd.f32 %v1196, %v1197
    %v1199 = vadd.f32 %v1198, %v1195
    %1201 = vset.pattern.permute.xlu0 12
    %1202 = vperm.xlu0 %1201, %v1173
    %v1203 = vpop.permute.xlu0 %1202
    %v1205 = vmul.f32 %v1203, %v670
    %1206 = vset.pattern.permute.xlu0 13
    %1207 = vperm.xlu0 %1206, %v1173
    %v1208 = vpop.permute.xlu0 %1207
    %v1210 = vmul.f32 %v1208, %v679
    %1211 = vset.pattern.permute.xlu0 14
    %1212 = vperm.xlu0 %1211, %v1173
    %v1213 = vpop.permute.xlu0 %1212
    %v1215 = vmul.f32 %v1213, %v688
    %1216 = vset.pattern.permute.xlu0 15
    %1217 = vperm.xlu0 %1216, %v1173
    %v1218 = vpop.permute.xlu0 %1217
    %v1220 = vmul.f32 %v1218, %v697
    %v1222 = vrot.slane %v1205, 6
    %v1224 = vadd.f32 %v1199, %v1222
    %v1225 = vadd.f32 %v1210, %v1215
    %v1227 = vrot.slane %v1225, 6
    %v1229 = vadd.f32 %v1224, %v1227
    %v1231 = vrot.slane %v1220, 6
    %v1233 = vadd.f32 %v1229, %v1231
    %v1234 = vxor.u32 %v1233, 2147483648
    %v1235 = vmul.f32 %v1234, 1.442695
    %v1236 = vpow.pop %v1235
    %v1237 = vadd.f32 %v1236, 1.0
    %v1238 = vrcp.pop %v1237
    %v1239 = vmul.f32 1.0, %v1238
    %v1240 = vtanh.pop %v1233
    %v1242 = vrot.slane %v1167, 6
    %v1244 = vmul.f32 %v1239, %v1242
    %1246 = vrot.lane.b32.xlu0 %v1240, 120
    %v1247 = vpop.permute.xlu0 %1246
    %v1249 = vmul.f32 %v1239, %v1247
    %1251 = vrot.lane.b32.xlu0 %v1249, 4
    %v1252 = vpop.permute.xlu0 %1251
    %v1254 = vadd.f32 %v1244, %v1252
    %v1255 = vtanh.pop %v1254
    %1257 = vrot.lane.b32.xlu0 %v1255, 8
    %v1258 = vpop.permute.xlu0 %1257
    %v1260 = vmul.f32 %v1239, %v1258
    %v1261 = vmax.f32 %v610, 0.0
    %1263 = vset.pattern.permute.xlu0 12
    %1264 = vperm.xlu0 %1263, %v1261
    %v1265 = vpop.permute.xlu0 %1264
    %v1267 = vmul.f32 %v1265, %v629
    %1268 = vset.pattern.permute.xlu0 13
    %1269 = vperm.xlu0 %1268, %v1261
    %v1270 = vpop.permute.xlu0 %1269
    %v1272 = vmul.f32 %v1270, %v638
    %1273 = vset.pattern.permute.xlu0 14
    %1274 = vperm.xlu0 %1273, %v1261
    %v1275 = vpop.permute.xlu0 %1274
    %v1277 = vmul.f32 %v1275, %v647
    %1278 = vset.pattern.permute.xlu0 15
    %1279 = vperm.xlu0 %1278, %v1261
    %v1280 = vpop.permute.xlu0 %1279
    %v1282 = vmul.f32 %v1280, %v656
    %v1283 = vadd.f32 %v618, %v1267
    %v1284 = vadd.f32 %v1272, %v1277
    %v1285 = vadd.f32 %v1283, %v1284
    %v1286 = vadd.f32 %v1285, %v1282
    %1288 = vset.pattern.permute.xlu0 12
    %1289 = vperm.xlu0 %1288, %v1260
    %v1290 = vpop.permute.xlu0 %1289
    %v1292 = vmul.f32 %v1290, %v670
    %1293 = vset.pattern.permute.xlu0 13
    %1294 = vperm.xlu0 %1293, %v1260
    %v1295 = vpop.permute.xlu0 %1294
    %v1297 = vmul.f32 %v1295, %v679
    %1298 = vset.pattern.permute.xlu0 14
    %1299 = vperm.xlu0 %1298, %v1260
    %v1300 = vpop.permute.xlu0 %1299
    %v1302 = vmul.f32 %v1300, %v688
    %1303 = vset.pattern.permute.xlu0 15
    %1304 = vperm.xlu0 %1303, %v1260
    %v1305 = vpop.permute.xlu0 %1304
    %v1307 = vmul.f32 %v1305, %v697
    %v1309 = vrot.slane %v1292, 6
    %v1311 = vadd.f32 %v1286, %v1309
    %v1312 = vadd.f32 %v1297, %v1302
    %v1314 = vrot.slane %v1312, 6
    %v1316 = vadd.f32 %v1311, %v1314
    %v1318 = vrot.slane %v1307, 6
    %v1320 = vadd.f32 %v1316, %v1318
    %v1321 = vxor.u32 %v1320, 2147483648
    %v1322 = vmul.f32 %v1321, 1.442695
    %v1323 = vpow.pop %v1322
    %v1324 = vadd.f32 %v1323, 1.0
    %v1325 = vrcp.pop %v1324
    %v1326 = vmul.f32 1.0, %v1325
    %v1327 = vtanh.pop %v1320
    %v1329 = vrot.slane %v1254, 6
    %v1331 = vmul.f32 %v1326, %v1329
    %1333 = vrot.lane.b32.xlu0 %v1327, 120
    %v1334 = vpop.permute.xlu0 %1333
    %v1336 = vmul.f32 %v1326, %v1334
    %1338 = vrot.lane.b32.xlu0 %v1336, 4
    %v1339 = vpop.permute.xlu0 %1338
    %v1341 = vadd.f32 %v1331, %v1339
    %v1342 = vtanh.pop %v1341
    %1344 = vrot.lane.b32.xlu0 %v1342, 8
    %v1345 = vpop.permute.xlu0 %1344
    %v1347 = vmul.f32 %v1326, %v1345
    %v1348 = vmax.f32 %v1347, 0.0
    %v1349 = vld [vmem:[%s7] sm:$0xf]
    %v1350 = vld [vmem:[%s8] sm:$0x1]
    %v1352 = vlaneseq
    %v1353 = vshrl.u32 %v1352, 7
    %v1354 = vsub.s32 0, %v1353
    %v1355 = vrot.slane %v1350, %v1354
    %v1358 = vrot.slane %v1348, 6
    %1359 = vrot.lane.b32.xlu0 %v1358, 116
    %v1360 = vpop.permute.xlu0 %1359
    %v1361 = vsel %vm49, %v1360, 0
    %v1364 = vsel %vm56, %v1349, 0
    %1366 = vmatprep.subr.mxu0 0.0
    %1367 = vmatpush1.msra.mxu0 %v1364
    %1368 = vmatprep.subr.mxu0 0.0
    %1369 = vmatpush1.msra.mxu0 0.0
    %1370 = vmatprep.subr.mxu0 0.0
    %1371 = vmatpush1.msra.mxu0 0.0
    %1372 = vmatprep.subr.mxu0 0.0
    %1373 = vmatpush1.msra.mxu0 0.0
    %1374 = vmatprep.subr.mxu0 0.0
    %1375 = vmatpush1.msra.mxu0 0.0
    %1376 = vmatprep.subr.mxu0 0.0
    %1377 = vmatpush1.msra.mxu0 0.0
    %1378 = vmatprep.subr.mxu0 0.0
    %1379 = vmatpush1.msra.mxu0 0.0
    %1380 = vmatprep.subr.mxu0 0.0
    %1381 = vmatpush1.msra.mxu0 0.0
    %1382 = vmatprep.subr.mxu0 0.0
    %1383 = vmatpush1.msra.mxu0 0.0
    %1384 = vmatprep.subr.mxu0 0.0
    %1385 = vmatpush1.msra.mxu0 0.0
    %1386 = vmatprep.subr.mxu0 0.0
    %1387 = vmatpush1.msra.mxu0 0.0
    %1388 = vmatprep.subr.mxu0 0.0
    %1389 = vmatpush1.msra.mxu0 0.0
    %1390 = vmatprep.subr.mxu0 0.0
    %1391 = vmatpush1.msra.mxu0 0.0
    %1392 = vmatprep.subr.mxu0 0.0
    %1393 = vmatpush1.msra.mxu0 0.0
    %1394 = vmatprep.subr.mxu0 0.0
    %1395 = vmatpush1.msra.mxu0 0.0
    %1396 = vmatprep.subr.mxu0 0.0
    %1397 = vmatpush1.msra.mxu0 0.0
    %1398 = vmatprep.subr.mxu0 0.0
    %1399 = vmatpush1.msra.mxu0 0.0
    %1400 = vmatprep.subr.mxu0 0.0
    %1401 = vmatpush1.msra.mxu0 0.0
    %1402 = vmatprep.subr.mxu0 0.0
    %1403 = vmatpush1.msra.mxu0 0.0
    %1404 = vmatprep.subr.mxu0 0.0
    %1405 = vmatpush1.msra.mxu0 0.0
    %1406 = vmatprep.subr.mxu0 0.0
    %1407 = vmatpush1.msra.mxu0 0.0
    %1408 = vmatprep.subr.mxu0 0.0
    %1409 = vmatpush1.msra.mxu0 0.0
    %1410 = vmatprep.subr.mxu0 0.0
    %1411 = vmatpush1.msra.mxu0 0.0
    %1412 = vmatprep.subr.mxu0 0.0
    %1413 = vmatpush1.msra.mxu0 0.0
    %1414 = vmatprep.subr.mxu0 0.0
    %1415 = vmatpush1.msra.mxu0 0.0
    %1416 = vmatprep.subr.mxu0 0.0
    %1417 = vmatpush1.msra.mxu0 0.0
    %1418 = vmatprep.subr.mxu0 0.0
    %1419 = vmatpush1.msra.mxu0 0.0
    %1420 = vmatprep.subr.mxu0 0.0
    %1421 = vmatpush1.msra.mxu0 0.0
    %1422 = vmatprep.subr.mxu0 0.0
    %1423 = vmatpush1.msra.mxu0 0.0
    %1424 = vmatprep.subr.mxu0 0.0
    %1425 = vmatpush1.msra.mxu0 0.0
    %1426 = vmatprep.subr.mxu0 0.0
    %1427 = vmatpush1.msra.mxu0 0.0
    %1428 = vmatprep.subr.mxu0 0.0
    %1429 = vmatpush1.msra.mxu0 0.0
    %1430 = vmatprep.mubr.f32.mxu0 0.0
    %1431 = vmatmul.mubr.f32.gmra.mrb[0].mxu0 %v1361
    %v1432 = vpop.f32.mrb[0].mxu0
    %v1433 = vadd.f32 %v1355, %v1432
    %v1434 = vpop.f32.mrb[0].mxu0
    %1435 = vdwg.mxu0
    %v1436 = vmax.f32 %v1433, 0.0
    %v1437 = vld [vmem:[%s9] sm:$0xff]
    %v1438 = vld [vmem:[%s9 + $0x8] sm:$0xff]
    %v1439 = vld [vmem:[%s9 + $0x10] sm:$0xff]
    %v1440 = vld [vmem:[%s9 + $0x18] sm:$0xff]
    %v1441 = vld [vmem:[%s9 + $0x20] sm:$0xff]
    %v1442 = vld [vmem:[%s9 + $0x28] sm:$0xff]
    %v1443 = vld [vmem:[%s9 + $0x30] sm:$0xff]
    %v1444 = vld [vmem:[%s9 + $0x38] sm:$0xff]
    %v1445 = vld [vmem:[%s10] sm:$0x1]
    %v1447 = vlaneseq
    %v1448 = vshrl.u32 %v1447, 7
    %v1449 = vsub.s32 0, %v1448
    %v1450 = vrot.slane %v1445, %v1449
    %vm1452 = vcmask 523264
    %v1454 = vsel %vm1452, %v1436, 0
    %1456 = vmatprep.subr.mxu0 0.0
    %1457 = vmatpush1.msra.mxu0 %v1437
    %1458 = vmatprep.subr.mxu0 0.0
    %1459 = vmatpush1.msra.mxu0 %v1438
    %1460 = vmatprep.subr.mxu0 0.0
    %1461 = vmatpush1.msra.mxu0 %v1439
    %1462 = vmatprep.subr.mxu0 0.0
    %1463 = vmatpush1.msra.mxu0 %v1440
    %1464 = vmatprep.subr.mxu0 0.0
    %1465 = vmatpush1.msra.mxu0 %v1441
    %1466 = vmatprep.subr.mxu0 0.0
    %1467 = vmatpush1.msra.mxu0 %v1442
    %1468 = vmatprep.subr.mxu0 0.0
    %1469 = vmatpush1.msra.mxu0 %v1443
    %1470 = vmatprep.subr.mxu0 0.0
    %1471 = vmatpush1.msra.mxu0 %v1444
    %1472 = vmatprep.subr.mxu0 0.0
    %1473 = vmatpush1.msra.mxu0 0.0
    %1474 = vmatprep.subr.mxu0 0.0
    %1475 = vmatpush1.msra.mxu0 0.0
    %1476 = vmatprep.subr.mxu0 0.0
    %1477 = vmatpush1.msra.mxu0 0.0
    %1478 = vmatprep.subr.mxu0 0.0
    %1479 = vmatpush1.msra.mxu0 0.0
    %1480 = vmatprep.subr.mxu0 0.0
    %1481 = vmatpush1.msra.mxu0 0.0
    %1482 = vmatprep.subr.mxu0 0.0
    %1483 = vmatpush1.msra.mxu0 0.0
    %1484 = vmatprep.subr.mxu0 0.0
    %1485 = vmatpush1.msra.mxu0 0.0
    %1486 = vmatprep.subr.mxu0 0.0
    %1487 = vmatpush1.msra.mxu0 0.0
    %1488 = vmatprep.subr.mxu0 0.0
    %1489 = vmatpush1.msra.mxu0 0.0
    %1490 = vmatprep.subr.mxu0 0.0
    %1491 = vmatpush1.msra.mxu0 0.0
    %1492 = vmatprep.subr.mxu0 0.0
    %1493 = vmatpush1.msra.mxu0 0.0
    %1494 = vmatprep.subr.mxu0 0.0
    %1495 = vmatpush1.msra.mxu0 0.0
    %1496 = vmatprep.subr.mxu0 0.0
    %1497 = vmatpush1.msra.mxu0 0.0
    %1498 = vmatprep.subr.mxu0 0.0
    %1499 = vmatpush1.msra.mxu0 0.0
    %1500 = vmatprep.subr.mxu0 0.0
    %1501 = vmatpush1.msra.mxu0 0.0
    %1502 = vmatprep.subr.mxu0 0.0
    %1503 = vmatpush1.msra.mxu0 0.0
    %1504 = vmatprep.subr.mxu0 0.0
    %1505 = vmatpush1.msra.mxu0 0.0
    %1506 = vmatprep.subr.mxu0 0.0
    %1507 = vmatpush1.msra.mxu0 0.0
    %1508 = vmatprep.subr.mxu0 0.0
    %1509 = vmatpush1.msra.mxu0 0.0
    %1510 = vmatprep.subr.mxu0 0.0
    %1511 = vmatpush1.msra.mxu0 0.0
    %1512 = vmatprep.subr.mxu0 0.0
    %1513 = vmatpush1.msra.mxu0 0.0
    %1514 = vmatprep.subr.mxu0 0.0
    %1515 = vmatpush1.msra.mxu0 0.0
    %1516 = vmatprep.subr.mxu0 0.0
    %1517 = vmatpush1.msra.mxu0 0.0
    %1518 = vmatprep.subr.mxu0 0.0
    %1519 = vmatpush1.msra.mxu0 0.0
    %1520 = vmatprep.mubr.f32.mxu0 0.0
    %1521 = vmatmul.mubr.f32.gmra.mrb[0].mxu0 %v1454
    %v1522 = vpop.f32.mrb[0].mxu0
    %v1523 = vadd.f32 %v1450, %v1522
    %v1524 = vpop.f32.mrb[0].mxu0
    %1525 = vdwg.mxu0
    %vm1526 = vcmask 25600
    %1527 = vst.msk [vmem:[#allocation2] sm:$0x3] %vm1526, %v1523
    // Predicated region
    $region46: #{tpu_custom_call.1} parent=1 // pred_check
      _
    $region47: #{tpu_custom_call.1} parent=1 // pred_check_branch
      %1529 = sbr.rel (0) target = $region49
    $region48: #{tpu_custom_call.1} parent=1 // pred_region
      %s1531 = ssub.s32 32, 32
      %1532 = vsyncadd [#allocation3], %s1531
      %s1534 = sshll.u32 [#allocation2], 4
      %s1535 = int_to_ptr.vmem [resolvable:$true] %s1534
      %1537 = dma.vmem_to_hbm [thread:$0]  %s1535, 32, %s11, [#allocation3]
    $region49: #{tpu_custom_call.1} parent=1 // pred_fallthru
      _
    // Predicated region
    $region50: #{tpu_custom_call.1} parent=1 // pred_check
      _
    $region51: #{tpu_custom_call.1} parent=1 // pred_check_branch
      %1539 = sbr.rel (0) target = $region53
    $region52: #{tpu_custom_call.1} parent=1 // pred_region
      %1540 = dma.done [#allocation3], 32
    $region53: #{tpu_custom_call.1} parent=1 // pred_fallthru
      _
    %1541 = vsyncpa [#allocation3], 1

</llo_original>
